<compile_context>
chip_gen: v7x
topology: tpu7x:2x2x1
jax: 0.10.0
libtpu: 0.0.40
codegen_flags: <defaults>
</compile_context>

<pallas_src>
import jax
import jax.numpy as jnp
from jax import lax
from jax.experimental import pallas as pl
from jax.experimental.pallas import tpu as pltpu


# ----------------------------------------------------------------------------
# Fused kernel: batched market-status + GRU recurrence + final Linear.
# Single invocation (grid=(1,)); all operands live in VMEM for the whole call.
# ----------------------------------------------------------------------------
def _fused_kernel(scols_ref, kt_ref, v_ref, seg_ref,
                  wih_ref, whh_ref, bih_ref, bhh_ref,
                  wlin_ref, blin_ref, o_ref):
    B = scols_ref.shape[0]

    # ---- market status, batched over B --------------------------------------
    # W_all[b, r] = (K @ S[:, idx[b]])[r]   computed as one (B,P)@(P,T) matmul.
    w_all = jnp.dot(scols_ref[...], kt_ref[...],
                    preferred_element_type=jnp.float32)          # (B, T)
    seg = seg_ref[...]                                           # (T, T) one-hot
    in_seg = jnp.sum(seg, axis=0, keepdims=True)                 # (1, T) 0/1 mask

    neg = jnp.float32(-1e30)
    # per-(b, segment) max, then scatter back to per-row max via matmul
    masked = jnp.where(seg[None, :, :] > 0, w_all[:, None, :], neg)   # (B, T, T)
    seg_max = jnp.max(masked, axis=2)                            # (B, T)
    row_max = jnp.dot(seg_max, seg,
                      preferred_element_type=jnp.float32)        # (B, T)
    e = jnp.exp(w_all - row_max) * in_seg                        # (B, T)
    # per-segment denominator: den_seg[b, s] = sum_r e[b, r] * seg[s, r]
    den_seg = lax.dot_general(e, seg, (((1,), (1,)), ((), ())),
                              preferred_element_type=jnp.float32)    # (B, T)
    den_row = jnp.dot(den_seg, seg,
                      preferred_element_type=jnp.float32)        # (B, T)
    den_row = jnp.where(den_row == 0.0, jnp.float32(1.0), den_row)
    alpha = e * pl.reciprocal(den_row, approx=True)              # (B, T)

    # ---- GRU + Linear over the sequence axis (length B) ---------------------
    v = v_ref[...]                                               # (T, Q)
    wir, wiz, win = wih_ref[0], wih_ref[1], wih_ref[2]           # (Q, H) each
    whr, whz, whn = whh_ref[0], whh_ref[1], whh_ref[2]           # (H, H) each
    bir, biz, bin_ = bih_ref[0], bih_ref[1], bih_ref[2]          # (1, H) each
    bhr, bhz, bhn = bhh_ref[0], bhh_ref[1], bhh_ref[2]           # (1, H) each
    wlin = wlin_ref[...]                                         # (1, H)
    blin = blin_ref[...]                                         # (1, 1)

    def sigmoid(x):  # one EUP op instead of exp + reciprocal
        return 0.5 * (jnp.tanh(0.5 * x) + 1.0)

    T = v.shape[0]
    H = whr.shape[1]
    h = jnp.zeros((T, H), jnp.float32)
    preds = []
    for s in range(B):  # tiny, fully unrolled; no HBM traffic inside the loop
        # market status for step s: X_s[t, :] = sum_r seg[t, r]*alpha[s, r]*V[r, :]
        a_s = alpha[s:s + 1, :]                                  # (1, T) static slice
        x_s = jnp.dot(seg * a_s, v,
                      preferred_element_type=jnp.float32)        # (T, Q)

        # PyTorch nn.GRU cell (gate order r, z, n; r-gated hidden bias on n)
        r = sigmoid(jnp.dot(x_s, wir, preferred_element_type=jnp.float32) + bir
                    + jnp.dot(h, whr, preferred_element_type=jnp.float32) + bhr)
        z = sigmoid(jnp.dot(x_s, wiz, preferred_element_type=jnp.float32) + biz
                    + jnp.dot(h, whz, preferred_element_type=jnp.float32) + bhz)
        n = jnp.tanh(jnp.dot(x_s, win, preferred_element_type=jnp.float32) + bin_
                     + r * (jnp.dot(h, whn, preferred_element_type=jnp.float32) + bhn))
        h = (1.0 - z) * n + z * h                                # (T, H)

        # Linear(H, 1): VPU multiply + lane reduction (no N=1 MXU pass)
        pred = jnp.sum(h * wlin, axis=1)[None, :] + blin         # (1, T)
        preds.append(pred)

    # single lane-dense store of all predictions
    o_ref[...] = jnp.concatenate(preds, axis=0).astype(o_ref.dtype)   # (B, T)


def gru_model_forward(s_cols, KT, V, Seg, Wih_g, Whh_g, bih_g, bhh_g, Wlin, blin2):
    B, P = s_cols.shape
    T, Q = V.shape
    H = Whh_g.shape[2]
    out = pl.pallas_call(
        _fused_kernel,
        out_shape=jax.ShapeDtypeStruct((B, T), jnp.float32),
        grid_spec=pltpu.PrefetchScalarGridSpec(
            num_scalar_prefetch=0,
            grid=(1,),
            in_specs=[
                pl.BlockSpec((B, P), lambda i: (0, 0)),
                pl.BlockSpec((P, T), lambda i: (0, 0)),
                pl.BlockSpec((T, Q), lambda i: (0, 0)),
                pl.BlockSpec((T, T), lambda i: (0, 0)),
                pl.BlockSpec((3, Q, H), lambda i: (0, 0, 0)),
                pl.BlockSpec((3, H, H), lambda i: (0, 0, 0)),
                pl.BlockSpec((3, 1, H), lambda i: (0, 0, 0)),
                pl.BlockSpec((3, 1, H), lambda i: (0, 0, 0)),
                pl.BlockSpec((1, H), lambda i: (0, 0)),
                pl.BlockSpec((1, 1), lambda i: (0, 0)),
            ],
            out_specs=pl.BlockSpec((B, T), lambda i: (0, 0)),
        ),
        compiler_params=pltpu.CompilerParams(
            dimension_semantics=("arbitrary",)),
    )(s_cols, KT, V, Seg, Wih_g, Whh_g, bih_g, bhh_g, Wlin, blin2)
    return out.reshape(B, T, 1)


# ----------------------------------------------------------------------------
# Pure-JAX reference mirroring the PyTorch forward (nn.GRU semantics).
# ----------------------------------------------------------------------------
def ref_forward(idx, K, V, S, dates, Wih, Whh, bih, bhh, Wlin, blin):
    T, _ = K.shape
    Q = V.shape[1]
    H = Whh.shape[1]
    Xs = []
    for j in idx:
        W = K @ S[:, j]
        M = jnp.zeros((T, Q), jnp.float32)
        for t in range(1, len(dates)):
            sl = slice(dates[t - 1], dates[t])
            alpha = jax.nn.softmax(W[sl])
            M = M.at[t - 1].set(alpha @ V[sl])
        Xs.append(M)
    X = jnp.stack(Xs)                                            # (B, T, Q)

    h = jnp.zeros((T, H), jnp.float32)
    outs = []
    for s in range(len(idx)):
        gi = X[s] @ Wih.T + bih                                  # (T, 3H)
        gh = h @ Whh.T + bhh                                     # (T, 3H)
        r = jax.nn.sigmoid(gi[:, 0 * H:1 * H] + gh[:, 0 * H:1 * H])
        z = jax.nn.sigmoid(gi[:, 1 * H:2 * H] + gh[:, 1 * H:2 * H])
        n = jnp.tanh(gi[:, 2 * H:3 * H] + r * gh[:, 2 * H:3 * H])
        h = (1.0 - z) * n + z * h
        outs.append(h)
    gru_out = jnp.stack(outs)                                    # (B, T, H)
    return gru_out @ Wlin.T + blin                               # (B, T, 1)


if __name__ == "__main__":
    # Small deterministic shapes consistent with the module.
    T, P, Q, J, H = 16, 16, 16, 10, 32
    idx = [0, 3, 5, 7]
    B = len(idx)
    dates = [0, 2, 4, 6, 8, 10, 12, 14, 16]          # synthesized self.dates

    key = jax.random.PRNGKey(0)
    kK, kV, kY, kS, kWih, kWhh, kbih, kbhh, kWl, kbl = jax.random.split(key, 10)

    K = jax.random.normal(kK, (T, P), jnp.float32)
    V = jax.random.normal(kV, (T, Q), jnp.float32)
    Y = jax.random.normal(kY, (T, J), jnp.float32)   # stored but unused in forward
    S = 0.1 * jax.random.normal(kS, (P, J), jnp.float32)

    kinit = 1.0 / jnp.sqrt(jnp.float32(H))
    Wih = jax.random.uniform(kWih, (3 * H, Q), jnp.float32, -kinit, kinit)
    Whh = jax.random.uniform(kWhh, (3 * H, H), jnp.float32, -kinit, kinit)
    bih = jax.random.uniform(kbih, (3 * H,), jnp.float32, -kinit, kinit)
    bhh = jax.random.uniform(kbhh, (3 * H,), jnp.float32, -kinit, kinit)
    Wlin = jax.random.uniform(kWl, (1, H), jnp.float32, -kinit, kinit)
    blin = jax.random.uniform(kbl, (1,), jnp.float32, -kinit, kinit)

    # One-hot segment matrix Seg[s, r] = 1 iff dates[s] <= r < dates[s+1].
    Seg = jnp.zeros((T, T), jnp.float32)
    for s in range(len(dates) - 1):
        Seg = Seg.at[s, dates[s]:dates[s + 1]].set(1.0)

    # Wrapper-side layout plumbing: gather S columns, pre-transpose / pre-split
    # per-gate weight blocks so the kernel never lane-slices.
    idx_arr = jnp.array(idx, jnp.int32)
    s_cols = S[:, idx_arr].T                                     # (B, P)
    KT = K.T                                                     # (P, T)
    Wih_g = Wih.reshape(3, H, Q).transpose(0, 2, 1)              # (3, Q, H) = W_g^T
    Whh_g = Whh.reshape(3, H, H).transpose(0, 2, 1)              # (3, H, H) = W_g^T
    bih_g = bih.reshape(3, 1, H)                                 # (3, 1, H)
    bhh_g = bhh.reshape(3, 1, H)                                 # (3, 1, H)
    blin2 = blin.reshape(1, 1)                                   # (1, 1)

    predictions = gru_model_forward(s_cols, KT, V, Seg,
                                    Wih_g, Whh_g, bih_g, bhh_g, Wlin, blin2)
    predictions = jax.block_until_ready(predictions)             # (B, T, 1)

    # Correctness check (tolerance accounts for pl.reciprocal(approx=True)).
    ref = ref_forward(idx, K, V, S, dates, Wih, Whh, bih, bhh, Wlin, blin)
    assert predictions.shape == (B, T, 1)
    max_err = float(jnp.max(jnp.abs(predictions - ref)))
    assert jnp.allclose(predictions, ref, atol=2e-3, rtol=2e-3), max_err

    print("KERNEL_OK")
</pallas_src>

<mosaic_0001>
module attributes {stable_mosaic.version = 11 : i64} {
  func.func @_fused_kernel(%arg0: i32, %arg1: memref<4x16xf32, #tpu.memory_space<vmem>>, %arg2: memref<16x16xf32, #tpu.memory_space<vmem>>, %arg3: memref<16x16xf32, #tpu.memory_space<vmem>>, %arg4: memref<16x16xf32, #tpu.memory_space<vmem>>, %arg5: memref<3x16x32xf32, #tpu.memory_space<vmem>>, %arg6: memref<3x32x32xf32, #tpu.memory_space<vmem>>, %arg7: memref<3x1x32xf32, #tpu.memory_space<vmem>>, %arg8: memref<3x1x32xf32, #tpu.memory_space<vmem>>, %arg9: memref<1x32xf32, #tpu.memory_space<vmem>>, %arg10: memref<1x1xf32, #tpu.memory_space<vmem>>, %arg11: memref<4x16xf32, #tpu.memory_space<vmem>>) attributes {dimension_semantics = [#tpu.dimension_semantics<arbitrary>], iteration_bounds = array<i64: 1>, scalar_prefetch = 0 : i64, scratch_operands = 0 : i64, tpu.core_type = #tpu.core_type<tc>, window_params = [{pipeline_mode = #tpu.pipeline_mode<synchronous>, transform_indices = @transform_0, window_bounds = array<i64: 4, 16>}, {pipeline_mode = #tpu.pipeline_mode<synchronous>, transform_indices = @transform_1, window_bounds = array<i64: 16, 16>}, {pipeline_mode = #tpu.pipeline_mode<synchronous>, transform_indices = @transform_2, window_bounds = array<i64: 16, 16>}, {pipeline_mode = #tpu.pipeline_mode<synchronous>, transform_indices = @transform_3, window_bounds = array<i64: 16, 16>}, {pipeline_mode = #tpu.pipeline_mode<synchronous>, transform_indices = @transform_4, window_bounds = array<i64: 3, 16, 32>}, {pipeline_mode = #tpu.pipeline_mode<synchronous>, transform_indices = @transform_5, window_bounds = array<i64: 3, 32, 32>}, {pipeline_mode = #tpu.pipeline_mode<synchronous>, transform_indices = @transform_6, window_bounds = array<i64: 3, 1, 32>}, {pipeline_mode = #tpu.pipeline_mode<synchronous>, transform_indices = @transform_7, window_bounds = array<i64: 3, 1, 32>}, {pipeline_mode = #tpu.pipeline_mode<synchronous>, transform_indices = @transform_8, window_bounds = array<i64: 1, 32>}, {pipeline_mode = #tpu.pipeline_mode<synchronous>, transform_indices = @transform_9, window_bounds = array<i64: 1, 1>}, {pipeline_mode = #tpu.pipeline_mode<synchronous>, transform_indices = @transform_10, window_bounds = array<i64: 4, 16>}]} {
    %c0 = arith.constant 0 : index
    %c0_0 = arith.constant 0 : index
    %0 = vector.load %arg1[%c0, %c0_0] : memref<4x16xf32, #tpu.memory_space<vmem>>, vector<4x16xf32>
    %c0_1 = arith.constant 0 : index
    %c0_2 = arith.constant 0 : index
    %1 = vector.load %arg2[%c0_1, %c0_2] : memref<16x16xf32, #tpu.memory_space<vmem>>, vector<16x16xf32>
    %cst = arith.constant dense<0.000000e+00> : vector<4x16xf32>
    %2 = tpu.matmul %0, %1, %cst {dimension_numbers = #tpu.dot_dimension_numbers<[1], [0], [0], [1], [0, 0, 1, 1], [], []>} : vector<4x16xf32>, vector<16x16xf32>, vector<4x16xf32> -> vector<4x16xf32>
    %c0_3 = arith.constant 0 : index
    %c0_4 = arith.constant 0 : index
    %3 = vector.load %arg4[%c0_3, %c0_4] : memref<16x16xf32, #tpu.memory_space<vmem>>, vector<16x16xf32>
    %cst_5 = arith.constant dense<0.000000e+00> : vector<16xf32>
    %4 = vector.multi_reduction <add>, %3, %cst_5 [0] : vector<16x16xf32> to vector<16xf32>
    %5 = vector.shape_cast %4 : vector<16xf32> to vector<1x16xf32>
    %6 = vector.shape_cast %3 : vector<16x16xf32> to vector<1x16x16xf32>
    %cst_6 = arith.constant 0.000000e+00 : f32
    %7 = vector.broadcast %cst_6 : f32 to vector<1x16x16xf32>
    %8 = arith.cmpf ogt, %6, %7 : vector<1x16x16xf32>
    %9 = vector.shape_cast %2 : vector<4x16xf32> to vector<4x1x16xf32>
    %cst_7 = arith.constant -1.000000e+30 : f32
    %10 = vector.shape_cast %8 : vector<1x16x16xi1> to vector<1x16x16xi1>
    %11 = vector.broadcast %10 : vector<1x16x16xi1> to vector<4x16x16xi1>
    %12 = vector.shape_cast %9 : vector<4x1x16xf32> to vector<4x1x16xf32>
    %13 = vector.broadcast %12 : vector<4x1x16xf32> to vector<4x16x16xf32>
    %14 = vector.broadcast %cst_7 : f32 to vector<4x16x16xf32>
    %15 = arith.select %11, %13, %14 : vector<4x16x16xi1>, vector<4x16x16xf32>
    %cst_8 = arith.constant dense<0xFF800000> : vector<4x16xf32>
    %16 = vector.multi_reduction <maximumf>, %15, %cst_8 [2] : vector<4x16x16xf32> to vector<4x16xf32>
    %cst_9 = arith.constant dense<0.000000e+00> : vector<4x16xf32>
    %17 = tpu.matmul %16, %3, %cst_9 {dimension_numbers = #tpu.dot_dimension_numbers<[1], [0], [0], [1], [0, 0, 1, 1], [], []>} : vector<4x16xf32>, vector<16x16xf32>, vector<4x16xf32> -> vector<4x16xf32>
    %18 = arith.subf %2, %17 : vector<4x16xf32>
    %19 = math.exp %18 : vector<4x16xf32>
    %20 = vector.broadcast %5 : vector<1x16xf32> to vector<4x16xf32>
    %21 = arith.mulf %19, %20 : vector<4x16xf32>
    %cst_10 = arith.constant dense<0.000000e+00> : vector<4x16xf32>
    %22 = tpu.matmul %21, %3, %cst_10 {dimension_numbers = #tpu.dot_dimension_numbers<[1], [1], [0], [0], [0, 0, 1, 0], [], []>} : vector<4x16xf32>, vector<16x16xf32>, vector<4x16xf32> -> vector<4x16xf32>
    %cst_11 = arith.constant dense<0.000000e+00> : vector<4x16xf32>
    %23 = tpu.matmul %22, %3, %cst_11 {dimension_numbers = #tpu.dot_dimension_numbers<[1], [0], [0], [1], [0, 0, 1, 1], [], []>} : vector<4x16xf32>, vector<16x16xf32>, vector<4x16xf32> -> vector<4x16xf32>
    %cst_12 = arith.constant 0.000000e+00 : f32
    %24 = vector.broadcast %cst_12 : f32 to vector<4x16xf32>
    %25 = arith.cmpf oeq, %23, %24 : vector<4x16xf32>
    %cst_13 = arith.constant 1.000000e+00 : f32
    %26 = vector.broadcast %cst_13 : f32 to vector<4x16xf32>
    %27 = arith.select %25, %26, %23 : vector<4x16xi1>, vector<4x16xf32>
    %28 = tpu.reciprocal %27 {approx = true} : vector<4x16xf32> -> vector<4x16xf32>
    %29 = arith.mulf %21, %28 : vector<4x16xf32>
    %c0_14 = arith.constant 0 : index
    %c0_15 = arith.constant 0 : index
    %30 = vector.load %arg3[%c0_14, %c0_15] : memref<16x16xf32, #tpu.memory_space<vmem>>, vector<16x16xf32>
    %c0_16 = arith.constant 0 : index
    %c0_17 = arith.constant 0 : index
    %c0_18 = arith.constant 0 : index
    %31 = vector.load %arg5[%c0_16, %c0_17, %c0_18] : memref<3x16x32xf32, #tpu.memory_space<vmem>>, vector<1x16x32xf32>
    %32 = vector.shape_cast %31 : vector<1x16x32xf32> to vector<16x32xf32>
    %c1 = arith.constant 1 : index
    %c0_19 = arith.constant 0 : index
    %c0_20 = arith.constant 0 : index
    %33 = vector.load %arg5[%c1, %c0_19, %c0_20] : memref<3x16x32xf32, #tpu.memory_space<vmem>>, vector<1x16x32xf32>
    %34 = vector.shape_cast %33 : vector<1x16x32xf32> to vector<16x32xf32>
    %c2 = arith.constant 2 : index
    %c0_21 = arith.constant 0 : index
    %c0_22 = arith.constant 0 : index
    %35 = vector.load %arg5[%c2, %c0_21, %c0_22] : memref<3x16x32xf32, #tpu.memory_space<vmem>>, vector<1x16x32xf32>
    %36 = vector.shape_cast %35 : vector<1x16x32xf32> to vector<16x32xf32>
    %c0_23 = arith.constant 0 : index
    %c0_24 = arith.constant 0 : index
    %c0_25 = arith.constant 0 : index
    %37 = vector.load %arg6[%c0_23, %c0_24, %c0_25] : memref<3x32x32xf32, #tpu.memory_space<vmem>>, vector<1x32x32xf32>
    %38 = vector.shape_cast %37 : vector<1x32x32xf32> to vector<32x32xf32>
    %c1_26 = arith.constant 1 : index
    %c0_27 = arith.constant 0 : index
    %c0_28 = arith.constant 0 : index
    %39 = vector.load %arg6[%c1_26, %c0_27, %c0_28] : memref<3x32x32xf32, #tpu.memory_space<vmem>>, vector<1x32x32xf32>
    %40 = vector.shape_cast %39 : vector<1x32x32xf32> to vector<32x32xf32>
    %c2_29 = arith.constant 2 : index
    %c0_30 = arith.constant 0 : index
    %c0_31 = arith.constant 0 : index
    %41 = vector.load %arg6[%c2_29, %c0_30, %c0_31] : memref<3x32x32xf32, #tpu.memory_space<vmem>>, vector<1x32x32xf32>
    %42 = vector.shape_cast %41 : vector<1x32x32xf32> to vector<32x32xf32>
    %c0_32 = arith.constant 0 : index
    %c0_33 = arith.constant 0 : index
    %c0_34 = arith.constant 0 : index
    %43 = vector.load %arg7[%c0_32, %c0_33, %c0_34] : memref<3x1x32xf32, #tpu.memory_space<vmem>>, vector<1x1x32xf32>
    %44 = vector.shape_cast %43 : vector<1x1x32xf32> to vector<1x32xf32>
    %c1_35 = arith.constant 1 : index
    %c0_36 = arith.constant 0 : index
    %c0_37 = arith.constant 0 : index
    %45 = vector.load %arg7[%c1_35, %c0_36, %c0_37] : memref<3x1x32xf32, #tpu.memory_space<vmem>>, vector<1x1x32xf32>
    %46 = vector.shape_cast %45 : vector<1x1x32xf32> to vector<1x32xf32>
    %c2_38 = arith.constant 2 : index
    %c0_39 = arith.constant 0 : index
    %c0_40 = arith.constant 0 : index
    %47 = vector.load %arg7[%c2_38, %c0_39, %c0_40] : memref<3x1x32xf32, #tpu.memory_space<vmem>>, vector<1x1x32xf32>
    %48 = vector.shape_cast %47 : vector<1x1x32xf32> to vector<1x32xf32>
    %c0_41 = arith.constant 0 : index
    %c0_42 = arith.constant 0 : index
    %c0_43 = arith.constant 0 : index
    %49 = vector.load %arg8[%c0_41, %c0_42, %c0_43] : memref<3x1x32xf32, #tpu.memory_space<vmem>>, vector<1x1x32xf32>
    %50 = vector.shape_cast %49 : vector<1x1x32xf32> to vector<1x32xf32>
    %c1_44 = arith.constant 1 : index
    %c0_45 = arith.constant 0 : index
    %c0_46 = arith.constant 0 : index
    %51 = vector.load %arg8[%c1_44, %c0_45, %c0_46] : memref<3x1x32xf32, #tpu.memory_space<vmem>>, vector<1x1x32xf32>
    %52 = vector.shape_cast %51 : vector<1x1x32xf32> to vector<1x32xf32>
    %c2_47 = arith.constant 2 : index
    %c0_48 = arith.constant 0 : index
    %c0_49 = arith.constant 0 : index
    %53 = vector.load %arg8[%c2_47, %c0_48, %c0_49] : memref<3x1x32xf32, #tpu.memory_space<vmem>>, vector<1x1x32xf32>
    %54 = vector.shape_cast %53 : vector<1x1x32xf32> to vector<1x32xf32>
    %c0_50 = arith.constant 0 : index
    %c0_51 = arith.constant 0 : index
    %55 = vector.load %arg9[%c0_50, %c0_51] : memref<1x32xf32, #tpu.memory_space<vmem>>, vector<1x32xf32>
    %c0_52 = arith.constant 0 : index
    %c0_53 = arith.constant 0 : index
    %56 = vector.load %arg10[%c0_52, %c0_53] : memref<1x1xf32, #tpu.memory_space<vmem>>, vector<1x1xf32>
    %cst_54 = arith.constant 0.000000e+00 : f32
    %57 = vector.broadcast %cst_54 : f32 to vector<16x32xf32>
    %58 = vector.extract_strided_slice %29 {offsets = [0, 0], sizes = [1, 16], strides = [1, 1]} : vector<4x16xf32> to vector<1x16xf32>
    %59 = vector.broadcast %58 : vector<1x16xf32> to vector<16x16xf32>
    %60 = arith.mulf %3, %59 : vector<16x16xf32>
    %cst_55 = arith.constant dense<0.000000e+00> : vector<16x16xf32>
    %61 = tpu.matmul %60, %30, %cst_55 {dimension_numbers = #tpu.dot_dimension_numbers<[1], [0], [0], [1], [0, 0, 1, 1], [], []>} : vector<16x16xf32>, vector<16x16xf32>, vector<16x16xf32> -> vector<16x16xf32>
    %cst_56 = arith.constant dense<0.000000e+00> : vector<16x32xf32>
    %62 = tpu.matmul %61, %32, %cst_56 {dimension_numbers = #tpu.dot_dimension_numbers<[1], [0], [0], [1], [0, 0, 1, 1], [], []>} : vector<16x16xf32>, vector<16x32xf32>, vector<16x32xf32> -> vector<16x32xf32>
    %63 = vector.broadcast %44 : vector<1x32xf32> to vector<16x32xf32>
    %64 = arith.addf %62, %63 : vector<16x32xf32>
    %cst_57 = arith.constant dense<0.000000e+00> : vector<16x32xf32>
    %65 = tpu.matmul %57, %38, %cst_57 {dimension_numbers = #tpu.dot_dimension_numbers<[1], [0], [0], [1], [0, 0, 1, 1], [], []>} : vector<16x32xf32>, vector<32x32xf32>, vector<16x32xf32> -> vector<16x32xf32>
    %66 = arith.addf %64, %65 : vector<16x32xf32>
    %67 = vector.broadcast %50 : vector<1x32xf32> to vector<16x32xf32>
    %68 = arith.addf %66, %67 : vector<16x32xf32>
    %cst_58 = arith.constant 5.000000e-01 : f32
    %69 = vector.broadcast %cst_58 : f32 to vector<16x32xf32>
    %70 = arith.mulf %69, %68 : vector<16x32xf32>
    %71 = math.tanh %70 : vector<16x32xf32>
    %cst_59 = arith.constant 1.000000e+00 : f32
    %72 = vector.broadcast %cst_59 : f32 to vector<16x32xf32>
    %73 = arith.addf %71, %72 : vector<16x32xf32>
    %cst_60 = arith.constant 5.000000e-01 : f32
    %74 = vector.broadcast %cst_60 : f32 to vector<16x32xf32>
    %75 = arith.mulf %74, %73 : vector<16x32xf32>
    %cst_61 = arith.constant dense<0.000000e+00> : vector<16x32xf32>
    %76 = tpu.matmul %61, %34, %cst_61 {dimension_numbers = #tpu.dot_dimension_numbers<[1], [0], [0], [1], [0, 0, 1, 1], [], []>} : vector<16x16xf32>, vector<16x32xf32>, vector<16x32xf32> -> vector<16x32xf32>
    %77 = vector.broadcast %46 : vector<1x32xf32> to vector<16x32xf32>
    %78 = arith.addf %76, %77 : vector<16x32xf32>
    %cst_62 = arith.constant dense<0.000000e+00> : vector<16x32xf32>
    %79 = tpu.matmul %57, %40, %cst_62 {dimension_numbers = #tpu.dot_dimension_numbers<[1], [0], [0], [1], [0, 0, 1, 1], [], []>} : vector<16x32xf32>, vector<32x32xf32>, vector<16x32xf32> -> vector<16x32xf32>
    %80 = arith.addf %78, %79 : vector<16x32xf32>
    %81 = vector.broadcast %52 : vector<1x32xf32> to vector<16x32xf32>
    %82 = arith.addf %80, %81 : vector<16x32xf32>
    %cst_63 = arith.constant 5.000000e-01 : f32
    %83 = vector.broadcast %cst_63 : f32 to vector<16x32xf32>
    %84 = arith.mulf %83, %82 : vector<16x32xf32>
    %85 = math.tanh %84 : vector<16x32xf32>
    %cst_64 = arith.constant 1.000000e+00 : f32
    %86 = vector.broadcast %cst_64 : f32 to vector<16x32xf32>
    %87 = arith.addf %85, %86 : vector<16x32xf32>
    %cst_65 = arith.constant 5.000000e-01 : f32
    %88 = vector.broadcast %cst_65 : f32 to vector<16x32xf32>
    %89 = arith.mulf %88, %87 : vector<16x32xf32>
    %cst_66 = arith.constant dense<0.000000e+00> : vector<16x32xf32>
    %90 = tpu.matmul %61, %36, %cst_66 {dimension_numbers = #tpu.dot_dimension_numbers<[1], [0], [0], [1], [0, 0, 1, 1], [], []>} : vector<16x16xf32>, vector<16x32xf32>, vector<16x32xf32> -> vector<16x32xf32>
    %91 = vector.broadcast %48 : vector<1x32xf32> to vector<16x32xf32>
    %92 = arith.addf %90, %91 : vector<16x32xf32>
    %cst_67 = arith.constant dense<0.000000e+00> : vector<16x32xf32>
    %93 = tpu.matmul %57, %42, %cst_67 {dimension_numbers = #tpu.dot_dimension_numbers<[1], [0], [0], [1], [0, 0, 1, 1], [], []>} : vector<16x32xf32>, vector<32x32xf32>, vector<16x32xf32> -> vector<16x32xf32>
    %94 = vector.broadcast %54 : vector<1x32xf32> to vector<16x32xf32>
    %95 = arith.addf %93, %94 : vector<16x32xf32>
    %96 = arith.mulf %75, %95 : vector<16x32xf32>
    %97 = arith.addf %92, %96 : vector<16x32xf32>
    %98 = math.tanh %97 : vector<16x32xf32>
    %cst_68 = arith.constant 1.000000e+00 : f32
    %99 = vector.broadcast %cst_68 : f32 to vector<16x32xf32>
    %100 = arith.subf %99, %89 : vector<16x32xf32>
    %101 = arith.mulf %100, %98 : vector<16x32xf32>
    %102 = arith.mulf %89, %57 : vector<16x32xf32>
    %103 = arith.addf %101, %102 : vector<16x32xf32>
    %104 = vector.broadcast %55 : vector<1x32xf32> to vector<16x32xf32>
    %105 = arith.mulf %103, %104 : vector<16x32xf32>
    %cst_69 = arith.constant dense<0.000000e+00> : vector<16xf32>
    %106 = vector.multi_reduction <add>, %105, %cst_69 [1] : vector<16x32xf32> to vector<16xf32>
    %107 = vector.shape_cast %106 : vector<16xf32> to vector<1x16xf32>
    %108 = vector.broadcast %56 : vector<1x1xf32> to vector<1x16xf32>
    %109 = arith.addf %107, %108 : vector<1x16xf32>
    %110 = vector.extract_strided_slice %29 {offsets = [1, 0], sizes = [1, 16], strides = [1, 1]} : vector<4x16xf32> to vector<1x16xf32>
    %111 = vector.broadcast %110 : vector<1x16xf32> to vector<16x16xf32>
    %112 = arith.mulf %3, %111 : vector<16x16xf32>
    %cst_70 = arith.constant dense<0.000000e+00> : vector<16x16xf32>
    %113 = tpu.matmul %112, %30, %cst_70 {dimension_numbers = #tpu.dot_dimension_numbers<[1], [0], [0], [1], [0, 0, 1, 1], [], []>} : vector<16x16xf32>, vector<16x16xf32>, vector<16x16xf32> -> vector<16x16xf32>
    %cst_71 = arith.constant dense<0.000000e+00> : vector<16x32xf32>
    %114 = tpu.matmul %113, %32, %cst_71 {dimension_numbers = #tpu.dot_dimension_numbers<[1], [0], [0], [1], [0, 0, 1, 1], [], []>} : vector<16x16xf32>, vector<16x32xf32>, vector<16x32xf32> -> vector<16x32xf32>
    %115 = vector.broadcast %44 : vector<1x32xf32> to vector<16x32xf32>
    %116 = arith.addf %114, %115 : vector<16x32xf32>
    %cst_72 = arith.constant dense<0.000000e+00> : vector<16x32xf32>
    %117 = tpu.matmul %103, %38, %cst_72 {dimension_numbers = #tpu.dot_dimension_numbers<[1], [0], [0], [1], [0, 0, 1, 1], [], []>} : vector<16x32xf32>, vector<32x32xf32>, vector<16x32xf32> -> vector<16x32xf32>
    %118 = arith.addf %116, %117 : vector<16x32xf32>
    %119 = vector.broadcast %50 : vector<1x32xf32> to vector<16x32xf32>
    %120 = arith.addf %118, %119 : vector<16x32xf32>
    %cst_73 = arith.constant 5.000000e-01 : f32
    %121 = vector.broadcast %cst_73 : f32 to vector<16x32xf32>
    %122 = arith.mulf %121, %120 : vector<16x32xf32>
    %123 = math.tanh %122 : vector<16x32xf32>
    %cst_74 = arith.constant 1.000000e+00 : f32
    %124 = vector.broadcast %cst_74 : f32 to vector<16x32xf32>
    %125 = arith.addf %123, %124 : vector<16x32xf32>
    %cst_75 = arith.constant 5.000000e-01 : f32
    %126 = vector.broadcast %cst_75 : f32 to vector<16x32xf32>
    %127 = arith.mulf %126, %125 : vector<16x32xf32>
    %cst_76 = arith.constant dense<0.000000e+00> : vector<16x32xf32>
    %128 = tpu.matmul %113, %34, %cst_76 {dimension_numbers = #tpu.dot_dimension_numbers<[1], [0], [0], [1], [0, 0, 1, 1], [], []>} : vector<16x16xf32>, vector<16x32xf32>, vector<16x32xf32> -> vector<16x32xf32>
    %129 = vector.broadcast %46 : vector<1x32xf32> to vector<16x32xf32>
    %130 = arith.addf %128, %129 : vector<16x32xf32>
    %cst_77 = arith.constant dense<0.000000e+00> : vector<16x32xf32>
    %131 = tpu.matmul %103, %40, %cst_77 {dimension_numbers = #tpu.dot_dimension_numbers<[1], [0], [0], [1], [0, 0, 1, 1], [], []>} : vector<16x32xf32>, vector<32x32xf32>, vector<16x32xf32> -> vector<16x32xf32>
    %132 = arith.addf %130, %131 : vector<16x32xf32>
    %133 = vector.broadcast %52 : vector<1x32xf32> to vector<16x32xf32>
    %134 = arith.addf %132, %133 : vector<16x32xf32>
    %cst_78 = arith.constant 5.000000e-01 : f32
    %135 = vector.broadcast %cst_78 : f32 to vector<16x32xf32>
    %136 = arith.mulf %135, %134 : vector<16x32xf32>
    %137 = math.tanh %136 : vector<16x32xf32>
    %cst_79 = arith.constant 1.000000e+00 : f32
    %138 = vector.broadcast %cst_79 : f32 to vector<16x32xf32>
    %139 = arith.addf %137, %138 : vector<16x32xf32>
    %cst_80 = arith.constant 5.000000e-01 : f32
    %140 = vector.broadcast %cst_80 : f32 to vector<16x32xf32>
    %141 = arith.mulf %140, %139 : vector<16x32xf32>
    %cst_81 = arith.constant dense<0.000000e+00> : vector<16x32xf32>
    %142 = tpu.matmul %113, %36, %cst_81 {dimension_numbers = #tpu.dot_dimension_numbers<[1], [0], [0], [1], [0, 0, 1, 1], [], []>} : vector<16x16xf32>, vector<16x32xf32>, vector<16x32xf32> -> vector<16x32xf32>
    %143 = vector.broadcast %48 : vector<1x32xf32> to vector<16x32xf32>
    %144 = arith.addf %142, %143 : vector<16x32xf32>
    %cst_82 = arith.constant dense<0.000000e+00> : vector<16x32xf32>
    %145 = tpu.matmul %103, %42, %cst_82 {dimension_numbers = #tpu.dot_dimension_numbers<[1], [0], [0], [1], [0, 0, 1, 1], [], []>} : vector<16x32xf32>, vector<32x32xf32>, vector<16x32xf32> -> vector<16x32xf32>
    %146 = vector.broadcast %54 : vector<1x32xf32> to vector<16x32xf32>
    %147 = arith.addf %145, %146 : vector<16x32xf32>
    %148 = arith.mulf %127, %147 : vector<16x32xf32>
    %149 = arith.addf %144, %148 : vector<16x32xf32>
    %150 = math.tanh %149 : vector<16x32xf32>
    %cst_83 = arith.constant 1.000000e+00 : f32
    %151 = vector.broadcast %cst_83 : f32 to vector<16x32xf32>
    %152 = arith.subf %151, %141 : vector<16x32xf32>
    %153 = arith.mulf %152, %150 : vector<16x32xf32>
    %154 = arith.mulf %141, %103 : vector<16x32xf32>
    %155 = arith.addf %153, %154 : vector<16x32xf32>
    %156 = vector.broadcast %55 : vector<1x32xf32> to vector<16x32xf32>
    %157 = arith.mulf %155, %156 : vector<16x32xf32>
    %cst_84 = arith.constant dense<0.000000e+00> : vector<16xf32>
    %158 = vector.multi_reduction <add>, %157, %cst_84 [1] : vector<16x32xf32> to vector<16xf32>
    %159 = vector.shape_cast %158 : vector<16xf32> to vector<1x16xf32>
    %160 = vector.broadcast %56 : vector<1x1xf32> to vector<1x16xf32>
    %161 = arith.addf %159, %160 : vector<1x16xf32>
    %162 = vector.extract_strided_slice %29 {offsets = [2, 0], sizes = [1, 16], strides = [1, 1]} : vector<4x16xf32> to vector<1x16xf32>
    %163 = vector.broadcast %162 : vector<1x16xf32> to vector<16x16xf32>
    %164 = arith.mulf %3, %163 : vector<16x16xf32>
    %cst_85 = arith.constant dense<0.000000e+00> : vector<16x16xf32>
    %165 = tpu.matmul %164, %30, %cst_85 {dimension_numbers = #tpu.dot_dimension_numbers<[1], [0], [0], [1], [0, 0, 1, 1], [], []>} : vector<16x16xf32>, vector<16x16xf32>, vector<16x16xf32> -> vector<16x16xf32>
    %cst_86 = arith.constant dense<0.000000e+00> : vector<16x32xf32>
    %166 = tpu.matmul %165, %32, %cst_86 {dimension_numbers = #tpu.dot_dimension_numbers<[1], [0], [0], [1], [0, 0, 1, 1], [], []>} : vector<16x16xf32>, vector<16x32xf32>, vector<16x32xf32> -> vector<16x32xf32>
    %167 = vector.broadcast %44 : vector<1x32xf32> to vector<16x32xf32>
    %168 = arith.addf %166, %167 : vector<16x32xf32>
    %cst_87 = arith.constant dense<0.000000e+00> : vector<16x32xf32>
    %169 = tpu.matmul %155, %38, %cst_87 {dimension_numbers = #tpu.dot_dimension_numbers<[1], [0], [0], [1], [0, 0, 1, 1], [], []>} : vector<16x32xf32>, vector<32x32xf32>, vector<16x32xf32> -> vector<16x32xf32>
    %170 = arith.addf %168, %169 : vector<16x32xf32>
    %171 = vector.broadcast %50 : vector<1x32xf32> to vector<16x32xf32>
    %172 = arith.addf %170, %171 : vector<16x32xf32>
    %cst_88 = arith.constant 5.000000e-01 : f32
    %173 = vector.broadcast %cst_88 : f32 to vector<16x32xf32>
    %174 = arith.mulf %173, %172 : vector<16x32xf32>
    %175 = math.tanh %174 : vector<16x32xf32>
    %cst_89 = arith.constant 1.000000e+00 : f32
    %176 = vector.broadcast %cst_89 : f32 to vector<16x32xf32>
    %177 = arith.addf %175, %176 : vector<16x32xf32>
    %cst_90 = arith.constant 5.000000e-01 : f32
    %178 = vector.broadcast %cst_90 : f32 to vector<16x32xf32>
    %179 = arith.mulf %178, %177 : vector<16x32xf32>
    %cst_91 = arith.constant dense<0.000000e+00> : vector<16x32xf32>
    %180 = tpu.matmul %165, %34, %cst_91 {dimension_numbers = #tpu.dot_dimension_numbers<[1], [0], [0], [1], [0, 0, 1, 1], [], []>} : vector<16x16xf32>, vector<16x32xf32>, vector<16x32xf32> -> vector<16x32xf32>
    %181 = vector.broadcast %46 : vector<1x32xf32> to vector<16x32xf32>
    %182 = arith.addf %180, %181 : vector<16x32xf32>
    %cst_92 = arith.constant dense<0.000000e+00> : vector<16x32xf32>
    %183 = tpu.matmul %155, %40, %cst_92 {dimension_numbers = #tpu.dot_dimension_numbers<[1], [0], [0], [1], [0, 0, 1, 1], [], []>} : vector<16x32xf32>, vector<32x32xf32>, vector<16x32xf32> -> vector<16x32xf32>
    %184 = arith.addf %182, %183 : vector<16x32xf32>
    %185 = vector.broadcast %52 : vector<1x32xf32> to vector<16x32xf32>
    %186 = arith.addf %184, %185 : vector<16x32xf32>
    %cst_93 = arith.constant 5.000000e-01 : f32
    %187 = vector.broadcast %cst_93 : f32 to vector<16x32xf32>
    %188 = arith.mulf %187, %186 : vector<16x32xf32>
    %189 = math.tanh %188 : vector<16x32xf32>
    %cst_94 = arith.constant 1.000000e+00 : f32
    %190 = vector.broadcast %cst_94 : f32 to vector<16x32xf32>
    %191 = arith.addf %189, %190 : vector<16x32xf32>
    %cst_95 = arith.constant 5.000000e-01 : f32
    %192 = vector.broadcast %cst_95 : f32 to vector<16x32xf32>
    %193 = arith.mulf %192, %191 : vector<16x32xf32>
    %cst_96 = arith.constant dense<0.000000e+00> : vector<16x32xf32>
    %194 = tpu.matmul %165, %36, %cst_96 {dimension_numbers = #tpu.dot_dimension_numbers<[1], [0], [0], [1], [0, 0, 1, 1], [], []>} : vector<16x16xf32>, vector<16x32xf32>, vector<16x32xf32> -> vector<16x32xf32>
    %195 = vector.broadcast %48 : vector<1x32xf32> to vector<16x32xf32>
    %196 = arith.addf %194, %195 : vector<16x32xf32>
    %cst_97 = arith.constant dense<0.000000e+00> : vector<16x32xf32>
    %197 = tpu.matmul %155, %42, %cst_97 {dimension_numbers = #tpu.dot_dimension_numbers<[1], [0], [0], [1], [0, 0, 1, 1], [], []>} : vector<16x32xf32>, vector<32x32xf32>, vector<16x32xf32> -> vector<16x32xf32>
    %198 = vector.broadcast %54 : vector<1x32xf32> to vector<16x32xf32>
    %199 = arith.addf %197, %198 : vector<16x32xf32>
    %200 = arith.mulf %179, %199 : vector<16x32xf32>
    %201 = arith.addf %196, %200 : vector<16x32xf32>
    %202 = math.tanh %201 : vector<16x32xf32>
    %cst_98 = arith.constant 1.000000e+00 : f32
    %203 = vector.broadcast %cst_98 : f32 to vector<16x32xf32>
    %204 = arith.subf %203, %193 : vector<16x32xf32>
    %205 = arith.mulf %204, %202 : vector<16x32xf32>
    %206 = arith.mulf %193, %155 : vector<16x32xf32>
    %207 = arith.addf %205, %206 : vector<16x32xf32>
    %208 = vector.broadcast %55 : vector<1x32xf32> to vector<16x32xf32>
    %209 = arith.mulf %207, %208 : vector<16x32xf32>
    %cst_99 = arith.constant dense<0.000000e+00> : vector<16xf32>
    %210 = vector.multi_reduction <add>, %209, %cst_99 [1] : vector<16x32xf32> to vector<16xf32>
    %211 = vector.shape_cast %210 : vector<16xf32> to vector<1x16xf32>
    %212 = vector.broadcast %56 : vector<1x1xf32> to vector<1x16xf32>
    %213 = arith.addf %211, %212 : vector<1x16xf32>
    %214 = vector.extract_strided_slice %29 {offsets = [3, 0], sizes = [1, 16], strides = [1, 1]} : vector<4x16xf32> to vector<1x16xf32>
    %215 = vector.broadcast %214 : vector<1x16xf32> to vector<16x16xf32>
    %216 = arith.mulf %3, %215 : vector<16x16xf32>
    %cst_100 = arith.constant dense<0.000000e+00> : vector<16x16xf32>
    %217 = tpu.matmul %216, %30, %cst_100 {dimension_numbers = #tpu.dot_dimension_numbers<[1], [0], [0], [1], [0, 0, 1, 1], [], []>} : vector<16x16xf32>, vector<16x16xf32>, vector<16x16xf32> -> vector<16x16xf32>
    %cst_101 = arith.constant dense<0.000000e+00> : vector<16x32xf32>
    %218 = tpu.matmul %217, %32, %cst_101 {dimension_numbers = #tpu.dot_dimension_numbers<[1], [0], [0], [1], [0, 0, 1, 1], [], []>} : vector<16x16xf32>, vector<16x32xf32>, vector<16x32xf32> -> vector<16x32xf32>
    %219 = vector.broadcast %44 : vector<1x32xf32> to vector<16x32xf32>
    %220 = arith.addf %218, %219 : vector<16x32xf32>
    %cst_102 = arith.constant dense<0.000000e+00> : vector<16x32xf32>
    %221 = tpu.matmul %207, %38, %cst_102 {dimension_numbers = #tpu.dot_dimension_numbers<[1], [0], [0], [1], [0, 0, 1, 1], [], []>} : vector<16x32xf32>, vector<32x32xf32>, vector<16x32xf32> -> vector<16x32xf32>
    %222 = arith.addf %220, %221 : vector<16x32xf32>
    %223 = vector.broadcast %50 : vector<1x32xf32> to vector<16x32xf32>
    %224 = arith.addf %222, %223 : vector<16x32xf32>
    %cst_103 = arith.constant 5.000000e-01 : f32
    %225 = vector.broadcast %cst_103 : f32 to vector<16x32xf32>
    %226 = arith.mulf %225, %224 : vector<16x32xf32>
    %227 = math.tanh %226 : vector<16x32xf32>
    %cst_104 = arith.constant 1.000000e+00 : f32
    %228 = vector.broadcast %cst_104 : f32 to vector<16x32xf32>
    %229 = arith.addf %227, %228 : vector<16x32xf32>
    %cst_105 = arith.constant 5.000000e-01 : f32
    %230 = vector.broadcast %cst_105 : f32 to vector<16x32xf32>
    %231 = arith.mulf %230, %229 : vector<16x32xf32>
    %cst_106 = arith.constant dense<0.000000e+00> : vector<16x32xf32>
    %232 = tpu.matmul %217, %34, %cst_106 {dimension_numbers = #tpu.dot_dimension_numbers<[1], [0], [0], [1], [0, 0, 1, 1], [], []>} : vector<16x16xf32>, vector<16x32xf32>, vector<16x32xf32> -> vector<16x32xf32>
    %233 = vector.broadcast %46 : vector<1x32xf32> to vector<16x32xf32>
    %234 = arith.addf %232, %233 : vector<16x32xf32>
    %cst_107 = arith.constant dense<0.000000e+00> : vector<16x32xf32>
    %235 = tpu.matmul %207, %40, %cst_107 {dimension_numbers = #tpu.dot_dimension_numbers<[1], [0], [0], [1], [0, 0, 1, 1], [], []>} : vector<16x32xf32>, vector<32x32xf32>, vector<16x32xf32> -> vector<16x32xf32>
    %236 = arith.addf %234, %235 : vector<16x32xf32>
    %237 = vector.broadcast %52 : vector<1x32xf32> to vector<16x32xf32>
    %238 = arith.addf %236, %237 : vector<16x32xf32>
    %cst_108 = arith.constant 5.000000e-01 : f32
    %239 = vector.broadcast %cst_108 : f32 to vector<16x32xf32>
    %240 = arith.mulf %239, %238 : vector<16x32xf32>
    %241 = math.tanh %240 : vector<16x32xf32>
    %cst_109 = arith.constant 1.000000e+00 : f32
    %242 = vector.broadcast %cst_109 : f32 to vector<16x32xf32>
    %243 = arith.addf %241, %242 : vector<16x32xf32>
    %cst_110 = arith.constant 5.000000e-01 : f32
    %244 = vector.broadcast %cst_110 : f32 to vector<16x32xf32>
    %245 = arith.mulf %244, %243 : vector<16x32xf32>
    %cst_111 = arith.constant dense<0.000000e+00> : vector<16x32xf32>
    %246 = tpu.matmul %217, %36, %cst_111 {dimension_numbers = #tpu.dot_dimension_numbers<[1], [0], [0], [1], [0, 0, 1, 1], [], []>} : vector<16x16xf32>, vector<16x32xf32>, vector<16x32xf32> -> vector<16x32xf32>
    %247 = vector.broadcast %48 : vector<1x32xf32> to vector<16x32xf32>
    %248 = arith.addf %246, %247 : vector<16x32xf32>
    %cst_112 = arith.constant dense<0.000000e+00> : vector<16x32xf32>
    %249 = tpu.matmul %207, %42, %cst_112 {dimension_numbers = #tpu.dot_dimension_numbers<[1], [0], [0], [1], [0, 0, 1, 1], [], []>} : vector<16x32xf32>, vector<32x32xf32>, vector<16x32xf32> -> vector<16x32xf32>
    %250 = vector.broadcast %54 : vector<1x32xf32> to vector<16x32xf32>
    %251 = arith.addf %249, %250 : vector<16x32xf32>
    %252 = arith.mulf %231, %251 : vector<16x32xf32>
    %253 = arith.addf %248, %252 : vector<16x32xf32>
    %254 = math.tanh %253 : vector<16x32xf32>
    %cst_113 = arith.constant 1.000000e+00 : f32
    %255 = vector.broadcast %cst_113 : f32 to vector<16x32xf32>
    %256 = arith.subf %255, %245 : vector<16x32xf32>
    %257 = arith.mulf %256, %254 : vector<16x32xf32>
    %258 = arith.mulf %245, %207 : vector<16x32xf32>
    %259 = arith.addf %257, %258 : vector<16x32xf32>
    %260 = vector.broadcast %55 : vector<1x32xf32> to vector<16x32xf32>
    %261 = arith.mulf %259, %260 : vector<16x32xf32>
    %cst_114 = arith.constant dense<0.000000e+00> : vector<16xf32>
    %262 = vector.multi_reduction <add>, %261, %cst_114 [1] : vector<16x32xf32> to vector<16xf32>
    %263 = vector.shape_cast %262 : vector<16xf32> to vector<1x16xf32>
    %264 = vector.broadcast %56 : vector<1x1xf32> to vector<1x16xf32>
    %265 = arith.addf %263, %264 : vector<1x16xf32>
    %266 = tpu.concatenate %109, %161, %213, %265 in 0 : vector<1x16xf32>, vector<1x16xf32>, vector<1x16xf32>, vector<1x16xf32> -> vector<4x16xf32>
    %c0_115 = arith.constant 0 : index
    %c0_116 = arith.constant 0 : index
    %267 = vector.load %arg11[%c0_115, %c0_116] : memref<4x16xf32, #tpu.memory_space<vmem>>, vector<4x16xf32>
    tpu.vector_store %arg11[%c0_115, %c0_116], %266 {strides = array<i32>} : memref<4x16xf32, #tpu.memory_space<vmem>>, vector<4x16xf32>,
    return
  }
  func.func @transform_0(%arg0: i32) -> (i32, i32) {
    %c0_i32 = arith.constant 0 : i32
    %c0_i32_0 = arith.constant 0 : i32
    %c0_i32_1 = arith.constant 0 : i32
    return %c0_i32, %c0_i32_0 : i32, i32
  }
  func.func @transform_1(%arg0: i32) -> (i32, i32) {
    %c0_i32 = arith.constant 0 : i32
    %c0_i32_0 = arith.constant 0 : i32
    %c0_i32_1 = arith.constant 0 : i32
    return %c0_i32, %c0_i32_0 : i32, i32
  }
  func.func @transform_2(%arg0: i32) -> (i32, i32) {
    %c0_i32 = arith.constant 0 : i32
    %c0_i32_0 = arith.constant 0 : i32
    %c0_i32_1 = arith.constant 0 : i32
    return %c0_i32, %c0_i32_0 : i32, i32
  }
  func.func @transform_3(%arg0: i32) -> (i32, i32) {
    %c0_i32 = arith.constant 0 : i32
    %c0_i32_0 = arith.constant 0 : i32
    %c0_i32_1 = arith.constant 0 : i32
    return %c0_i32, %c0_i32_0 : i32, i32
  }
  func.func @transform_4(%arg0: i32) -> (i32, i32, i32) {
    %c0_i32 = arith.constant 0 : i32
    %c0_i32_0 = arith.constant 0 : i32
    %c0_i32_1 = arith.constant 0 : i32
    %c0_i32_2 = arith.constant 0 : i32
    return %c0_i32, %c0_i32_0, %c0_i32_1 : i32, i32, i32
  }
  func.func @transform_5(%arg0: i32) -> (i32, i32, i32) {
    %c0_i32 = arith.constant 0 : i32
    %c0_i32_0 = arith.constant 0 : i32
    %c0_i32_1 = arith.constant 0 : i32
    %c0_i32_2 = arith.constant 0 : i32
    return %c0_i32, %c0_i32_0, %c0_i32_1 : i32, i32, i32
  }
  func.func @transform_6(%arg0: i32) -> (i32, i32, i32) {
    %c0_i32 = arith.constant 0 : i32
    %c0_i32_0 = arith.constant 0 : i32
    %c0_i32_1 = arith.constant 0 : i32
    %c0_i32_2 = arith.constant 0 : i32
    return %c0_i32, %c0_i32_0, %c0_i32_1 : i32, i32, i32
  }
  func.func @transform_7(%arg0: i32) -> (i32, i32, i32) {
    %c0_i32 = arith.constant 0 : i32
    %c0_i32_0 = arith.constant 0 : i32
    %c0_i32_1 = arith.constant 0 : i32
    %c0_i32_2 = arith.constant 0 : i32
    return %c0_i32, %c0_i32_0, %c0_i32_1 : i32, i32, i32
  }
  func.func @transform_8(%arg0: i32) -> (i32, i32) {
    %c0_i32 = arith.constant 0 : i32
    %c0_i32_0 = arith.constant 0 : i32
    %c0_i32_1 = arith.constant 0 : i32
    return %c0_i32, %c0_i32_0 : i32, i32
  }
  func.func @transform_9(%arg0: i32) -> (i32, i32) {
    %c0_i32 = arith.constant 0 : i32
    %c0_i32_0 = arith.constant 0 : i32
    %c0_i32_1 = arith.constant 0 : i32
    return %c0_i32, %c0_i32_0 : i32, i32
  }
  func.func @transform_10(%arg0: i32) -> (i32, i32) {
    %c0_i32 = arith.constant 0 : i32
    %c0_i32_0 = arith.constant 0 : i32
    %c0_i32_1 = arith.constant 0 : i32
    return %c0_i32, %c0_i32_0 : i32, i32
  }
}

</mosaic_0001>

<llo_original>
// kernel: tpu_custom_call.1
$region0: #{tpu_custom_call.1}
  #allocation0 [shape = 'u32[]', space=smem, size = 0x4, offset = 0x4, fixed_abs, tag = 'smem constant byte address 0x4 - core index']
  #allocation1 [shape = 'u32[144,128]{1,0:T(1,128)}', space=vmem, size = 0x12000, scoped, tag = 'internal scratch']
  #allocation2 [shape = 'f32[1,1]{1,0:T(1,128)S(1)}', space=vmem, size = 0x200, scoped, tag = 'scoped memory for tpu_custom_call.1']
  %s0 = inlined_call_operand.hbm [shape: f32[4,16], index: 0, kind: input, shape index: {}]
  %s1 = inlined_call_operand.hbm [shape: f32[16,16], index: 1, kind: input, shape index: {}]
  %s2 = inlined_call_operand.hbm [shape: f32[16,16], index: 2, kind: input, shape index: {}]
  %s3 = inlined_call_operand.hbm [shape: f32[16,16], index: 3, kind: input, shape index: {}]
  %s4 = inlined_call_operand.hbm [shape: f32[3,16,32], index: 4, kind: input, shape index: {}]
  %s5 = inlined_call_operand.hbm [shape: f32[3,32,32], index: 5, kind: input, shape index: {}]
  %s6 = inlined_call_operand.vmem [shape: f32[3,1,32], index: 6, kind: input, shape index: {}]
  %s7 = inlined_call_operand.vmem [shape: f32[3,1,32], index: 7, kind: input, shape index: {}]
  %s8 = inlined_call_operand.vmem [shape: f32[1,32], index: 8, kind: input, shape index: {}]
  %s9 = inlined_call_operand.<no memory space> [shape: f32[1,1], index: 9, kind: input, shape index: {}]
  %s10 = inlined_call_operand.hbm [shape: f32[4,16], index: 10, kind: output, shape index: {}]
  %s11 = sld [smem:[#allocation0]]
  $region74: #{tpu_custom_call.1} parent=0
    _
  %s13 = ssub.s32 1, %s11
  %s14 = scalar_select 0, %s13, %s11
  %v15 = vstv %s9
  %16 = vst [vmem:[#allocation2] sm:$0x1] %v15
  $region1: #{tpu_custom_call.1} parent=0
    #allocation3 [shape = 'u8[2048]{0}', space=vmem, size = 0x800, scoped, tag = 'input window, operand 0, single buffered']
    #allocation4 [shape = 's32[1]{0}', space=sflag, size = 0x4, scoped, tag = 'scoped memory for tpu_custom_call.1']
    #allocation5 [shape = 's32[1]{0}', space=sflag, size = 0x4, scoped, tag = 'scoped memory for tpu_custom_call.1']
    #allocation6 [shape = 'u8[8192]{0}', space=vmem, size = 0x2000, scoped, tag = 'input window, operand 1, single buffered']
    #allocation7 [shape = 's32[1]{0}', space=sflag, size = 0x4, scoped, tag = 'scoped memory for tpu_custom_call.1']
    #allocation8 [shape = 'u8[8192]{0}', space=vmem, size = 0x2000, scoped, tag = 'input window, operand 2, single buffered']
    #allocation9 [shape = 'u8[8192]{0}', space=vmem, size = 0x2000, scoped, tag = 'input window, operand 3, single buffered']
    #allocation10 [shape = 's32[1]{0}', space=sflag, size = 0x4, scoped, tag = 'scoped memory for tpu_custom_call.1']
    #allocation11 [shape = 'u8[24576]{0}', space=vmem, size = 0x6000, scoped, tag = 'input window, operand 4, single buffered']
    #allocation12 [shape = 'u8[49152]{0}', space=vmem, size = 0xc000, scoped, tag = 'input window, operand 5, single buffered']
    #allocation13 [shape = 's32[1]{0}', space=sflag, size = 0x4, scoped, tag = 'scoped memory for tpu_custom_call.1']
    #allocation14 [shape = 'u8[2048]{0}', space=vmem, size = 0x800, scoped, tag = 'output window, operand 0, single buffered']
    %17 = vsyncpa [#allocation4], 0
    %18 = vsyncpa [#allocation7], 0
    %19 = vsyncpa [#allocation10], 0
    %20 = vsyncpa [#allocation13], 0
    %21 = vsyncpa [#allocation5], 0
    // Predicated region
    $region2: #{tpu_custom_call.1} parent=1 // pred_check
      _
    $region3: #{tpu_custom_call.1} parent=1 // pred_check_branch
      %23 = sbr.rel (0) target = $region5
    $region4: #{tpu_custom_call.1} parent=1 // pred_region
      %s25 = ssub.s32 64, 64
      %26 = vsyncadd [#allocation4], %s25
      %s28 = sshll.u32 [#allocation3], 4
      %s29 = int_to_ptr.vmem [resolvable:$true] %s28
      %31 = dma.hbm_to_vmem [thread:$0]  %s0, 64, %s29, [#allocation4]
    $region5: #{tpu_custom_call.1} parent=1 // pred_fallthru
      _
    // Predicated region
    $region6: #{tpu_custom_call.1} parent=1 // pred_check
      _
    $region7: #{tpu_custom_call.1} parent=1 // pred_check_branch
      %33 = sbr.rel (0) target = $region9
    $region8: #{tpu_custom_call.1} parent=1 // pred_region
      %s35 = ssub.s32 256, 256
      %36 = vsyncadd [#allocation7], %s35
      %s37 = sshll.u32 [#allocation6], 4
      %s38 = int_to_ptr.vmem [resolvable:$true] %s37
      %43 = dma.hbm_to_vmem [thread:$0]  %s1, 256, %s38, [#allocation7], 128, 128, 8
    $region9: #{tpu_custom_call.1} parent=1 // pred_fallthru
      _
    // Predicated region
    $region10: #{tpu_custom_call.1} parent=1 // pred_check
      _
    $region11: #{tpu_custom_call.1} parent=1 // pred_check_branch
      %45 = sbr.rel (0) target = $region13
    $region12: #{tpu_custom_call.1} parent=1 // pred_region
      %s47 = ssub.s32 256, 256
      %48 = vsyncadd [#allocation7], %s47
      %s49 = sshll.u32 [#allocation8], 4
      %s50 = int_to_ptr.vmem [resolvable:$true] %s49
      %55 = dma.hbm_to_vmem [thread:$0]  %s2, 256, %s50, [#allocation7], 128, 128, 8
    $region13: #{tpu_custom_call.1} parent=1 // pred_fallthru
      _
    // Predicated region
    $region14: #{tpu_custom_call.1} parent=1 // pred_check
      _
    $region15: #{tpu_custom_call.1} parent=1 // pred_check_branch
      %57 = sbr.rel (0) target = $region17
    $region16: #{tpu_custom_call.1} parent=1 // pred_region
      %s59 = ssub.s32 256, 256
      %60 = vsyncadd [#allocation10], %s59
      %s61 = sshll.u32 [#allocation9], 4
      %s62 = int_to_ptr.vmem [resolvable:$true] %s61
      %67 = dma.hbm_to_vmem [thread:$0]  %s3, 256, %s62, [#allocation10], 128, 128, 8
    $region17: #{tpu_custom_call.1} parent=1 // pred_fallthru
      _
    // Predicated region
    $region18: #{tpu_custom_call.1} parent=1 // pred_check
      _
    $region19: #{tpu_custom_call.1} parent=1 // pred_check_branch
      %69 = sbr.rel (0) target = $region21
    $region20: #{tpu_custom_call.1} parent=1 // pred_region
      %s71 = ssub.s32 768, 768
      %72 = vsyncadd [#allocation10], %s71
      %s73 = sshll.u32 [#allocation11], 4
      %s74 = int_to_ptr.vmem [resolvable:$true] %s73
      %79 = dma.hbm_to_vmem [thread:$0]  %s4, 768, %s74, [#allocation10], 128, 128, 8
    $region21: #{tpu_custom_call.1} parent=1 // pred_fallthru
      _
    // Predicated region
    $region22: #{tpu_custom_call.1} parent=1 // pred_check
      _
    $region23: #{tpu_custom_call.1} parent=1 // pred_check_branch
      %81 = sbr.rel (0) target = $region25
    $region24: #{tpu_custom_call.1} parent=1 // pred_region
      %s83 = ssub.s32 1536, 1536
      %84 = vsyncadd [#allocation13], %s83
      %s85 = sshll.u32 [#allocation12], 4
      %s86 = int_to_ptr.vmem [resolvable:$true] %s85
      %91 = dma.hbm_to_vmem [thread:$0]  %s5, 1536, %s86, [#allocation13], 128, 128, 8
    $region25: #{tpu_custom_call.1} parent=1 // pred_fallthru
      _
    // Predicated region
    $region26: #{tpu_custom_call.1} parent=1 // pred_check
      _
    $region27: #{tpu_custom_call.1} parent=1 // pred_check_branch
      %93 = sbr.rel (0) target = $region29
    $region28: #{tpu_custom_call.1} parent=1 // pred_region
      _
    $region29: #{tpu_custom_call.1} parent=1 // pred_fallthru
      _
    // Predicated region
    $region30: #{tpu_custom_call.1} parent=1 // pred_check
      _
    $region31: #{tpu_custom_call.1} parent=1 // pred_check_branch
      %95 = sbr.rel (0) target = $region33
    $region32: #{tpu_custom_call.1} parent=1 // pred_region
      _
    $region33: #{tpu_custom_call.1} parent=1 // pred_fallthru
      _
    // Predicated region
    $region34: #{tpu_custom_call.1} parent=1 // pred_check
      _
    $region35: #{tpu_custom_call.1} parent=1 // pred_check_branch
      %97 = sbr.rel (0) target = $region37
    $region36: #{tpu_custom_call.1} parent=1 // pred_region
      _
    $region37: #{tpu_custom_call.1} parent=1 // pred_fallthru
      _
    // Predicated region
    $region38: #{tpu_custom_call.1} parent=1 // pred_check
      _
    $region39: #{tpu_custom_call.1} parent=1 // pred_check_branch
      %99 = sbr.rel (0) target = $region41
    $region40: #{tpu_custom_call.1} parent=1 // pred_region
      _
    $region41: #{tpu_custom_call.1} parent=1 // pred_fallthru
      _
    // Predicated region
    $region42: #{tpu_custom_call.1} parent=1 // pred_check
      _
    $region43: #{tpu_custom_call.1} parent=1 // pred_check_branch
      %101 = sbr.rel (0) target = $region45
    $region44: #{tpu_custom_call.1} parent=1 // pred_region
      %102 = dma.done [#allocation4], 64
    $region45: #{tpu_custom_call.1} parent=1 // pred_fallthru
      _
    // Predicated region
    $region46: #{tpu_custom_call.1} parent=1 // pred_check
      _
    $region47: #{tpu_custom_call.1} parent=1 // pred_check_branch
      %104 = sbr.rel (0) target = $region49
    $region48: #{tpu_custom_call.1} parent=1 // pred_region
      %105 = dma.done [#allocation7], 256
    $region49: #{tpu_custom_call.1} parent=1 // pred_fallthru
      _
    // Predicated region
    $region50: #{tpu_custom_call.1} parent=1 // pred_check
      _
    $region51: #{tpu_custom_call.1} parent=1 // pred_check_branch
      %107 = sbr.rel (0) target = $region53
    $region52: #{tpu_custom_call.1} parent=1 // pred_region
      %108 = dma.done [#allocation7], 256
    $region53: #{tpu_custom_call.1} parent=1 // pred_fallthru
      _
    // Predicated region
    $region54: #{tpu_custom_call.1} parent=1 // pred_check
      _
    $region55: #{tpu_custom_call.1} parent=1 // pred_check_branch
      %110 = sbr.rel (0) target = $region57
    $region56: #{tpu_custom_call.1} parent=1 // pred_region
      %111 = dma.done [#allocation10], 256
    $region57: #{tpu_custom_call.1} parent=1 // pred_fallthru
      _
    // Predicated region
    $region58: #{tpu_custom_call.1} parent=1 // pred_check
      _
    $region59: #{tpu_custom_call.1} parent=1 // pred_check_branch
      %113 = sbr.rel (0) target = $region61
    $region60: #{tpu_custom_call.1} parent=1 // pred_region
      %114 = dma.done [#allocation10], 768
    $region61: #{tpu_custom_call.1} parent=1 // pred_fallthru
      _
    // Predicated region
    $region62: #{tpu_custom_call.1} parent=1 // pred_check
      _
    $region63: #{tpu_custom_call.1} parent=1 // pred_check_branch
      %116 = sbr.rel (0) target = $region65
    $region64: #{tpu_custom_call.1} parent=1 // pred_region
      %117 = dma.done [#allocation13], 1536
    $region65: #{tpu_custom_call.1} parent=1 // pred_fallthru
      _
    %v118 = vld [vmem:[#allocation3] sm:$0xf]
    %v119 = vld [vmem:[#allocation6] sm:$0xff]
    %v120 = vld [vmem:[#allocation6 + $0x8] sm:$0xff]
    %vm121 = vcmask 130048
    %v123 = vsel %vm121, %v118, 0
    %125 = vmatprep.subr.mxu0 0.0
    %126 = vmatpush1.msra.mxu0 %v119
    %127 = vmatprep.subr.mxu0 0.0
    %128 = vmatpush1.msra.mxu0 %v120
    %129 = vmatprep.subr.mxu0 0.0
    %130 = vmatpush1.msra.mxu0 0.0
    %131 = vmatprep.subr.mxu0 0.0
    %132 = vmatpush1.msra.mxu0 0.0
    %133 = vmatprep.subr.mxu0 0.0
    %134 = vmatpush1.msra.mxu0 0.0
    %135 = vmatprep.subr.mxu0 0.0
    %136 = vmatpush1.msra.mxu0 0.0
    %137 = vmatprep.subr.mxu0 0.0
    %138 = vmatpush1.msra.mxu0 0.0
    %139 = vmatprep.subr.mxu0 0.0
    %140 = vmatpush1.msra.mxu0 0.0
    %141 = vmatprep.subr.mxu0 0.0
    %142 = vmatpush1.msra.mxu0 0.0
    %143 = vmatprep.subr.mxu0 0.0
    %144 = vmatpush1.msra.mxu0 0.0
    %145 = vmatprep.subr.mxu0 0.0
    %146 = vmatpush1.msra.mxu0 0.0
    %147 = vmatprep.subr.mxu0 0.0
    %148 = vmatpush1.msra.mxu0 0.0
    %149 = vmatprep.subr.mxu0 0.0
    %150 = vmatpush1.msra.mxu0 0.0
    %151 = vmatprep.subr.mxu0 0.0
    %152 = vmatpush1.msra.mxu0 0.0
    %153 = vmatprep.subr.mxu0 0.0
    %154 = vmatpush1.msra.mxu0 0.0
    %155 = vmatprep.subr.mxu0 0.0
    %156 = vmatpush1.msra.mxu0 0.0
    %157 = vmatprep.subr.mxu0 0.0
    %158 = vmatpush1.msra.mxu0 0.0
    %159 = vmatprep.subr.mxu0 0.0
    %160 = vmatpush1.msra.mxu0 0.0
    %161 = vmatprep.subr.mxu0 0.0
    %162 = vmatpush1.msra.mxu0 0.0
    %163 = vmatprep.subr.mxu0 0.0
    %164 = vmatpush1.msra.mxu0 0.0
    %165 = vmatprep.subr.mxu0 0.0
    %166 = vmatpush1.msra.mxu0 0.0
    %167 = vmatprep.subr.mxu0 0.0
    %168 = vmatpush1.msra.mxu0 0.0
    %169 = vmatprep.subr.mxu0 0.0
    %170 = vmatpush1.msra.mxu0 0.0
    %171 = vmatprep.subr.mxu0 0.0
    %172 = vmatpush1.msra.mxu0 0.0
    %173 = vmatprep.subr.mxu0 0.0
    %174 = vmatpush1.msra.mxu0 0.0
    %175 = vmatprep.subr.mxu0 0.0
    %176 = vmatpush1.msra.mxu0 0.0
    %177 = vmatprep.subr.mxu0 0.0
    %178 = vmatpush1.msra.mxu0 0.0
    %179 = vmatprep.subr.mxu0 0.0
    %180 = vmatpush1.msra.mxu0 0.0
    %181 = vmatprep.subr.mxu0 0.0
    %182 = vmatpush1.msra.mxu0 0.0
    %183 = vmatprep.subr.mxu0 0.0
    %184 = vmatpush1.msra.mxu0 0.0
    %185 = vmatprep.subr.mxu0 0.0
    %186 = vmatpush1.msra.mxu0 0.0
    %187 = vmatprep.subr.mxu0 0.0
    %188 = vmatpush1.msra.mxu0 0.0
    %189 = vmatprep.mubr.f32.mxu0 0.0
    %190 = vmatmul.mubr.f32.gmra.mrb[0].mxu0 %v123
    %v191 = vpop.f32.mrb[0].mxu0
    %v192 = vadd.f32 0.0, %v191
    %v193 = vpop.f32.mrb[0].mxu0
    %194 = vdwg.mxu0
    %v195 = vld [vmem:[#allocation9] sm:$0xff]
    %v196 = vld [vmem:[#allocation9 + $0x8] sm:$0xff]
    %v197 = vsel %vm121, %v195, 0.0
    %v198 = vsel %vm121, %v196, 0.0
    %v199 = vadd.f32 %v197, %v198
    %v200 = vrot.slane %v199, 4
    %v201 = vadd.f32 %v199, %v200
    %v202 = vrot.slane %v201, 2
    %v203 = vadd.f32 %v201, %v202
    %v204 = vrot.slane %v203, 1
    %v205 = vadd.f32 %v203, %v204
    %vm206 = vcmp.gt.f32.partialorder %v195, 0.0
    %vm207 = vcmp.gt.f32.partialorder %v196, 0.0
    %v210 = vunpack.c.l.s4 1966171168
    %v211 = vunpack.c.0.s8 %v210
    %v212 = vlaneseq
    %v213 = vshrl.u32 %v212, 7
    %v214 = vsub.s32 %v211, %v213
    %v215 = vrot.slane %v192, %v214
    %v216 = vcombine.high %v215, %v215
    %v218 = vunpack.c.l.s4 1966171168
    %v219 = vunpack.c.0.s8 %v218
    %v220 = vlaneseq
    %v221 = vshrl.u32 %v220, 7
    %v222 = vsub.s32 %v219, %v221
    %v223 = vrot.slane %v215, %v222
    %v225 = vunpack.c.l.s4 1966171168
    %v226 = vunpack.c.0.s8 %v225
    %v227 = vlaneseq
    %v228 = vshrl.u32 %v227, 7
    %v229 = vsub.s32 %v226, %v228
    %v230 = vrot.slane %v216, %v229
    %v231 = vcombine.high %v223, %v223
    %v232 = vcombine.high %v230, %v230
    %v233 = vsel %vm206, 1, 0
    %v234 = vsel %vm207, 1, 0
    %vm235 = vcmp.eq.s32.totalorder %v233, 1
    %vm236 = vcmp.eq.s32.totalorder %v234, 1
    %v237 = vlaneseq
    %v238 = vshrl.u32 %v237, 7
    %v239 = vsub.s32 0, %v238
    %v240 = vrot.slane %v223, %v239
    %v241 = vlaneseq
    %v242 = vshrl.u32 %v241, 7
    %v243 = vsub.s32 0, %v242
    %v244 = vrot.slane %v230, %v243
    %v245 = vlaneseq
    %v246 = vshrl.u32 %v245, 7
    %v247 = vsub.s32 0, %v246
    %v248 = vrot.slane %v231, %v247
    %v249 = vlaneseq
    %v250 = vshrl.u32 %v249, 7
    %v251 = vsub.s32 0, %v250
    %v252 = vrot.slane %v232, %v251
    %v257 = vsel %vm235, %v240, -1e+30
    %v258 = vsel %vm236, %v240, -1e+30
    %v259 = vsel %vm235, %v244, -1e+30
    %v260 = vsel %vm236, %v244, -1e+30
    %v261 = vsel %vm235, %v248, -1e+30
    %v262 = vsel %vm236, %v248, -1e+30
    %v263 = vsel %vm235, %v252, -1e+30
    %v264 = vsel %vm236, %v252, -1e+30
    %v265 = vsel %vm121, %v257, -inf
    %266 = vmax.xlane.f32.xlu0 %v265
    %v267 = vpop.xlane.xlu0 %266
    %v268 = vsel %vm121, %v258, -inf
    %269 = vmax.xlane.f32.xlu0 %v268
    %v270 = vpop.xlane.xlu0 %269
    %v271 = vsel %vm121, %v259, -inf
    %272 = vmax.xlane.f32.xlu0 %v271
    %v273 = vpop.xlane.xlu0 %272
    %v274 = vsel %vm121, %v260, -inf
    %275 = vmax.xlane.f32.xlu0 %v274
    %v276 = vpop.xlane.xlu0 %275
    %v277 = vsel %vm121, %v261, -inf
    %278 = vmax.xlane.f32.xlu0 %v277
    %v279 = vpop.xlane.xlu0 %278
    %v280 = vsel %vm121, %v262, -inf
    %281 = vmax.xlane.f32.xlu0 %v280
    %v282 = vpop.xlane.xlu0 %281
    %v283 = vsel %vm121, %v263, -inf
    %284 = vmax.xlane.f32.xlu0 %v283
    %v285 = vpop.xlane.xlu0 %284
    %v286 = vsel %vm121, %v264, -inf
    %287 = vmax.xlane.f32.xlu0 %v286
    %v288 = vpop.xlane.xlu0 %287
    %v297 = vlaneseq
    %v298 = vand.u32 %v297, 127
    %v299 = vlaneseq
    %v300 = vshrl.u32 %v299, 7
    %v301 = vsub.s32 %v298, %v300
    %v302 = vrot.slane %v267, %v301
    %v303 = vadd.s32 %v298, 4294967288
    %v304 = vlaneseq
    %v305 = vshrl.u32 %v304, 7
    %v306 = vsub.s32 %v303, %v305
    %v307 = vrot.slane %v270, %v306
    %vm308 = vcmask 130112
    %v309 = vsel %vm308, %v307, %v302
    %v310 = vlaneseq
    %v311 = vshrl.u32 %v310, 7
    %v312 = vsub.s32 %v298, %v311
    %v313 = vrot.slane %v273, %v312
    %v314 = vlaneseq
    %v315 = vshrl.u32 %v314, 7
    %v316 = vsub.s32 %v303, %v315
    %v317 = vrot.slane %v276, %v316
    %v318 = vsel %vm308, %v317, %v313
    %v319 = vlaneseq
    %v320 = vshrl.u32 %v319, 7
    %v321 = vsub.s32 %v298, %v320
    %v322 = vrot.slane %v279, %v321
    %v323 = vlaneseq
    %v324 = vshrl.u32 %v323, 7
    %v325 = vsub.s32 %v303, %v324
    %v326 = vrot.slane %v282, %v325
    %v327 = vsel %vm308, %v326, %v322
    %v328 = vlaneseq
    %v329 = vshrl.u32 %v328, 7
    %v330 = vsub.s32 %v298, %v329
    %v331 = vrot.slane %v285, %v330
    %v332 = vlaneseq
    %v333 = vshrl.u32 %v332, 7
    %v334 = vsub.s32 %v303, %v333
    %v335 = vrot.slane %v288, %v334
    %v336 = vsel %vm308, %v335, %v331
    %vm337 = vcmask 1041409
    %v338 = vsel %vm337, %v318, %v309
    %vm339 = vcmask 1042434
    %v340 = vsel %vm339, %v327, %v338
    %vm341 = vcmask 1043459
    %v342 = vsel %vm341, %v336, %v340
    %v343 = vsel %vm121, %v342, 0
    %345 = vmatprep.subr.mxu0 0.0
    %346 = vmatpush1.msra.mxu0 %v195
    %347 = vmatprep.subr.mxu0 0.0
    %348 = vmatpush1.msra.mxu0 %v196
    %349 = vmatprep.subr.mxu0 0.0
    %350 = vmatpush1.msra.mxu0 0.0
    %351 = vmatprep.subr.mxu0 0.0
    %352 = vmatpush1.msra.mxu0 0.0
    %353 = vmatprep.subr.mxu0 0.0
    %354 = vmatpush1.msra.mxu0 0.0
    %355 = vmatprep.subr.mxu0 0.0
    %356 = vmatpush1.msra.mxu0 0.0
    %357 = vmatprep.subr.mxu0 0.0
    %358 = vmatpush1.msra.mxu0 0.0
    %359 = vmatprep.subr.mxu0 0.0
    %360 = vmatpush1.msra.mxu0 0.0
    %361 = vmatprep.subr.mxu0 0.0
    %362 = vmatpush1.msra.mxu0 0.0
    %363 = vmatprep.subr.mxu0 0.0
    %364 = vmatpush1.msra.mxu0 0.0
    %365 = vmatprep.subr.mxu0 0.0
    %366 = vmatpush1.msra.mxu0 0.0
    %367 = vmatprep.subr.mxu0 0.0
    %368 = vmatpush1.msra.mxu0 0.0
    %369 = vmatprep.subr.mxu0 0.0
    %370 = vmatpush1.msra.mxu0 0.0
    %371 = vmatprep.subr.mxu0 0.0
    %372 = vmatpush1.msra.mxu0 0.0
    %373 = vmatprep.subr.mxu0 0.0
    %374 = vmatpush1.msra.mxu0 0.0
    %375 = vmatprep.subr.mxu0 0.0
    %376 = vmatpush1.msra.mxu0 0.0
    %377 = vmatprep.subr.mxu0 0.0
    %378 = vmatpush1.msra.mxu0 0.0
    %379 = vmatprep.subr.mxu0 0.0
    %380 = vmatpush1.msra.mxu0 0.0
    %381 = vmatprep.subr.mxu0 0.0
    %382 = vmatpush1.msra.mxu0 0.0
    %383 = vmatprep.subr.mxu0 0.0
    %384 = vmatpush1.msra.mxu0 0.0
    %385 = vmatprep.subr.mxu0 0.0
    %386 = vmatpush1.msra.mxu0 0.0
    %387 = vmatprep.subr.mxu0 0.0
    %388 = vmatpush1.msra.mxu0 0.0
    %389 = vmatprep.subr.mxu0 0.0
    %390 = vmatpush1.msra.mxu0 0.0
    %391 = vmatprep.subr.mxu0 0.0
    %392 = vmatpush1.msra.mxu0 0.0
    %393 = vmatprep.subr.mxu0 0.0
    %394 = vmatpush1.msra.mxu0 0.0
    %395 = vmatprep.subr.mxu0 0.0
    %396 = vmatpush1.msra.mxu0 0.0
    %397 = vmatprep.subr.mxu0 0.0
    %398 = vmatpush1.msra.mxu0 0.0
    %399 = vmatprep.subr.mxu0 0.0
    %400 = vmatpush1.msra.mxu0 0.0
    %401 = vmatprep.subr.mxu0 0.0
    %402 = vmatpush1.msra.mxu0 0.0
    %403 = vmatprep.subr.mxu0 0.0
    %404 = vmatpush1.msra.mxu0 0.0
    %405 = vmatprep.subr.mxu0 0.0
    %406 = vmatpush1.msra.mxu0 0.0
    %407 = vmatprep.subr.mxu0 0.0
    %408 = vmatpush1.msra.mxu0 0.0
    %409 = vmatprep.mubr.f32.mxu0 0.0
    %410 = vmatmul.mubr.f32.gmra.mrb[0].mxu0 %v343
    %v411 = vpop.f32.mrb[0].mxu0
    %v412 = vadd.f32 0.0, %v411
    %v413 = vpop.f32.mrb[0].mxu0
    %414 = vdwg.mxu0
    %v415 = vsub.f32 %v192, %v412
    %v416 = vmul.f32 %v415, 1.442695
    %v417 = vpow.pop %v416
    %v418 = vmul.f32 %v417, %v205
    %v420 = vsel %vm121, %v418, 0
    %v423 = vsel %vm121, %v195, 0
    %v426 = vsel %vm121, %v196, 0
    %428 = vmatprep.subr.mxu0 0.0
    %429 = vmatpush1.xpose.msra.mxu0 %v423
    %430 = vmatprep.subr.mxu0 0.0
    %431 = vmatpush1.xpose.msra.mxu0 %v426
    %432 = vmatprep.subr.mxu0 0.0
    %433 = vmatpush1.xpose.msra.mxu0 0.0
    %434 = vmatprep.subr.mxu0 0.0
    %435 = vmatpush1.xpose.msra.mxu0 0.0
    %436 = vmatprep.subr.mxu0 0.0
    %437 = vmatpush1.xpose.msra.mxu0 0.0
    %438 = vmatprep.subr.mxu0 0.0
    %439 = vmatpush1.xpose.msra.mxu0 0.0
    %440 = vmatprep.subr.mxu0 0.0
    %441 = vmatpush1.xpose.msra.mxu0 0.0
    %442 = vmatprep.subr.mxu0 0.0
    %443 = vmatpush1.xpose.msra.mxu0 0.0
    %444 = vmatprep.subr.mxu0 0.0
    %445 = vmatpush1.xpose.msra.mxu0 0.0
    %446 = vmatprep.subr.mxu0 0.0
    %447 = vmatpush1.xpose.msra.mxu0 0.0
    %448 = vmatprep.subr.mxu0 0.0
    %449 = vmatpush1.xpose.msra.mxu0 0.0
    %450 = vmatprep.subr.mxu0 0.0
    %451 = vmatpush1.xpose.msra.mxu0 0.0
    %452 = vmatprep.subr.mxu0 0.0
    %453 = vmatpush1.xpose.msra.mxu0 0.0
    %454 = vmatprep.subr.mxu0 0.0
    %455 = vmatpush1.xpose.msra.mxu0 0.0
    %456 = vmatprep.subr.mxu0 0.0
    %457 = vmatpush1.xpose.msra.mxu0 0.0
    %458 = vmatprep.subr.mxu0 0.0
    %459 = vmatpush1.xpose.msra.mxu0 0.0
    %460 = vmatprep.subr.mxu0 0.0
    %461 = vmatpush1.xpose.msra.mxu0 0.0
    %462 = vmatprep.subr.mxu0 0.0
    %463 = vmatpush1.xpose.msra.mxu0 0.0
    %464 = vmatprep.subr.mxu0 0.0
    %465 = vmatpush1.xpose.msra.mxu0 0.0
    %466 = vmatprep.subr.mxu0 0.0
    %467 = vmatpush1.xpose.msra.mxu0 0.0
    %468 = vmatprep.subr.mxu0 0.0
    %469 = vmatpush1.xpose.msra.mxu0 0.0
    %470 = vmatprep.subr.mxu0 0.0
    %471 = vmatpush1.xpose.msra.mxu0 0.0
    %472 = vmatprep.subr.mxu0 0.0
    %473 = vmatpush1.xpose.msra.mxu0 0.0
    %474 = vmatprep.subr.mxu0 0.0
    %475 = vmatpush1.xpose.msra.mxu0 0.0
    %476 = vmatprep.subr.mxu0 0.0
    %477 = vmatpush1.xpose.msra.mxu0 0.0
    %478 = vmatprep.subr.mxu0 0.0
    %479 = vmatpush1.xpose.msra.mxu0 0.0
    %480 = vmatprep.subr.mxu0 0.0
    %481 = vmatpush1.xpose.msra.mxu0 0.0
    %482 = vmatprep.subr.mxu0 0.0
    %483 = vmatpush1.xpose.msra.mxu0 0.0
    %484 = vmatprep.subr.mxu0 0.0
    %485 = vmatpush1.xpose.msra.mxu0 0.0
    %486 = vmatprep.subr.mxu0 0.0
    %487 = vmatpush1.xpose.msra.mxu0 0.0
    %488 = vmatprep.subr.mxu0 0.0
    %489 = vmatpush1.xpose.msra.mxu0 0.0
    %490 = vmatprep.subr.mxu0 0.0
    %491 = vmatpush1.xpose.msra.mxu0 0.0
    %492 = vmatprep.mubr.f32.mxu0 0.0
    %493 = vmatmul.mubr.f32.gmra.mrb[0].mxu0 %v420
    %v494 = vpop.f32.mrb[0].mxu0
    %v495 = vadd.f32 0.0, %v494
    %v496 = vpop.f32.mrb[0].mxu0
    %497 = vdwg.mxu0
    %v499 = vsel %vm121, %v495, 0
    %501 = vmatprep.subr.mxu0 0.0
    %502 = vmatpush1.msra.mxu0 %v195
    %503 = vmatprep.subr.mxu0 0.0
    %504 = vmatpush1.msra.mxu0 %v196
    %505 = vmatprep.subr.mxu0 0.0
    %506 = vmatpush1.msra.mxu0 0.0
    %507 = vmatprep.subr.mxu0 0.0
    %508 = vmatpush1.msra.mxu0 0.0
    %509 = vmatprep.subr.mxu0 0.0
    %510 = vmatpush1.msra.mxu0 0.0
    %511 = vmatprep.subr.mxu0 0.0
    %512 = vmatpush1.msra.mxu0 0.0
    %513 = vmatprep.subr.mxu0 0.0
    %514 = vmatpush1.msra.mxu0 0.0
    %515 = vmatprep.subr.mxu0 0.0
    %516 = vmatpush1.msra.mxu0 0.0
    %517 = vmatprep.subr.mxu0 0.0
    %518 = vmatpush1.msra.mxu0 0.0
    %519 = vmatprep.subr.mxu0 0.0
    %520 = vmatpush1.msra.mxu0 0.0
    %521 = vmatprep.subr.mxu0 0.0
    %522 = vmatpush1.msra.mxu0 0.0
    %523 = vmatprep.subr.mxu0 0.0
    %524 = vmatpush1.msra.mxu0 0.0
    %525 = vmatprep.subr.mxu0 0.0
    %526 = vmatpush1.msra.mxu0 0.0
    %527 = vmatprep.subr.mxu0 0.0
    %528 = vmatpush1.msra.mxu0 0.0
    %529 = vmatprep.subr.mxu0 0.0
    %530 = vmatpush1.msra.mxu0 0.0
    %531 = vmatprep.subr.mxu0 0.0
    %532 = vmatpush1.msra.mxu0 0.0
    %533 = vmatprep.subr.mxu0 0.0
    %534 = vmatpush1.msra.mxu0 0.0
    %535 = vmatprep.subr.mxu0 0.0
    %536 = vmatpush1.msra.mxu0 0.0
    %537 = vmatprep.subr.mxu0 0.0
    %538 = vmatpush1.msra.mxu0 0.0
    %539 = vmatprep.subr.mxu0 0.0
    %540 = vmatpush1.msra.mxu0 0.0
    %541 = vmatprep.subr.mxu0 0.0
    %542 = vmatpush1.msra.mxu0 0.0
    %543 = vmatprep.subr.mxu0 0.0
    %544 = vmatpush1.msra.mxu0 0.0
    %545 = vmatprep.subr.mxu0 0.0
    %546 = vmatpush1.msra.mxu0 0.0
    %547 = vmatprep.subr.mxu0 0.0
    %548 = vmatpush1.msra.mxu0 0.0
    %549 = vmatprep.subr.mxu0 0.0
    %550 = vmatpush1.msra.mxu0 0.0
    %551 = vmatprep.subr.mxu0 0.0
    %552 = vmatpush1.msra.mxu0 0.0
    %553 = vmatprep.subr.mxu0 0.0
    %554 = vmatpush1.msra.mxu0 0.0
    %555 = vmatprep.subr.mxu0 0.0
    %556 = vmatpush1.msra.mxu0 0.0
    %557 = vmatprep.subr.mxu0 0.0
    %558 = vmatpush1.msra.mxu0 0.0
    %559 = vmatprep.subr.mxu0 0.0
    %560 = vmatpush1.msra.mxu0 0.0
    %561 = vmatprep.subr.mxu0 0.0
    %562 = vmatpush1.msra.mxu0 0.0
    %563 = vmatprep.subr.mxu0 0.0
    %564 = vmatpush1.msra.mxu0 0.0
    %565 = vmatprep.mubr.f32.mxu0 0.0
    %566 = vmatmul.mubr.f32.gmra.mrb[0].mxu0 %v499
    %v567 = vpop.f32.mrb[0].mxu0
    %v568 = vadd.f32 0.0, %v567
    %v569 = vpop.f32.mrb[0].mxu0
    %570 = vdwg.mxu0
    %vm571 = vcmp.eq.f32.partialorder %v568, 0.0
    %v572 = vsel %vm571, 1.0, %v568
    %v573 = vrcp.pop %v572
    %v574 = vmul.f32 %v418, %v573
    %v575 = vld [vmem:[#allocation8] sm:$0xff]
    %v576 = vld [vmem:[#allocation8 + $0x8] sm:$0xff]
    %v577 = vld [vmem:[#allocation11] sm:$0xff]
    %v578 = vld [vmem:[#allocation11 + $0x8] sm:$0xff]
    %s579 = scalar_lea.vmem [#allocation11], 16
    %v580 = vld [vmem:[%s579] sm:$0xff]
    %v581 = vld [vmem:[%s579 + $0x8] sm:$0xff]
    %s582 = scalar_lea.vmem [#allocation11], 32
    %v583 = vld [vmem:[%s582] sm:$0xff]
    %v584 = vld [vmem:[%s582 + $0x8] sm:$0xff]
    %v585 = vld [vmem:[#allocation12] sm:$0xff]
    %v586 = vld [vmem:[#allocation12 + $0x8] sm:$0xff]
    %v587 = vld [vmem:[#allocation12 + $0x10] sm:$0xff]
    %v588 = vld [vmem:[#allocation12 + $0x18] sm:$0xff]
    %s589 = scalar_lea.vmem [#allocation12], 32
    %v590 = vld [vmem:[%s589] sm:$0xff]
    %v591 = vld [vmem:[%s589 + $0x8] sm:$0xff]
    %v592 = vld [vmem:[%s589 + $0x10] sm:$0xff]
    %v593 = vld [vmem:[%s589 + $0x18] sm:$0xff]
    %s594 = scalar_lea.vmem [#allocation12], 64
    %v595 = vld [vmem:[%s594] sm:$0xff]
    %v596 = vld [vmem:[%s594 + $0x8] sm:$0xff]
    %v597 = vld [vmem:[%s594 + $0x10] sm:$0xff]
    %v598 = vld [vmem:[%s594 + $0x18] sm:$0xff]
    %v599 = vld [vmem:[%s6] sm:$0x1]
    %s600 = scalar_lea.vmem %s6, 1
    %v601 = vld [vmem:[%s600] sm:$0x1]
    %s602 = scalar_lea.vmem %s6, 2
    %v603 = vld [vmem:[%s602] sm:$0x1]
    %v604 = vld [vmem:[%s7] sm:$0x1]
    %s605 = scalar_lea.vmem %s7, 1
    %v606 = vld [vmem:[%s605] sm:$0x1]
    %s607 = scalar_lea.vmem %s7, 2
    %v608 = vld [vmem:[%s607] sm:$0x1]
    %v609 = vld [vmem:[%s8] sm:$0x1]
    %v610 = vld [vmem:[#allocation2] sm:$0x1]
    %v611 = vlaneseq
    %v612 = vshrl.u32 %v611, 7
    %v613 = vsub.s32 0, %v612
    %v614 = vrot.slane %v574, %v613
    %v615 = vmul.f32 %v195, %v614
    %v616 = vmul.f32 %v196, %v614
    %v618 = vsel %vm121, %v615, 0
    %v621 = vsel %vm121, %v616, 0
    %623 = vmatprep.subr.mxu0 0.0
    %624 = vmatpush1.msra.mxu0 %v575
    %625 = vmatprep.subr.mxu0 0.0
    %626 = vmatpush1.msra.mxu0 %v576
    %627 = vmatprep.subr.mxu0 0.0
    %628 = vmatpush1.msra.mxu0 0.0
    %629 = vmatprep.subr.mxu0 0.0
    %630 = vmatpush1.msra.mxu0 0.0
    %631 = vmatprep.subr.mxu0 0.0
    %632 = vmatpush1.msra.mxu0 0.0
    %633 = vmatprep.subr.mxu0 0.0
    %634 = vmatpush1.msra.mxu0 0.0
    %635 = vmatprep.subr.mxu0 0.0
    %636 = vmatpush1.msra.mxu0 0.0
    %637 = vmatprep.subr.mxu0 0.0
    %638 = vmatpush1.msra.mxu0 0.0
    %639 = vmatprep.subr.mxu0 0.0
    %640 = vmatpush1.msra.mxu0 0.0
    %641 = vmatprep.subr.mxu0 0.0
    %642 = vmatpush1.msra.mxu0 0.0
    %643 = vmatprep.subr.mxu0 0.0
    %644 = vmatpush1.msra.mxu0 0.0
    %645 = vmatprep.subr.mxu0 0.0
    %646 = vmatpush1.msra.mxu0 0.0
    %647 = vmatprep.subr.mxu0 0.0
    %648 = vmatpush1.msra.mxu0 0.0
    %649 = vmatprep.subr.mxu0 0.0
    %650 = vmatpush1.msra.mxu0 0.0
    %651 = vmatprep.subr.mxu0 0.0
    %652 = vmatpush1.msra.mxu0 0.0
    %653 = vmatprep.subr.mxu0 0.0
    %654 = vmatpush1.msra.mxu0 0.0
    %655 = vmatprep.subr.mxu0 0.0
    %656 = vmatpush1.msra.mxu0 0.0
    %657 = vmatprep.subr.mxu0 0.0
    %658 = vmatpush1.msra.mxu0 0.0
    %659 = vmatprep.subr.mxu0 0.0
    %660 = vmatpush1.msra.mxu0 0.0
    %661 = vmatprep.subr.mxu0 0.0
    %662 = vmatpush1.msra.mxu0 0.0
    %663 = vmatprep.subr.mxu0 0.0
    %664 = vmatpush1.msra.mxu0 0.0
    %665 = vmatprep.subr.mxu0 0.0
    %666 = vmatpush1.msra.mxu0 0.0
    %667 = vmatprep.subr.mxu0 0.0
    %668 = vmatpush1.msra.mxu0 0.0
    %669 = vmatprep.subr.mxu0 0.0
    %670 = vmatpush1.msra.mxu0 0.0
    %671 = vmatprep.subr.mxu0 0.0
    %672 = vmatpush1.msra.mxu0 0.0
    %673 = vmatprep.subr.mxu0 0.0
    %674 = vmatpush1.msra.mxu0 0.0
    %675 = vmatprep.subr.mxu0 0.0
    %676 = vmatpush1.msra.mxu0 0.0
    %677 = vmatprep.subr.mxu0 0.0
    %678 = vmatpush1.msra.mxu0 0.0
    %679 = vmatprep.subr.mxu0 0.0
    %680 = vmatpush1.msra.mxu0 0.0
    %681 = vmatprep.subr.mxu0 0.0
    %682 = vmatpush1.msra.mxu0 0.0
    %683 = vmatprep.subr.mxu0 0.0
    %684 = vmatpush1.msra.mxu0 0.0
    %685 = vmatprep.subr.mxu0 0.0
    %686 = vmatpush1.msra.mxu0 0.0
    %687 = vmatprep.mubr.f32.mxu0 0.0
    %688 = vmatmul.mubr.f32.gmra.mrb[0].mxu0 %v618
    %v689 = vpop.f32.mrb[0].mxu0
    %v690 = vadd.f32 0.0, %v689
    %v691 = vpop.f32.mrb[0].mxu0
    %692 = vmatprep.mubr.f32.mxu0 0.0
    %693 = vmatmul.mubr.f32.gmra.mrb[0].mxu0 %v621
    %v694 = vpop.f32.mrb[0].mxu0
    %v695 = vadd.f32 0.0, %v694
    %v696 = vpop.f32.mrb[0].mxu0
    %697 = vdwg.mxu0
    %v699 = vlaneseq
    %v700 = vshrl.u32 %v699, 7
    %v701 = vsub.s32 0, %v700
    %v702 = vrot.slane %v599, %v701
    %v705 = vsel %vm121, %v690, 0
    %v708 = vsel %vm121, %v695, 0
    %710 = vmatprep.subr.mxu0 0.0
    %711 = vmatpush1.msra.mxu0 %v577
    %712 = vmatprep.subr.mxu0 0.0
    %713 = vmatpush1.msra.mxu0 %v578
    %714 = vmatprep.subr.mxu0 0.0
    %715 = vmatpush1.msra.mxu0 0.0
    %716 = vmatprep.subr.mxu0 0.0
    %717 = vmatpush1.msra.mxu0 0.0
    %718 = vmatprep.subr.mxu0 0.0
    %719 = vmatpush1.msra.mxu0 0.0
    %720 = vmatprep.subr.mxu0 0.0
    %721 = vmatpush1.msra.mxu0 0.0
    %722 = vmatprep.subr.mxu0 0.0
    %723 = vmatpush1.msra.mxu0 0.0
    %724 = vmatprep.subr.mxu0 0.0
    %725 = vmatpush1.msra.mxu0 0.0
    %726 = vmatprep.subr.mxu0 0.0
    %727 = vmatpush1.msra.mxu0 0.0
    %728 = vmatprep.subr.mxu0 0.0
    %729 = vmatpush1.msra.mxu0 0.0
    %730 = vmatprep.subr.mxu0 0.0
    %731 = vmatpush1.msra.mxu0 0.0
    %732 = vmatprep.subr.mxu0 0.0
    %733 = vmatpush1.msra.mxu0 0.0
    %734 = vmatprep.subr.mxu0 0.0
    %735 = vmatpush1.msra.mxu0 0.0
    %736 = vmatprep.subr.mxu0 0.0
    %737 = vmatpush1.msra.mxu0 0.0
    %738 = vmatprep.subr.mxu0 0.0
    %739 = vmatpush1.msra.mxu0 0.0
    %740 = vmatprep.subr.mxu0 0.0
    %741 = vmatpush1.msra.mxu0 0.0
    %742 = vmatprep.subr.mxu0 0.0
    %743 = vmatpush1.msra.mxu0 0.0
    %744 = vmatprep.subr.mxu0 0.0
    %745 = vmatpush1.msra.mxu0 0.0
    %746 = vmatprep.subr.mxu0 0.0
    %747 = vmatpush1.msra.mxu0 0.0
    %748 = vmatprep.subr.mxu0 0.0
    %749 = vmatpush1.msra.mxu0 0.0
    %750 = vmatprep.subr.mxu0 0.0
    %751 = vmatpush1.msra.mxu0 0.0
    %752 = vmatprep.subr.mxu0 0.0
    %753 = vmatpush1.msra.mxu0 0.0
    %754 = vmatprep.subr.mxu0 0.0
    %755 = vmatpush1.msra.mxu0 0.0
    %756 = vmatprep.subr.mxu0 0.0
    %757 = vmatpush1.msra.mxu0 0.0
    %758 = vmatprep.subr.mxu0 0.0
    %759 = vmatpush1.msra.mxu0 0.0
    %760 = vmatprep.subr.mxu0 0.0
    %761 = vmatpush1.msra.mxu0 0.0
    %762 = vmatprep.subr.mxu0 0.0
    %763 = vmatpush1.msra.mxu0 0.0
    %764 = vmatprep.subr.mxu0 0.0
    %765 = vmatpush1.msra.mxu0 0.0
    %766 = vmatprep.subr.mxu0 0.0
    %767 = vmatpush1.msra.mxu0 0.0
    %768 = vmatprep.subr.mxu0 0.0
    %769 = vmatpush1.msra.mxu0 0.0
    %770 = vmatprep.subr.mxu0 0.0
    %771 = vmatpush1.msra.mxu0 0.0
    %772 = vmatprep.subr.mxu0 0.0
    %773 = vmatpush1.msra.mxu0 0.0
    %774 = vmatprep.mubr.f32.mxu0 0.0
    %775 = vmatmul.mubr.f32.gmra.mrb[0].mxu0 %v705
    %v776 = vpop.f32.mrb[0].mxu0
    %v777 = vadd.f32 %v702, %v776
    %v778 = vpop.f32.mrb[0].mxu0
    %779 = vmatprep.mubr.f32.mxu0 0.0
    %780 = vmatmul.mubr.f32.gmra.mrb[0].mxu0 %v708
    %v781 = vpop.f32.mrb[0].mxu0
    %v782 = vadd.f32 %v702, %v781
    %v783 = vpop.f32.mrb[0].mxu0
    %784 = vdwg.mxu0
    %vm785 = vcmask 261120
    %v787 = vsel %vm785, 0.0, 0
    %789 = vmatprep.subr.mxu0 0.0
    %790 = vmatpush1.msra.mxu0 %v585
    %791 = vmatprep.subr.mxu0 0.0
    %792 = vmatpush1.msra.mxu0 %v586
    %793 = vmatprep.subr.mxu0 0.0
    %794 = vmatpush1.msra.mxu0 %v587
    %795 = vmatprep.subr.mxu0 0.0
    %796 = vmatpush1.msra.mxu0 %v588
    %797 = vmatprep.subr.mxu0 0.0
    %798 = vmatpush1.msra.mxu0 0.0
    %799 = vmatprep.subr.mxu0 0.0
    %800 = vmatpush1.msra.mxu0 0.0
    %801 = vmatprep.subr.mxu0 0.0
    %802 = vmatpush1.msra.mxu0 0.0
    %803 = vmatprep.subr.mxu0 0.0
    %804 = vmatpush1.msra.mxu0 0.0
    %805 = vmatprep.subr.mxu0 0.0
    %806 = vmatpush1.msra.mxu0 0.0
    %807 = vmatprep.subr.mxu0 0.0
    %808 = vmatpush1.msra.mxu0 0.0
    %809 = vmatprep.subr.mxu0 0.0
    %810 = vmatpush1.msra.mxu0 0.0
    %811 = vmatprep.subr.mxu0 0.0
    %812 = vmatpush1.msra.mxu0 0.0
    %813 = vmatprep.subr.mxu0 0.0
    %814 = vmatpush1.msra.mxu0 0.0
    %815 = vmatprep.subr.mxu0 0.0
    %816 = vmatpush1.msra.mxu0 0.0
    %817 = vmatprep.subr.mxu0 0.0
    %818 = vmatpush1.msra.mxu0 0.0
    %819 = vmatprep.subr.mxu0 0.0
    %820 = vmatpush1.msra.mxu0 0.0
    %821 = vmatprep.subr.mxu0 0.0
    %822 = vmatpush1.msra.mxu0 0.0
    %823 = vmatprep.subr.mxu0 0.0
    %824 = vmatpush1.msra.mxu0 0.0
    %825 = vmatprep.subr.mxu0 0.0
    %826 = vmatpush1.msra.mxu0 0.0
    %827 = vmatprep.subr.mxu0 0.0
    %828 = vmatpush1.msra.mxu0 0.0
    %829 = vmatprep.subr.mxu0 0.0
    %830 = vmatpush1.msra.mxu0 0.0
    %831 = vmatprep.subr.mxu0 0.0
    %832 = vmatpush1.msra.mxu0 0.0
    %833 = vmatprep.subr.mxu0 0.0
    %834 = vmatpush1.msra.mxu0 0.0
    %835 = vmatprep.subr.mxu0 0.0
    %836 = vmatpush1.msra.mxu0 0.0
    %837 = vmatprep.subr.mxu0 0.0
    %838 = vmatpush1.msra.mxu0 0.0
    %839 = vmatprep.subr.mxu0 0.0
    %840 = vmatpush1.msra.mxu0 0.0
    %841 = vmatprep.subr.mxu0 0.0
    %842 = vmatpush1.msra.mxu0 0.0
    %843 = vmatprep.subr.mxu0 0.0
    %844 = vmatpush1.msra.mxu0 0.0
    %845 = vmatprep.subr.mxu0 0.0
    %846 = vmatpush1.msra.mxu0 0.0
    %847 = vmatprep.subr.mxu0 0.0
    %848 = vmatpush1.msra.mxu0 0.0
    %849 = vmatprep.subr.mxu0 0.0
    %850 = vmatpush1.msra.mxu0 0.0
    %851 = vmatprep.subr.mxu0 0.0
    %852 = vmatpush1.msra.mxu0 0.0
    %853 = vmatprep.mubr.f32.mxu0 0.0
    %854 = vmatmul.mubr.f32.gmra.mrb[0].mxu0 %v787
    %v855 = vpop.f32.mrb[0].mxu0
    %v856 = vadd.f32 0.0, %v855
    %v857 = vpop.f32.mrb[0].mxu0
    %858 = vmatprep.mubr.f32.mxu0 0.0
    %859 = vmatmul.mubr.f32.gmra.mrb[0].mxu0 %v787
    %v860 = vpop.f32.mrb[0].mxu0
    %v861 = vadd.f32 0.0, %v860
    %v862 = vpop.f32.mrb[0].mxu0
    %863 = vdwg.mxu0
    %v864 = vadd.f32 %v777, %v856
    %v865 = vadd.f32 %v782, %v861
    %v867 = vlaneseq
    %v868 = vshrl.u32 %v867, 7
    %v869 = vsub.s32 0, %v868
    %v870 = vrot.slane %v604, %v869
    %v872 = vadd.f32 %v864, %v870
    %v873 = vadd.f32 %v865, %v870
    %v874 = vmul.f32 %v872, 0.5
    %v875 = vmul.f32 %v873, 0.5
    %v876 = vtanh.pop %v874
    %v877 = vtanh.pop %v875
    %v878 = vadd.f32 %v876, 1.0
    %v879 = vadd.f32 %v877, 1.0
    %v880 = vmul.f32 %v878, 0.5
    %v881 = vmul.f32 %v879, 0.5
    %v883 = vlaneseq
    %v884 = vshrl.u32 %v883, 7
    %v885 = vsub.s32 0, %v884
    %v886 = vrot.slane %v601, %v885
    %888 = vmatprep.subr.mxu0 0.0
    %889 = vmatpush1.msra.mxu0 %v580
    %890 = vmatprep.subr.mxu0 0.0
    %891 = vmatpush1.msra.mxu0 %v581
    %892 = vmatprep.subr.mxu0 0.0
    %893 = vmatpush1.msra.mxu0 0.0
    %894 = vmatprep.subr.mxu0 0.0
    %895 = vmatpush1.msra.mxu0 0.0
    %896 = vmatprep.subr.mxu0 0.0
    %897 = vmatpush1.msra.mxu0 0.0
    %898 = vmatprep.subr.mxu0 0.0
    %899 = vmatpush1.msra.mxu0 0.0
    %900 = vmatprep.subr.mxu0 0.0
    %901 = vmatpush1.msra.mxu0 0.0
    %902 = vmatprep.subr.mxu0 0.0
    %903 = vmatpush1.msra.mxu0 0.0
    %904 = vmatprep.subr.mxu0 0.0
    %905 = vmatpush1.msra.mxu0 0.0
    %906 = vmatprep.subr.mxu0 0.0
    %907 = vmatpush1.msra.mxu0 0.0
    %908 = vmatprep.subr.mxu0 0.0
    %909 = vmatpush1.msra.mxu0 0.0
    %910 = vmatprep.subr.mxu0 0.0
    %911 = vmatpush1.msra.mxu0 0.0
    %912 = vmatprep.subr.mxu0 0.0
    %913 = vmatpush1.msra.mxu0 0.0
    %914 = vmatprep.subr.mxu0 0.0
    %915 = vmatpush1.msra.mxu0 0.0
    %916 = vmatprep.subr.mxu0 0.0
    %917 = vmatpush1.msra.mxu0 0.0
    %918 = vmatprep.subr.mxu0 0.0
    %919 = vmatpush1.msra.mxu0 0.0
    %920 = vmatprep.subr.mxu0 0.0
    %921 = vmatpush1.msra.mxu0 0.0
    %922 = vmatprep.subr.mxu0 0.0
    %923 = vmatpush1.msra.mxu0 0.0
    %924 = vmatprep.subr.mxu0 0.0
    %925 = vmatpush1.msra.mxu0 0.0
    %926 = vmatprep.subr.mxu0 0.0
    %927 = vmatpush1.msra.mxu0 0.0
    %928 = vmatprep.subr.mxu0 0.0
    %929 = vmatpush1.msra.mxu0 0.0
    %930 = vmatprep.subr.mxu0 0.0
    %931 = vmatpush1.msra.mxu0 0.0
    %932 = vmatprep.subr.mxu0 0.0
    %933 = vmatpush1.msra.mxu0 0.0
    %934 = vmatprep.subr.mxu0 0.0
    %935 = vmatpush1.msra.mxu0 0.0
    %936 = vmatprep.subr.mxu0 0.0
    %937 = vmatpush1.msra.mxu0 0.0
    %938 = vmatprep.subr.mxu0 0.0
    %939 = vmatpush1.msra.mxu0 0.0
    %940 = vmatprep.subr.mxu0 0.0
    %941 = vmatpush1.msra.mxu0 0.0
    %942 = vmatprep.subr.mxu0 0.0
    %943 = vmatpush1.msra.mxu0 0.0
    %944 = vmatprep.subr.mxu0 0.0
    %945 = vmatpush1.msra.mxu0 0.0
    %946 = vmatprep.subr.mxu0 0.0
    %947 = vmatpush1.msra.mxu0 0.0
    %948 = vmatprep.subr.mxu0 0.0
    %949 = vmatpush1.msra.mxu0 0.0
    %950 = vmatprep.subr.mxu0 0.0
    %951 = vmatpush1.msra.mxu0 0.0
    %952 = vmatprep.mubr.f32.mxu0 0.0
    %953 = vmatmul.mubr.f32.gmra.mrb[0].mxu0 %v705
    %v954 = vpop.f32.mrb[0].mxu0
    %v955 = vadd.f32 %v886, %v954
    %v956 = vpop.f32.mrb[0].mxu0
    %957 = vmatprep.mubr.f32.mxu0 0.0
    %958 = vmatmul.mubr.f32.gmra.mrb[0].mxu0 %v708
    %v959 = vpop.f32.mrb[0].mxu0
    %v960 = vadd.f32 %v886, %v959
    %v961 = vpop.f32.mrb[0].mxu0
    %962 = vdwg.mxu0
    %963 = vmatprep.subr.mxu0 0.0
    %964 = vmatpush1.msra.mxu0 %v590
    %965 = vmatprep.subr.mxu0 0.0
    %966 = vmatpush1.msra.mxu0 %v591
    %967 = vmatprep.subr.mxu0 0.0
    %968 = vmatpush1.msra.mxu0 %v592
    %969 = vmatprep.subr.mxu0 0.0
    %970 = vmatpush1.msra.mxu0 %v593
    %971 = vmatprep.subr.mxu0 0.0
    %972 = vmatpush1.msra.mxu0 0.0
    %973 = vmatprep.subr.mxu0 0.0
    %974 = vmatpush1.msra.mxu0 0.0
    %975 = vmatprep.subr.mxu0 0.0
    %976 = vmatpush1.msra.mxu0 0.0
    %977 = vmatprep.subr.mxu0 0.0
    %978 = vmatpush1.msra.mxu0 0.0
    %979 = vmatprep.subr.mxu0 0.0
    %980 = vmatpush1.msra.mxu0 0.0
    %981 = vmatprep.subr.mxu0 0.0
    %982 = vmatpush1.msra.mxu0 0.0
    %983 = vmatprep.subr.mxu0 0.0
    %984 = vmatpush1.msra.mxu0 0.0
    %985 = vmatprep.subr.mxu0 0.0
    %986 = vmatpush1.msra.mxu0 0.0
    %987 = vmatprep.subr.mxu0 0.0
    %988 = vmatpush1.msra.mxu0 0.0
    %989 = vmatprep.subr.mxu0 0.0
    %990 = vmatpush1.msra.mxu0 0.0
    %991 = vmatprep.subr.mxu0 0.0
    %992 = vmatpush1.msra.mxu0 0.0
    %993 = vmatprep.subr.mxu0 0.0
    %994 = vmatpush1.msra.mxu0 0.0
    %995 = vmatprep.subr.mxu0 0.0
    %996 = vmatpush1.msra.mxu0 0.0
    %997 = vmatprep.subr.mxu0 0.0
    %998 = vmatpush1.msra.mxu0 0.0
    %999 = vmatprep.subr.mxu0 0.0
    %1000 = vmatpush1.msra.mxu0 0.0
    %1001 = vmatprep.subr.mxu0 0.0
    %1002 = vmatpush1.msra.mxu0 0.0
    %1003 = vmatprep.subr.mxu0 0.0
    %1004 = vmatpush1.msra.mxu0 0.0
    %1005 = vmatprep.subr.mxu0 0.0
    %1006 = vmatpush1.msra.mxu0 0.0
    %1007 = vmatprep.subr.mxu0 0.0
    %1008 = vmatpush1.msra.mxu0 0.0
    %1009 = vmatprep.subr.mxu0 0.0
    %1010 = vmatpush1.msra.mxu0 0.0
    %1011 = vmatprep.subr.mxu0 0.0
    %1012 = vmatpush1.msra.mxu0 0.0
    %1013 = vmatprep.subr.mxu0 0.0
    %1014 = vmatpush1.msra.mxu0 0.0
    %1015 = vmatprep.subr.mxu0 0.0
    %1016 = vmatpush1.msra.mxu0 0.0
    %1017 = vmatprep.subr.mxu0 0.0
    %1018 = vmatpush1.msra.mxu0 0.0
    %1019 = vmatprep.subr.mxu0 0.0
    %1020 = vmatpush1.msra.mxu0 0.0
    %1021 = vmatprep.subr.mxu0 0.0
    %1022 = vmatpush1.msra.mxu0 0.0
    %1023 = vmatprep.subr.mxu0 0.0
    %1024 = vmatpush1.msra.mxu0 0.0
    %1025 = vmatprep.subr.mxu0 0.0
    %1026 = vmatpush1.msra.mxu0 0.0
    %1027 = vmatprep.mubr.f32.mxu0 0.0
    %1028 = vmatmul.mubr.f32.gmra.mrb[0].mxu0 %v787
    %v1029 = vpop.f32.mrb[0].mxu0
    %v1030 = vadd.f32 0.0, %v1029
    %v1031 = vpop.f32.mrb[0].mxu0
    %1032 = vmatprep.mubr.f32.mxu0 0.0
    %1033 = vmatmul.mubr.f32.gmra.mrb[0].mxu0 %v787
    %v1034 = vpop.f32.mrb[0].mxu0
    %v1035 = vadd.f32 0.0, %v1034
    %v1036 = vpop.f32.mrb[0].mxu0
    %1037 = vdwg.mxu0
    %v1038 = vadd.f32 %v955, %v1030
    %v1039 = vadd.f32 %v960, %v1035
    %v1041 = vlaneseq
    %v1042 = vshrl.u32 %v1041, 7
    %v1043 = vsub.s32 0, %v1042
    %v1044 = vrot.slane %v606, %v1043
    %v1046 = vadd.f32 %v1038, %v1044
    %v1047 = vadd.f32 %v1039, %v1044
    %v1048 = vmul.f32 %v1046, 0.5
    %v1049 = vmul.f32 %v1047, 0.5
    %v1050 = vtanh.pop %v1048
    %v1051 = vtanh.pop %v1049
    %v1052 = vadd.f32 %v1050, 1.0
    %v1053 = vadd.f32 %v1051, 1.0
    %v1054 = vmul.f32 %v1052, 0.5
    %v1055 = vmul.f32 %v1053, 0.5
    %v1057 = vlaneseq
    %v1058 = vshrl.u32 %v1057, 7
    %v1059 = vsub.s32 0, %v1058
    %v1060 = vrot.slane %v603, %v1059
    %1062 = vmatprep.subr.mxu0 0.0
    %1063 = vmatpush1.msra.mxu0 %v583
    %1064 = vmatprep.subr.mxu0 0.0
    %1065 = vmatpush1.msra.mxu0 %v584
    %1066 = vmatprep.subr.mxu0 0.0
    %1067 = vmatpush1.msra.mxu0 0.0
    %1068 = vmatprep.subr.mxu0 0.0
    %1069 = vmatpush1.msra.mxu0 0.0
    %1070 = vmatprep.subr.mxu0 0.0
    %1071 = vmatpush1.msra.mxu0 0.0
    %1072 = vmatprep.subr.mxu0 0.0
    %1073 = vmatpush1.msra.mxu0 0.0
    %1074 = vmatprep.subr.mxu0 0.0
    %1075 = vmatpush1.msra.mxu0 0.0
    %1076 = vmatprep.subr.mxu0 0.0
    %1077 = vmatpush1.msra.mxu0 0.0
    %1078 = vmatprep.subr.mxu0 0.0
    %1079 = vmatpush1.msra.mxu0 0.0
    %1080 = vmatprep.subr.mxu0 0.0
    %1081 = vmatpush1.msra.mxu0 0.0
    %1082 = vmatprep.subr.mxu0 0.0
    %1083 = vmatpush1.msra.mxu0 0.0
    %1084 = vmatprep.subr.mxu0 0.0
    %1085 = vmatpush1.msra.mxu0 0.0
    %1086 = vmatprep.subr.mxu0 0.0
    %1087 = vmatpush1.msra.mxu0 0.0
    %1088 = vmatprep.subr.mxu0 0.0
    %1089 = vmatpush1.msra.mxu0 0.0
    %1090 = vmatprep.subr.mxu0 0.0
    %1091 = vmatpush1.msra.mxu0 0.0
    %1092 = vmatprep.subr.mxu0 0.0
    %1093 = vmatpush1.msra.mxu0 0.0
    %1094 = vmatprep.subr.mxu0 0.0
    %1095 = vmatpush1.msra.mxu0 0.0
    %1096 = vmatprep.subr.mxu0 0.0
    %1097 = vmatpush1.msra.mxu0 0.0
    %1098 = vmatprep.subr.mxu0 0.0
    %1099 = vmatpush1.msra.mxu0 0.0
    %1100 = vmatprep.subr.mxu0 0.0
    %1101 = vmatpush1.msra.mxu0 0.0
    %1102 = vmatprep.subr.mxu0 0.0
    %1103 = vmatpush1.msra.mxu0 0.0
    %1104 = vmatprep.subr.mxu0 0.0
    %1105 = vmatpush1.msra.mxu0 0.0
    %1106 = vmatprep.subr.mxu0 0.0
    %1107 = vmatpush1.msra.mxu0 0.0
    %1108 = vmatprep.subr.mxu0 0.0
    %1109 = vmatpush1.msra.mxu0 0.0
    %1110 = vmatprep.subr.mxu0 0.0
    %1111 = vmatpush1.msra.mxu0 0.0
    %1112 = vmatprep.subr.mxu0 0.0
    %1113 = vmatpush1.msra.mxu0 0.0
    %1114 = vmatprep.subr.mxu0 0.0
    %1115 = vmatpush1.msra.mxu0 0.0
    %1116 = vmatprep.subr.mxu0 0.0
    %1117 = vmatpush1.msra.mxu0 0.0
    %1118 = vmatprep.subr.mxu0 0.0
    %1119 = vmatpush1.msra.mxu0 0.0
    %1120 = vmatprep.subr.mxu0 0.0
    %1121 = vmatpush1.msra.mxu0 0.0
    %1122 = vmatprep.subr.mxu0 0.0
    %1123 = vmatpush1.msra.mxu0 0.0
    %1124 = vmatprep.subr.mxu0 0.0
    %1125 = vmatpush1.msra.mxu0 0.0
    %1126 = vmatprep.mubr.f32.mxu0 0.0
    %1127 = vmatmul.mubr.f32.gmra.mrb[0].mxu0 %v705
    %v1128 = vpop.f32.mrb[0].mxu0
    %v1129 = vadd.f32 %v1060, %v1128
    %v1130 = vpop.f32.mrb[0].mxu0
    %1131 = vmatprep.mubr.f32.mxu0 0.0
    %1132 = vmatmul.mubr.f32.gmra.mrb[0].mxu0 %v708
    %v1133 = vpop.f32.mrb[0].mxu0
    %v1134 = vadd.f32 %v1060, %v1133
    %v1135 = vpop.f32.mrb[0].mxu0
    %1136 = vdwg.mxu0
    %v1138 = vlaneseq
    %v1139 = vshrl.u32 %v1138, 7
    %v1140 = vsub.s32 0, %v1139
    %v1141 = vrot.slane %v608, %v1140
    %1143 = vmatprep.subr.mxu0 0.0
    %1144 = vmatpush1.msra.mxu0 %v595
    %1145 = vmatprep.subr.mxu0 0.0
    %1146 = vmatpush1.msra.mxu0 %v596
    %1147 = vmatprep.subr.mxu0 0.0
    %1148 = vmatpush1.msra.mxu0 %v597
    %1149 = vmatprep.subr.mxu0 0.0
    %1150 = vmatpush1.msra.mxu0 %v598
    %1151 = vmatprep.subr.mxu0 0.0
    %1152 = vmatpush1.msra.mxu0 0.0
    %1153 = vmatprep.subr.mxu0 0.0
    %1154 = vmatpush1.msra.mxu0 0.0
    %1155 = vmatprep.subr.mxu0 0.0
    %1156 = vmatpush1.msra.mxu0 0.0
    %1157 = vmatprep.subr.mxu0 0.0
    %1158 = vmatpush1.msra.mxu0 0.0
    %1159 = vmatprep.subr.mxu0 0.0
    %1160 = vmatpush1.msra.mxu0 0.0
    %1161 = vmatprep.subr.mxu0 0.0
    %1162 = vmatpush1.msra.mxu0 0.0
    %1163 = vmatprep.subr.mxu0 0.0
    %1164 = vmatpush1.msra.mxu0 0.0
    %1165 = vmatprep.subr.mxu0 0.0
    %1166 = vmatpush1.msra.mxu0 0.0
    %1167 = vmatprep.subr.mxu0 0.0
    %1168 = vmatpush1.msra.mxu0 0.0
    %1169 = vmatprep.subr.mxu0 0.0
    %1170 = vmatpush1.msra.mxu0 0.0
    %1171 = vmatprep.subr.mxu0 0.0
    %1172 = vmatpush1.msra.mxu0 0.0
    %1173 = vmatprep.subr.mxu0 0.0
    %1174 = vmatpush1.msra.mxu0 0.0
    %1175 = vmatprep.subr.mxu0 0.0
    %1176 = vmatpush1.msra.mxu0 0.0
    %1177 = vmatprep.subr.mxu0 0.0
    %1178 = vmatpush1.msra.mxu0 0.0
    %1179 = vmatprep.subr.mxu0 0.0
    %1180 = vmatpush1.msra.mxu0 0.0
    %1181 = vmatprep.subr.mxu0 0.0
    %1182 = vmatpush1.msra.mxu0 0.0
    %1183 = vmatprep.subr.mxu0 0.0
    %1184 = vmatpush1.msra.mxu0 0.0
    %1185 = vmatprep.subr.mxu0 0.0
    %1186 = vmatpush1.msra.mxu0 0.0
    %1187 = vmatprep.subr.mxu0 0.0
    %1188 = vmatpush1.msra.mxu0 0.0
    %1189 = vmatprep.subr.mxu0 0.0
    %1190 = vmatpush1.msra.mxu0 0.0
    %1191 = vmatprep.subr.mxu0 0.0
    %1192 = vmatpush1.msra.mxu0 0.0
    %1193 = vmatprep.subr.mxu0 0.0
    %1194 = vmatpush1.msra.mxu0 0.0
    %1195 = vmatprep.subr.mxu0 0.0
    %1196 = vmatpush1.msra.mxu0 0.0
    %1197 = vmatprep.subr.mxu0 0.0
    %1198 = vmatpush1.msra.mxu0 0.0
    %1199 = vmatprep.subr.mxu0 0.0
    %1200 = vmatpush1.msra.mxu0 0.0
    %1201 = vmatprep.subr.mxu0 0.0
    %1202 = vmatpush1.msra.mxu0 0.0
    %1203 = vmatprep.subr.mxu0 0.0
    %1204 = vmatpush1.msra.mxu0 0.0
    %1205 = vmatprep.subr.mxu0 0.0
    %1206 = vmatpush1.msra.mxu0 0.0
    %1207 = vmatprep.mubr.f32.mxu0 0.0
    %1208 = vmatmul.mubr.f32.gmra.mrb[0].mxu0 %v787
    %v1209 = vpop.f32.mrb[0].mxu0
    %v1210 = vadd.f32 %v1141, %v1209
    %v1211 = vpop.f32.mrb[0].mxu0
    %1212 = vmatprep.mubr.f32.mxu0 0.0
    %1213 = vmatmul.mubr.f32.gmra.mrb[0].mxu0 %v787
    %v1214 = vpop.f32.mrb[0].mxu0
    %v1215 = vadd.f32 %v1141, %v1214
    %v1216 = vpop.f32.mrb[0].mxu0
    %1217 = vdwg.mxu0
    %v1218 = vmul.f32 %v880, %v1210
    %v1219 = vmul.f32 %v881, %v1215
    %v1220 = vadd.f32 %v1129, %v1218
    %v1221 = vadd.f32 %v1134, %v1219
    %v1222 = vtanh.pop %v1220
    %v1223 = vtanh.pop %v1221
    %v1224 = vsub.f32 1.0, %v1054
    %v1225 = vsub.f32 1.0, %v1055
    %v1226 = vmul.f32 %v1224, %v1222
    %v1227 = vmul.f32 %v1225, %v1223
    %v1228 = vmul.f32 %v1054, 0.0
    %v1229 = vmul.f32 %v1055, 0.0
    %v1230 = vadd.f32 %v1226, %v1228
    %v1231 = vadd.f32 %v1227, %v1229
    %v1233 = vlaneseq
    %v1234 = vshrl.u32 %v1233, 7
    %v1235 = vsub.s32 0, %v1234
    %v1236 = vrot.slane %v609, %v1235
    %v1238 = vmul.f32 %v1230, %v1236
    %v1239 = vmul.f32 %v1231, %v1236
    %v1240 = vsel %vm785, %v1238, 0.0
    %1241 = vadd.xlane.f32.xlu0 %v1240
    %v1242 = vpop.xlane.xlu0 %1241
    %v1243 = vsel %vm785, %v1239, 0.0
    %1244 = vadd.xlane.f32.xlu0 %v1243
    %v1245 = vpop.xlane.xlu0 %1244
    %1247 = vset.pattern.permute.xlu0 0
    %1248 = vperm.xlu0 %1247, %v610
    %v1249 = vpop.permute.xlu0 %1248
    %v1251 = vlaneseq
    %v1252 = vshrl.u32 %v1251, 7
    %v1253 = vsub.s32 0, %v1252
    %v1254 = vrot.slane %v1249, %v1253
    %v1255 = vadd.f32 %v1242, %v1254
    %v1256 = vadd.f32 %v1245, %v1254
    %v1257 = vlaneseq
    %v1258 = vshrl.u32 %v1257, 7
    %v1259 = vsub.s32 1, %v1258
    %v1260 = vrot.slane %v574, %v1259
    %v1261 = vmul.f32 %v195, %v1260
    %v1262 = vmul.f32 %v196, %v1260
    %v1264 = vsel %vm121, %v1261, 0
    %v1267 = vsel %vm121, %v1262, 0
    %1269 = vmatprep.subr.mxu0 0.0
    %1270 = vmatpush1.msra.mxu0 %v575
    %1271 = vmatprep.subr.mxu0 0.0
    %1272 = vmatpush1.msra.mxu0 %v576
    %1273 = vmatprep.subr.mxu0 0.0
    %1274 = vmatpush1.msra.mxu0 0.0
    %1275 = vmatprep.subr.mxu0 0.0
    %1276 = vmatpush1.msra.mxu0 0.0
    %1277 = vmatprep.subr.mxu0 0.0
    %1278 = vmatpush1.msra.mxu0 0.0
    %1279 = vmatprep.subr.mxu0 0.0
    %1280 = vmatpush1.msra.mxu0 0.0
    %1281 = vmatprep.subr.mxu0 0.0
    %1282 = vmatpush1.msra.mxu0 0.0
    %1283 = vmatprep.subr.mxu0 0.0
    %1284 = vmatpush1.msra.mxu0 0.0
    %1285 = vmatprep.subr.mxu0 0.0
    %1286 = vmatpush1.msra.mxu0 0.0
    %1287 = vmatprep.subr.mxu0 0.0
    %1288 = vmatpush1.msra.mxu0 0.0
    %1289 = vmatprep.subr.mxu0 0.0
    %1290 = vmatpush1.msra.mxu0 0.0
    %1291 = vmatprep.subr.mxu0 0.0
    %1292 = vmatpush1.msra.mxu0 0.0
    %1293 = vmatprep.subr.mxu0 0.0
    %1294 = vmatpush1.msra.mxu0 0.0
    %1295 = vmatprep.subr.mxu0 0.0
    %1296 = vmatpush1.msra.mxu0 0.0
    %1297 = vmatprep.subr.mxu0 0.0
    %1298 = vmatpush1.msra.mxu0 0.0
    %1299 = vmatprep.subr.mxu0 0.0
    %1300 = vmatpush1.msra.mxu0 0.0
    %1301 = vmatprep.subr.mxu0 0.0
    %1302 = vmatpush1.msra.mxu0 0.0
    %1303 = vmatprep.subr.mxu0 0.0
    %1304 = vmatpush1.msra.mxu0 0.0
    %1305 = vmatprep.subr.mxu0 0.0
    %1306 = vmatpush1.msra.mxu0 0.0
    %1307 = vmatprep.subr.mxu0 0.0
    %1308 = vmatpush1.msra.mxu0 0.0
    %1309 = vmatprep.subr.mxu0 0.0
    %1310 = vmatpush1.msra.mxu0 0.0
    %1311 = vmatprep.subr.mxu0 0.0
    %1312 = vmatpush1.msra.mxu0 0.0
    %1313 = vmatprep.subr.mxu0 0.0
    %1314 = vmatpush1.msra.mxu0 0.0
    %1315 = vmatprep.subr.mxu0 0.0
    %1316 = vmatpush1.msra.mxu0 0.0
    %1317 = vmatprep.subr.mxu0 0.0
    %1318 = vmatpush1.msra.mxu0 0.0
    %1319 = vmatprep.subr.mxu0 0.0
    %1320 = vmatpush1.msra.mxu0 0.0
    %1321 = vmatprep.subr.mxu0 0.0
    %1322 = vmatpush1.msra.mxu0 0.0
    %1323 = vmatprep.subr.mxu0 0.0
    %1324 = vmatpush1.msra.mxu0 0.0
    %1325 = vmatprep.subr.mxu0 0.0
    %1326 = vmatpush1.msra.mxu0 0.0
    %1327 = vmatprep.subr.mxu0 0.0
    %1328 = vmatpush1.msra.mxu0 0.0
    %1329 = vmatprep.subr.mxu0 0.0
    %1330 = vmatpush1.msra.mxu0 0.0
    %1331 = vmatprep.subr.mxu0 0.0
    %1332 = vmatpush1.msra.mxu0 0.0
    %1333 = vmatprep.mubr.f32.mxu0 0.0
    %1334 = vmatmul.mubr.f32.gmra.mrb[0].mxu0 %v1264
    %v1335 = vpop.f32.mrb[0].mxu0
    %v1336 = vadd.f32 0.0, %v1335
    %v1337 = vpop.f32.mrb[0].mxu0
    %1338 = vmatprep.mubr.f32.mxu0 0.0
    %1339 = vmatmul.mubr.f32.gmra.mrb[0].mxu0 %v1267
    %v1340 = vpop.f32.mrb[0].mxu0
    %v1341 = vadd.f32 0.0, %v1340
    %v1342 = vpop.f32.mrb[0].mxu0
    %1343 = vdwg.mxu0
    %v1345 = vsel %vm121, %v1336, 0
    %v1348 = vsel %vm121, %v1341, 0
    %1350 = vmatprep.subr.mxu0 0.0
    %1351 = vmatpush1.msra.mxu0 %v577
    %1352 = vmatprep.subr.mxu0 0.0
    %1353 = vmatpush1.msra.mxu0 %v578
    %1354 = vmatprep.subr.mxu0 0.0
    %1355 = vmatpush1.msra.mxu0 0.0
    %1356 = vmatprep.subr.mxu0 0.0
    %1357 = vmatpush1.msra.mxu0 0.0
    %1358 = vmatprep.subr.mxu0 0.0
    %1359 = vmatpush1.msra.mxu0 0.0
    %1360 = vmatprep.subr.mxu0 0.0
    %1361 = vmatpush1.msra.mxu0 0.0
    %1362 = vmatprep.subr.mxu0 0.0
    %1363 = vmatpush1.msra.mxu0 0.0
    %1364 = vmatprep.subr.mxu0 0.0
    %1365 = vmatpush1.msra.mxu0 0.0
    %1366 = vmatprep.subr.mxu0 0.0
    %1367 = vmatpush1.msra.mxu0 0.0
    %1368 = vmatprep.subr.mxu0 0.0
    %1369 = vmatpush1.msra.mxu0 0.0
    %1370 = vmatprep.subr.mxu0 0.0
    %1371 = vmatpush1.msra.mxu0 0.0
    %1372 = vmatprep.subr.mxu0 0.0
    %1373 = vmatpush1.msra.mxu0 0.0
    %1374 = vmatprep.subr.mxu0 0.0
    %1375 = vmatpush1.msra.mxu0 0.0
    %1376 = vmatprep.subr.mxu0 0.0
    %1377 = vmatpush1.msra.mxu0 0.0
    %1378 = vmatprep.subr.mxu0 0.0
    %1379 = vmatpush1.msra.mxu0 0.0
    %1380 = vmatprep.subr.mxu0 0.0
    %1381 = vmatpush1.msra.mxu0 0.0
    %1382 = vmatprep.subr.mxu0 0.0
    %1383 = vmatpush1.msra.mxu0 0.0
    %1384 = vmatprep.subr.mxu0 0.0
    %1385 = vmatpush1.msra.mxu0 0.0
    %1386 = vmatprep.subr.mxu0 0.0
    %1387 = vmatpush1.msra.mxu0 0.0
    %1388 = vmatprep.subr.mxu0 0.0
    %1389 = vmatpush1.msra.mxu0 0.0
    %1390 = vmatprep.subr.mxu0 0.0
    %1391 = vmatpush1.msra.mxu0 0.0
    %1392 = vmatprep.subr.mxu0 0.0
    %1393 = vmatpush1.msra.mxu0 0.0
    %1394 = vmatprep.subr.mxu0 0.0
    %1395 = vmatpush1.msra.mxu0 0.0
    %1396 = vmatprep.subr.mxu0 0.0
    %1397 = vmatpush1.msra.mxu0 0.0
    %1398 = vmatprep.subr.mxu0 0.0
    %1399 = vmatpush1.msra.mxu0 0.0
    %1400 = vmatprep.subr.mxu0 0.0
    %1401 = vmatpush1.msra.mxu0 0.0
    %1402 = vmatprep.subr.mxu0 0.0
    %1403 = vmatpush1.msra.mxu0 0.0
    %1404 = vmatprep.subr.mxu0 0.0
    %1405 = vmatpush1.msra.mxu0 0.0
    %1406 = vmatprep.subr.mxu0 0.0
    %1407 = vmatpush1.msra.mxu0 0.0
    %1408 = vmatprep.subr.mxu0 0.0
    %1409 = vmatpush1.msra.mxu0 0.0
    %1410 = vmatprep.subr.mxu0 0.0
    %1411 = vmatpush1.msra.mxu0 0.0
    %1412 = vmatprep.subr.mxu0 0.0
    %1413 = vmatpush1.msra.mxu0 0.0
    %1414 = vmatprep.mubr.f32.mxu0 0.0
    %1415 = vmatmul.mubr.f32.gmra.mrb[0].mxu0 %v1345
    %v1416 = vpop.f32.mrb[0].mxu0
    %v1417 = vadd.f32 %v702, %v1416
    %v1418 = vpop.f32.mrb[0].mxu0
    %1419 = vmatprep.mubr.f32.mxu0 0.0
    %1420 = vmatmul.mubr.f32.gmra.mrb[0].mxu0 %v1348
    %v1421 = vpop.f32.mrb[0].mxu0
    %v1422 = vadd.f32 %v702, %v1421
    %v1423 = vpop.f32.mrb[0].mxu0
    %1424 = vdwg.mxu0
    %v1426 = vsel %vm785, %v1230, 0
    %v1429 = vsel %vm785, %v1231, 0
    %1431 = vmatprep.subr.mxu0 0.0
    %1432 = vmatpush1.msra.mxu0 %v585
    %1433 = vmatprep.subr.mxu0 0.0
    %1434 = vmatpush1.msra.mxu0 %v586
    %1435 = vmatprep.subr.mxu0 0.0
    %1436 = vmatpush1.msra.mxu0 %v587
    %1437 = vmatprep.subr.mxu0 0.0
    %1438 = vmatpush1.msra.mxu0 %v588
    %1439 = vmatprep.subr.mxu0 0.0
    %1440 = vmatpush1.msra.mxu0 0.0
    %1441 = vmatprep.subr.mxu0 0.0
    %1442 = vmatpush1.msra.mxu0 0.0
    %1443 = vmatprep.subr.mxu0 0.0
    %1444 = vmatpush1.msra.mxu0 0.0
    %1445 = vmatprep.subr.mxu0 0.0
    %1446 = vmatpush1.msra.mxu0 0.0
    %1447 = vmatprep.subr.mxu0 0.0
    %1448 = vmatpush1.msra.mxu0 0.0
    %1449 = vmatprep.subr.mxu0 0.0
    %1450 = vmatpush1.msra.mxu0 0.0
    %1451 = vmatprep.subr.mxu0 0.0
    %1452 = vmatpush1.msra.mxu0 0.0
    %1453 = vmatprep.subr.mxu0 0.0
    %1454 = vmatpush1.msra.mxu0 0.0
    %1455 = vmatprep.subr.mxu0 0.0
    %1456 = vmatpush1.msra.mxu0 0.0
    %1457 = vmatprep.subr.mxu0 0.0
    %1458 = vmatpush1.msra.mxu0 0.0
    %1459 = vmatprep.subr.mxu0 0.0
    %1460 = vmatpush1.msra.mxu0 0.0
    %1461 = vmatprep.subr.mxu0 0.0
    %1462 = vmatpush1.msra.mxu0 0.0
    %1463 = vmatprep.subr.mxu0 0.0
    %1464 = vmatpush1.msra.mxu0 0.0
    %1465 = vmatprep.subr.mxu0 0.0
    %1466 = vmatpush1.msra.mxu0 0.0
    %1467 = vmatprep.subr.mxu0 0.0
    %1468 = vmatpush1.msra.mxu0 0.0
    %1469 = vmatprep.subr.mxu0 0.0
    %1470 = vmatpush1.msra.mxu0 0.0
    %1471 = vmatprep.subr.mxu0 0.0
    %1472 = vmatpush1.msra.mxu0 0.0
    %1473 = vmatprep.subr.mxu0 0.0
    %1474 = vmatpush1.msra.mxu0 0.0
    %1475 = vmatprep.subr.mxu0 0.0
    %1476 = vmatpush1.msra.mxu0 0.0
    %1477 = vmatprep.subr.mxu0 0.0
    %1478 = vmatpush1.msra.mxu0 0.0
    %1479 = vmatprep.subr.mxu0 0.0
    %1480 = vmatpush1.msra.mxu0 0.0
    %1481 = vmatprep.subr.mxu0 0.0
    %1482 = vmatpush1.msra.mxu0 0.0
    %1483 = vmatprep.subr.mxu0 0.0
    %1484 = vmatpush1.msra.mxu0 0.0
    %1485 = vmatprep.subr.mxu0 0.0
    %1486 = vmatpush1.msra.mxu0 0.0
    %1487 = vmatprep.subr.mxu0 0.0
    %1488 = vmatpush1.msra.mxu0 0.0
    %1489 = vmatprep.subr.mxu0 0.0
    %1490 = vmatpush1.msra.mxu0 0.0
    %1491 = vmatprep.subr.mxu0 0.0
    %1492 = vmatpush1.msra.mxu0 0.0
    %1493 = vmatprep.subr.mxu0 0.0
    %1494 = vmatpush1.msra.mxu0 0.0
    %1495 = vmatprep.mubr.f32.mxu0 0.0
    %1496 = vmatmul.mubr.f32.gmra.mrb[0].mxu0 %v1426
    %v1497 = vpop.f32.mrb[0].mxu0
    %v1498 = vadd.f32 0.0, %v1497
    %v1499 = vpop.f32.mrb[0].mxu0
    %1500 = vmatprep.mubr.f32.mxu0 0.0
    %1501 = vmatmul.mubr.f32.gmra.mrb[0].mxu0 %v1429
    %v1502 = vpop.f32.mrb[0].mxu0
    %v1503 = vadd.f32 0.0, %v1502
    %v1504 = vpop.f32.mrb[0].mxu0
    %1505 = vdwg.mxu0
    %v1506 = vadd.f32 %v1417, %v1498
    %v1507 = vadd.f32 %v1422, %v1503
    %v1508 = vadd.f32 %v1506, %v870
    %v1509 = vadd.f32 %v1507, %v870
    %v1510 = vmul.f32 %v1508, 0.5
    %v1511 = vmul.f32 %v1509, 0.5
    %v1512 = vtanh.pop %v1510
    %v1513 = vtanh.pop %v1511
    %v1514 = vadd.f32 %v1512, 1.0
    %v1515 = vadd.f32 %v1513, 1.0
    %v1516 = vmul.f32 %v1514, 0.5
    %v1517 = vmul.f32 %v1515, 0.5
    %1518 = vmatprep.subr.mxu0 0.0
    %1519 = vmatpush1.msra.mxu0 %v580
    %1520 = vmatprep.subr.mxu0 0.0
    %1521 = vmatpush1.msra.mxu0 %v581
    %1522 = vmatprep.subr.mxu0 0.0
    %1523 = vmatpush1.msra.mxu0 0.0
    %1524 = vmatprep.subr.mxu0 0.0
    %1525 = vmatpush1.msra.mxu0 0.0
    %1526 = vmatprep.subr.mxu0 0.0
    %1527 = vmatpush1.msra.mxu0 0.0
    %1528 = vmatprep.subr.mxu0 0.0
    %1529 = vmatpush1.msra.mxu0 0.0
    %1530 = vmatprep.subr.mxu0 0.0
    %1531 = vmatpush1.msra.mxu0 0.0
    %1532 = vmatprep.subr.mxu0 0.0
    %1533 = vmatpush1.msra.mxu0 0.0
    %1534 = vmatprep.subr.mxu0 0.0
    %1535 = vmatpush1.msra.mxu0 0.0
    %1536 = vmatprep.subr.mxu0 0.0
    %1537 = vmatpush1.msra.mxu0 0.0
    %1538 = vmatprep.subr.mxu0 0.0
    %1539 = vmatpush1.msra.mxu0 0.0
    %1540 = vmatprep.subr.mxu0 0.0
    %1541 = vmatpush1.msra.mxu0 0.0
    %1542 = vmatprep.subr.mxu0 0.0
    %1543 = vmatpush1.msra.mxu0 0.0
    %1544 = vmatprep.subr.mxu0 0.0
    %1545 = vmatpush1.msra.mxu0 0.0
    %1546 = vmatprep.subr.mxu0 0.0
    %1547 = vmatpush1.msra.mxu0 0.0
    %1548 = vmatprep.subr.mxu0 0.0
    %1549 = vmatpush1.msra.mxu0 0.0
    %1550 = vmatprep.subr.mxu0 0.0
    %1551 = vmatpush1.msra.mxu0 0.0
    %1552 = vmatprep.subr.mxu0 0.0
    %1553 = vmatpush1.msra.mxu0 0.0
    %1554 = vmatprep.subr.mxu0 0.0
    %1555 = vmatpush1.msra.mxu0 0.0
    %1556 = vmatprep.subr.mxu0 0.0
    %1557 = vmatpush1.msra.mxu0 0.0
    %1558 = vmatprep.subr.mxu0 0.0
    %1559 = vmatpush1.msra.mxu0 0.0
    %1560 = vmatprep.subr.mxu0 0.0
    %1561 = vmatpush1.msra.mxu0 0.0
    %1562 = vmatprep.subr.mxu0 0.0
    %1563 = vmatpush1.msra.mxu0 0.0
    %1564 = vmatprep.subr.mxu0 0.0
    %1565 = vmatpush1.msra.mxu0 0.0
    %1566 = vmatprep.subr.mxu0 0.0
    %1567 = vmatpush1.msra.mxu0 0.0
    %1568 = vmatprep.subr.mxu0 0.0
    %1569 = vmatpush1.msra.mxu0 0.0
    %1570 = vmatprep.subr.mxu0 0.0
    %1571 = vmatpush1.msra.mxu0 0.0
    %1572 = vmatprep.subr.mxu0 0.0
    %1573 = vmatpush1.msra.mxu0 0.0
    %1574 = vmatprep.subr.mxu0 0.0
    %1575 = vmatpush1.msra.mxu0 0.0
    %1576 = vmatprep.subr.mxu0 0.0
    %1577 = vmatpush1.msra.mxu0 0.0
    %1578 = vmatprep.subr.mxu0 0.0
    %1579 = vmatpush1.msra.mxu0 0.0
    %1580 = vmatprep.subr.mxu0 0.0
    %1581 = vmatpush1.msra.mxu0 0.0
    %1582 = vmatprep.mubr.f32.mxu0 0.0
    %1583 = vmatmul.mubr.f32.gmra.mrb[0].mxu0 %v1345
    %v1584 = vpop.f32.mrb[0].mxu0
    %v1585 = vadd.f32 %v886, %v1584
    %v1586 = vpop.f32.mrb[0].mxu0
    %1587 = vmatprep.mubr.f32.mxu0 0.0
    %1588 = vmatmul.mubr.f32.gmra.mrb[0].mxu0 %v1348
    %v1589 = vpop.f32.mrb[0].mxu0
    %v1590 = vadd.f32 %v886, %v1589
    %v1591 = vpop.f32.mrb[0].mxu0
    %1592 = vdwg.mxu0
    %1593 = vmatprep.subr.mxu0 0.0
    %1594 = vmatpush1.msra.mxu0 %v590
    %1595 = vmatprep.subr.mxu0 0.0
    %1596 = vmatpush1.msra.mxu0 %v591
    %1597 = vmatprep.subr.mxu0 0.0
    %1598 = vmatpush1.msra.mxu0 %v592
    %1599 = vmatprep.subr.mxu0 0.0
    %1600 = vmatpush1.msra.mxu0 %v593
    %1601 = vmatprep.subr.mxu0 0.0
    %1602 = vmatpush1.msra.mxu0 0.0
    %1603 = vmatprep.subr.mxu0 0.0
    %1604 = vmatpush1.msra.mxu0 0.0
    %1605 = vmatprep.subr.mxu0 0.0
    %1606 = vmatpush1.msra.mxu0 0.0
    %1607 = vmatprep.subr.mxu0 0.0
    %1608 = vmatpush1.msra.mxu0 0.0
    %1609 = vmatprep.subr.mxu0 0.0
    %1610 = vmatpush1.msra.mxu0 0.0
    %1611 = vmatprep.subr.mxu0 0.0
    %1612 = vmatpush1.msra.mxu0 0.0
    %1613 = vmatprep.subr.mxu0 0.0
    %1614 = vmatpush1.msra.mxu0 0.0
    %1615 = vmatprep.subr.mxu0 0.0
    %1616 = vmatpush1.msra.mxu0 0.0
    %1617 = vmatprep.subr.mxu0 0.0
    %1618 = vmatpush1.msra.mxu0 0.0
    %1619 = vmatprep.subr.mxu0 0.0
    %1620 = vmatpush1.msra.mxu0 0.0
    %1621 = vmatprep.subr.mxu0 0.0
    %1622 = vmatpush1.msra.mxu0 0.0
    %1623 = vmatprep.subr.mxu0 0.0
    %1624 = vmatpush1.msra.mxu0 0.0
    %1625 = vmatprep.subr.mxu0 0.0
    %1626 = vmatpush1.msra.mxu0 0.0
    %1627 = vmatprep.subr.mxu0 0.0
    %1628 = vmatpush1.msra.mxu0 0.0
    %1629 = vmatprep.subr.mxu0 0.0
    %1630 = vmatpush1.msra.mxu0 0.0
    %1631 = vmatprep.subr.mxu0 0.0
    %1632 = vmatpush1.msra.mxu0 0.0
    %1633 = vmatprep.subr.mxu0 0.0
    %1634 = vmatpush1.msra.mxu0 0.0
    %1635 = vmatprep.subr.mxu0 0.0
    %1636 = vmatpush1.msra.mxu0 0.0
    %1637 = vmatprep.subr.mxu0 0.0
    %1638 = vmatpush1.msra.mxu0 0.0
    %1639 = vmatprep.subr.mxu0 0.0
    %1640 = vmatpush1.msra.mxu0 0.0
    %1641 = vmatprep.subr.mxu0 0.0
    %1642 = vmatpush1.msra.mxu0 0.0
    %1643 = vmatprep.subr.mxu0 0.0
    %1644 = vmatpush1.msra.mxu0 0.0
    %1645 = vmatprep.subr.mxu0 0.0
    %1646 = vmatpush1.msra.mxu0 0.0
    %1647 = vmatprep.subr.mxu0 0.0
    %1648 = vmatpush1.msra.mxu0 0.0
    %1649 = vmatprep.subr.mxu0 0.0
    %1650 = vmatpush1.msra.mxu0 0.0
    %1651 = vmatprep.subr.mxu0 0.0
    %1652 = vmatpush1.msra.mxu0 0.0
    %1653 = vmatprep.subr.mxu0 0.0
    %1654 = vmatpush1.msra.mxu0 0.0
    %1655 = vmatprep.subr.mxu0 0.0
    %1656 = vmatpush1.msra.mxu0 0.0
    %1657 = vmatprep.mubr.f32.mxu0 0.0
    %1658 = vmatmul.mubr.f32.gmra.mrb[0].mxu0 %v1426
    %v1659 = vpop.f32.mrb[0].mxu0
    %v1660 = vadd.f32 0.0, %v1659
    %v1661 = vpop.f32.mrb[0].mxu0
    %1662 = vmatprep.mubr.f32.mxu0 0.0
    %1663 = vmatmul.mubr.f32.gmra.mrb[0].mxu0 %v1429
    %v1664 = vpop.f32.mrb[0].mxu0
    %v1665 = vadd.f32 0.0, %v1664
    %v1666 = vpop.f32.mrb[0].mxu0
    %1667 = vdwg.mxu0
    %v1668 = vadd.f32 %v1585, %v1660
    %v1669 = vadd.f32 %v1590, %v1665
    %v1670 = vadd.f32 %v1668, %v1044
    %v1671 = vadd.f32 %v1669, %v1044
    %v1672 = vmul.f32 %v1670, 0.5
    %v1673 = vmul.f32 %v1671, 0.5
    %v1674 = vtanh.pop %v1672
    %v1675 = vtanh.pop %v1673
    %v1676 = vadd.f32 %v1674, 1.0
    %v1677 = vadd.f32 %v1675, 1.0
    %v1678 = vmul.f32 %v1676, 0.5
    %v1679 = vmul.f32 %v1677, 0.5
    %1680 = vmatprep.subr.mxu0 0.0
    %1681 = vmatpush1.msra.mxu0 %v583
    %1682 = vmatprep.subr.mxu0 0.0
    %1683 = vmatpush1.msra.mxu0 %v584
    %1684 = vmatprep.subr.mxu0 0.0
    %1685 = vmatpush1.msra.mxu0 0.0
    %1686 = vmatprep.subr.mxu0 0.0
    %1687 = vmatpush1.msra.mxu0 0.0
    %1688 = vmatprep.subr.mxu0 0.0
    %1689 = vmatpush1.msra.mxu0 0.0
    %1690 = vmatprep.subr.mxu0 0.0
    %1691 = vmatpush1.msra.mxu0 0.0
    %1692 = vmatprep.subr.mxu0 0.0
    %1693 = vmatpush1.msra.mxu0 0.0
    %1694 = vmatprep.subr.mxu0 0.0
    %1695 = vmatpush1.msra.mxu0 0.0
    %1696 = vmatprep.subr.mxu0 0.0
    %1697 = vmatpush1.msra.mxu0 0.0
    %1698 = vmatprep.subr.mxu0 0.0
    %1699 = vmatpush1.msra.mxu0 0.0
    %1700 = vmatprep.subr.mxu0 0.0
    %1701 = vmatpush1.msra.mxu0 0.0
    %1702 = vmatprep.subr.mxu0 0.0
    %1703 = vmatpush1.msra.mxu0 0.0
    %1704 = vmatprep.subr.mxu0 0.0
    %1705 = vmatpush1.msra.mxu0 0.0
    %1706 = vmatprep.subr.mxu0 0.0
    %1707 = vmatpush1.msra.mxu0 0.0
    %1708 = vmatprep.subr.mxu0 0.0
    %1709 = vmatpush1.msra.mxu0 0.0
    %1710 = vmatprep.subr.mxu0 0.0
    %1711 = vmatpush1.msra.mxu0 0.0
    %1712 = vmatprep.subr.mxu0 0.0
    %1713 = vmatpush1.msra.mxu0 0.0
    %1714 = vmatprep.subr.mxu0 0.0
    %1715 = vmatpush1.msra.mxu0 0.0
    %1716 = vmatprep.subr.mxu0 0.0
    %1717 = vmatpush1.msra.mxu0 0.0
    %1718 = vmatprep.subr.mxu0 0.0
    %1719 = vmatpush1.msra.mxu0 0.0
    %1720 = vmatprep.subr.mxu0 0.0
    %1721 = vmatpush1.msra.mxu0 0.0
    %1722 = vmatprep.subr.mxu0 0.0
    %1723 = vmatpush1.msra.mxu0 0.0
    %1724 = vmatprep.subr.mxu0 0.0
    %1725 = vmatpush1.msra.mxu0 0.0
    %1726 = vmatprep.subr.mxu0 0.0
    %1727 = vmatpush1.msra.mxu0 0.0
    %1728 = vmatprep.subr.mxu0 0.0
    %1729 = vmatpush1.msra.mxu0 0.0
    %1730 = vmatprep.subr.mxu0 0.0
    %1731 = vmatpush1.msra.mxu0 0.0
    %1732 = vmatprep.subr.mxu0 0.0
    %1733 = vmatpush1.msra.mxu0 0.0
    %1734 = vmatprep.subr.mxu0 0.0
    %1735 = vmatpush1.msra.mxu0 0.0
    %1736 = vmatprep.subr.mxu0 0.0
    %1737 = vmatpush1.msra.mxu0 0.0
    %1738 = vmatprep.subr.mxu0 0.0
    %1739 = vmatpush1.msra.mxu0 0.0
    %1740 = vmatprep.subr.mxu0 0.0
    %1741 = vmatpush1.msra.mxu0 0.0
    %1742 = vmatprep.subr.mxu0 0.0
    %1743 = vmatpush1.msra.mxu0 0.0
    %1744 = vmatprep.mubr.f32.mxu0 0.0
    %1745 = vmatmul.mubr.f32.gmra.mrb[0].mxu0 %v1345
    %v1746 = vpop.f32.mrb[0].mxu0
    %v1747 = vadd.f32 %v1060, %v1746
    %v1748 = vpop.f32.mrb[0].mxu0
    %1749 = vmatprep.mubr.f32.mxu0 0.0
    %1750 = vmatmul.mubr.f32.gmra.mrb[0].mxu0 %v1348
    %v1751 = vpop.f32.mrb[0].mxu0
    %v1752 = vadd.f32 %v1060, %v1751
    %v1753 = vpop.f32.mrb[0].mxu0
    %1754 = vdwg.mxu0
    %1755 = vmatprep.subr.mxu0 0.0
    %1756 = vmatpush1.msra.mxu0 %v595
    %1757 = vmatprep.subr.mxu0 0.0
    %1758 = vmatpush1.msra.mxu0 %v596
    %1759 = vmatprep.subr.mxu0 0.0
    %1760 = vmatpush1.msra.mxu0 %v597
    %1761 = vmatprep.subr.mxu0 0.0
    %1762 = vmatpush1.msra.mxu0 %v598
    %1763 = vmatprep.subr.mxu0 0.0
    %1764 = vmatpush1.msra.mxu0 0.0
    %1765 = vmatprep.subr.mxu0 0.0
    %1766 = vmatpush1.msra.mxu0 0.0
    %1767 = vmatprep.subr.mxu0 0.0
    %1768 = vmatpush1.msra.mxu0 0.0
    %1769 = vmatprep.subr.mxu0 0.0
    %1770 = vmatpush1.msra.mxu0 0.0
    %1771 = vmatprep.subr.mxu0 0.0
    %1772 = vmatpush1.msra.mxu0 0.0
    %1773 = vmatprep.subr.mxu0 0.0
    %1774 = vmatpush1.msra.mxu0 0.0
    %1775 = vmatprep.subr.mxu0 0.0
    %1776 = vmatpush1.msra.mxu0 0.0
    %1777 = vmatprep.subr.mxu0 0.0
    %1778 = vmatpush1.msra.mxu0 0.0
    %1779 = vmatprep.subr.mxu0 0.0
    %1780 = vmatpush1.msra.mxu0 0.0
    %1781 = vmatprep.subr.mxu0 0.0
    %1782 = vmatpush1.msra.mxu0 0.0
    %1783 = vmatprep.subr.mxu0 0.0
    %1784 = vmatpush1.msra.mxu0 0.0
    %1785 = vmatprep.subr.mxu0 0.0
    %1786 = vmatpush1.msra.mxu0 0.0
    %1787 = vmatprep.subr.mxu0 0.0
    %1788 = vmatpush1.msra.mxu0 0.0
    %1789 = vmatprep.subr.mxu0 0.0
    %1790 = vmatpush1.msra.mxu0 0.0
    %1791 = vmatprep.subr.mxu0 0.0
    %1792 = vmatpush1.msra.mxu0 0.0
    %1793 = vmatprep.subr.mxu0 0.0
    %1794 = vmatpush1.msra.mxu0 0.0
    %1795 = vmatprep.subr.mxu0 0.0
    %1796 = vmatpush1.msra.mxu0 0.0
    %1797 = vmatprep.subr.mxu0 0.0
    %1798 = vmatpush1.msra.mxu0 0.0
    %1799 = vmatprep.subr.mxu0 0.0
    %1800 = vmatpush1.msra.mxu0 0.0
    %1801 = vmatprep.subr.mxu0 0.0
    %1802 = vmatpush1.msra.mxu0 0.0
    %1803 = vmatprep.subr.mxu0 0.0
    %1804 = vmatpush1.msra.mxu0 0.0
    %1805 = vmatprep.subr.mxu0 0.0
    %1806 = vmatpush1.msra.mxu0 0.0
    %1807 = vmatprep.subr.mxu0 0.0
    %1808 = vmatpush1.msra.mxu0 0.0
    %1809 = vmatprep.subr.mxu0 0.0
    %1810 = vmatpush1.msra.mxu0 0.0
    %1811 = vmatprep.subr.mxu0 0.0
    %1812 = vmatpush1.msra.mxu0 0.0
    %1813 = vmatprep.subr.mxu0 0.0
    %1814 = vmatpush1.msra.mxu0 0.0
    %1815 = vmatprep.subr.mxu0 0.0
    %1816 = vmatpush1.msra.mxu0 0.0
    %1817 = vmatprep.subr.mxu0 0.0
    %1818 = vmatpush1.msra.mxu0 0.0
    %1819 = vmatprep.mubr.f32.mxu0 0.0
    %1820 = vmatmul.mubr.f32.gmra.mrb[0].mxu0 %v1426
    %v1821 = vpop.f32.mrb[0].mxu0
    %v1822 = vadd.f32 %v1141, %v1821
    %v1823 = vpop.f32.mrb[0].mxu0
    %1824 = vmatprep.mubr.f32.mxu0 0.0
    %1825 = vmatmul.mubr.f32.gmra.mrb[0].mxu0 %v1429
    %v1826 = vpop.f32.mrb[0].mxu0
    %v1827 = vadd.f32 %v1141, %v1826
    %v1828 = vpop.f32.mrb[0].mxu0
    %1829 = vdwg.mxu0
    %v1830 = vmul.f32 %v1516, %v1822
    %v1831 = vmul.f32 %v1517, %v1827
    %v1832 = vadd.f32 %v1747, %v1830
    %v1833 = vadd.f32 %v1752, %v1831
    %v1834 = vtanh.pop %v1832
    %v1835 = vtanh.pop %v1833
    %v1836 = vsub.f32 1.0, %v1678
    %v1837 = vsub.f32 1.0, %v1679
    %v1838 = vmul.f32 %v1836, %v1834
    %v1839 = vmul.f32 %v1837, %v1835
    %v1840 = vmul.f32 %v1678, %v1230
    %v1841 = vmul.f32 %v1679, %v1231
    %v1842 = vadd.f32 %v1838, %v1840
    %v1843 = vadd.f32 %v1839, %v1841
    %v1844 = vmul.f32 %v1842, %v1236
    %v1845 = vmul.f32 %v1843, %v1236
    %v1846 = vsel %vm785, %v1844, 0.0
    %1847 = vadd.xlane.f32.xlu0 %v1846
    %v1848 = vpop.xlane.xlu0 %1847
    %v1849 = vsel %vm785, %v1845, 0.0
    %1850 = vadd.xlane.f32.xlu0 %v1849
    %v1851 = vpop.xlane.xlu0 %1850
    %v1852 = vadd.f32 %v1848, %v1254
    %v1853 = vadd.f32 %v1851, %v1254
    %v1854 = vlaneseq
    %v1855 = vshrl.u32 %v1854, 7
    %v1856 = vsub.s32 2, %v1855
    %v1857 = vrot.slane %v574, %v1856
    %v1858 = vmul.f32 %v195, %v1857
    %v1859 = vmul.f32 %v196, %v1857
    %v1861 = vsel %vm121, %v1858, 0
    %v1864 = vsel %vm121, %v1859, 0
    %1866 = vmatprep.subr.mxu0 0.0
    %1867 = vmatpush1.msra.mxu0 %v575
    %1868 = vmatprep.subr.mxu0 0.0
    %1869 = vmatpush1.msra.mxu0 %v576
    %1870 = vmatprep.subr.mxu0 0.0
    %1871 = vmatpush1.msra.mxu0 0.0
    %1872 = vmatprep.subr.mxu0 0.0
    %1873 = vmatpush1.msra.mxu0 0.0
    %1874 = vmatprep.subr.mxu0 0.0
    %1875 = vmatpush1.msra.mxu0 0.0
    %1876 = vmatprep.subr.mxu0 0.0
    %1877 = vmatpush1.msra.mxu0 0.0
    %1878 = vmatprep.subr.mxu0 0.0
    %1879 = vmatpush1.msra.mxu0 0.0
    %1880 = vmatprep.subr.mxu0 0.0
    %1881 = vmatpush1.msra.mxu0 0.0
    %1882 = vmatprep.subr.mxu0 0.0
    %1883 = vmatpush1.msra.mxu0 0.0
    %1884 = vmatprep.subr.mxu0 0.0
    %1885 = vmatpush1.msra.mxu0 0.0
    %1886 = vmatprep.subr.mxu0 0.0
    %1887 = vmatpush1.msra.mxu0 0.0
    %1888 = vmatprep.subr.mxu0 0.0
    %1889 = vmatpush1.msra.mxu0 0.0
    %1890 = vmatprep.subr.mxu0 0.0
    %1891 = vmatpush1.msra.mxu0 0.0
    %1892 = vmatprep.subr.mxu0 0.0
    %1893 = vmatpush1.msra.mxu0 0.0
    %1894 = vmatprep.subr.mxu0 0.0
    %1895 = vmatpush1.msra.mxu0 0.0
    %1896 = vmatprep.subr.mxu0 0.0
    %1897 = vmatpush1.msra.mxu0 0.0
    %1898 = vmatprep.subr.mxu0 0.0
    %1899 = vmatpush1.msra.mxu0 0.0
    %1900 = vmatprep.subr.mxu0 0.0
    %1901 = vmatpush1.msra.mxu0 0.0
    %1902 = vmatprep.subr.mxu0 0.0
    %1903 = vmatpush1.msra.mxu0 0.0
    %1904 = vmatprep.subr.mxu0 0.0
    %1905 = vmatpush1.msra.mxu0 0.0
    %1906 = vmatprep.subr.mxu0 0.0
    %1907 = vmatpush1.msra.mxu0 0.0
    %1908 = vmatprep.subr.mxu0 0.0
    %1909 = vmatpush1.msra.mxu0 0.0
    %1910 = vmatprep.subr.mxu0 0.0
    %1911 = vmatpush1.msra.mxu0 0.0
    %1912 = vmatprep.subr.mxu0 0.0
    %1913 = vmatpush1.msra.mxu0 0.0
    %1914 = vmatprep.subr.mxu0 0.0
    %1915 = vmatpush1.msra.mxu0 0.0
    %1916 = vmatprep.subr.mxu0 0.0
    %1917 = vmatpush1.msra.mxu0 0.0
    %1918 = vmatprep.subr.mxu0 0.0
    %1919 = vmatpush1.msra.mxu0 0.0
    %1920 = vmatprep.subr.mxu0 0.0
    %1921 = vmatpush1.msra.mxu0 0.0
    %1922 = vmatprep.subr.mxu0 0.0
    %1923 = vmatpush1.msra.mxu0 0.0
    %1924 = vmatprep.subr.mxu0 0.0
    %1925 = vmatpush1.msra.mxu0 0.0
    %1926 = vmatprep.subr.mxu0 0.0
    %1927 = vmatpush1.msra.mxu0 0.0
    %1928 = vmatprep.subr.mxu0 0.0
    %1929 = vmatpush1.msra.mxu0 0.0
    %1930 = vmatprep.mubr.f32.mxu0 0.0
    %1931 = vmatmul.mubr.f32.gmra.mrb[0].mxu0 %v1861
    %v1932 = vpop.f32.mrb[0].mxu0
    %v1933 = vadd.f32 0.0, %v1932
    %v1934 = vpop.f32.mrb[0].mxu0
    %1935 = vmatprep.mubr.f32.mxu0 0.0
    %1936 = vmatmul.mubr.f32.gmra.mrb[0].mxu0 %v1864
    %v1937 = vpop.f32.mrb[0].mxu0
    %v1938 = vadd.f32 0.0, %v1937
    %v1939 = vpop.f32.mrb[0].mxu0
    %1940 = vdwg.mxu0
    %v1942 = vsel %vm121, %v1933, 0
    %v1945 = vsel %vm121, %v1938, 0
    %1947 = vmatprep.subr.mxu0 0.0
    %1948 = vmatpush1.msra.mxu0 %v577
    %1949 = vmatprep.subr.mxu0 0.0
    %1950 = vmatpush1.msra.mxu0 %v578
    %1951 = vmatprep.subr.mxu0 0.0
    %1952 = vmatpush1.msra.mxu0 0.0
    %1953 = vmatprep.subr.mxu0 0.0
    %1954 = vmatpush1.msra.mxu0 0.0
    %1955 = vmatprep.subr.mxu0 0.0
    %1956 = vmatpush1.msra.mxu0 0.0
    %1957 = vmatprep.subr.mxu0 0.0
    %1958 = vmatpush1.msra.mxu0 0.0
    %1959 = vmatprep.subr.mxu0 0.0
    %1960 = vmatpush1.msra.mxu0 0.0
    %1961 = vmatprep.subr.mxu0 0.0
    %1962 = vmatpush1.msra.mxu0 0.0
    %1963 = vmatprep.subr.mxu0 0.0
    %1964 = vmatpush1.msra.mxu0 0.0
    %1965 = vmatprep.subr.mxu0 0.0
    %1966 = vmatpush1.msra.mxu0 0.0
    %1967 = vmatprep.subr.mxu0 0.0
    %1968 = vmatpush1.msra.mxu0 0.0
    %1969 = vmatprep.subr.mxu0 0.0
    %1970 = vmatpush1.msra.mxu0 0.0
    %1971 = vmatprep.subr.mxu0 0.0
    %1972 = vmatpush1.msra.mxu0 0.0
    %1973 = vmatprep.subr.mxu0 0.0
    %1974 = vmatpush1.msra.mxu0 0.0
    %1975 = vmatprep.subr.mxu0 0.0
    %1976 = vmatpush1.msra.mxu0 0.0
    %1977 = vmatprep.subr.mxu0 0.0
    %1978 = vmatpush1.msra.mxu0 0.0
    %1979 = vmatprep.subr.mxu0 0.0
    %1980 = vmatpush1.msra.mxu0 0.0
    %1981 = vmatprep.subr.mxu0 0.0
    %1982 = vmatpush1.msra.mxu0 0.0
    %1983 = vmatprep.subr.mxu0 0.0
    %1984 = vmatpush1.msra.mxu0 0.0
    %1985 = vmatprep.subr.mxu0 0.0
    %1986 = vmatpush1.msra.mxu0 0.0
    %1987 = vmatprep.subr.mxu0 0.0
    %1988 = vmatpush1.msra.mxu0 0.0
    %1989 = vmatprep.subr.mxu0 0.0
    %1990 = vmatpush1.msra.mxu0 0.0
    %1991 = vmatprep.subr.mxu0 0.0
    %1992 = vmatpush1.msra.mxu0 0.0
    %1993 = vmatprep.subr.mxu0 0.0
    %1994 = vmatpush1.msra.mxu0 0.0
    %1995 = vmatprep.subr.mxu0 0.0
    %1996 = vmatpush1.msra.mxu0 0.0
    %1997 = vmatprep.subr.mxu0 0.0
    %1998 = vmatpush1.msra.mxu0 0.0
    %1999 = vmatprep.subr.mxu0 0.0
    %2000 = vmatpush1.msra.mxu0 0.0
    %2001 = vmatprep.subr.mxu0 0.0
    %2002 = vmatpush1.msra.mxu0 0.0
    %2003 = vmatprep.subr.mxu0 0.0
    %2004 = vmatpush1.msra.mxu0 0.0
    %2005 = vmatprep.subr.mxu0 0.0
    %2006 = vmatpush1.msra.mxu0 0.0
    %2007 = vmatprep.subr.mxu0 0.0
    %2008 = vmatpush1.msra.mxu0 0.0
    %2009 = vmatprep.subr.mxu0 0.0
    %2010 = vmatpush1.msra.mxu0 0.0
    %2011 = vmatprep.mubr.f32.mxu0 0.0
    %2012 = vmatmul.mubr.f32.gmra.mrb[0].mxu0 %v1942
    %v2013 = vpop.f32.mrb[0].mxu0
    %v2014 = vadd.f32 %v702, %v2013
    %v2015 = vpop.f32.mrb[0].mxu0
    %2016 = vmatprep.mubr.f32.mxu0 0.0
    %2017 = vmatmul.mubr.f32.gmra.mrb[0].mxu0 %v1945
    %v2018 = vpop.f32.mrb[0].mxu0
    %v2019 = vadd.f32 %v702, %v2018
    %v2020 = vpop.f32.mrb[0].mxu0
    %2021 = vdwg.mxu0
    %v2023 = vsel %vm785, %v1842, 0
    %v2026 = vsel %vm785, %v1843, 0
    %2028 = vmatprep.subr.mxu0 0.0
    %2029 = vmatpush1.msra.mxu0 %v585
    %2030 = vmatprep.subr.mxu0 0.0
    %2031 = vmatpush1.msra.mxu0 %v586
    %2032 = vmatprep.subr.mxu0 0.0
    %2033 = vmatpush1.msra.mxu0 %v587
    %2034 = vmatprep.subr.mxu0 0.0
    %2035 = vmatpush1.msra.mxu0 %v588
    %2036 = vmatprep.subr.mxu0 0.0
    %2037 = vmatpush1.msra.mxu0 0.0
    %2038 = vmatprep.subr.mxu0 0.0
    %2039 = vmatpush1.msra.mxu0 0.0
    %2040 = vmatprep.subr.mxu0 0.0
    %2041 = vmatpush1.msra.mxu0 0.0
    %2042 = vmatprep.subr.mxu0 0.0
    %2043 = vmatpush1.msra.mxu0 0.0
    %2044 = vmatprep.subr.mxu0 0.0
    %2045 = vmatpush1.msra.mxu0 0.0
    %2046 = vmatprep.subr.mxu0 0.0
    %2047 = vmatpush1.msra.mxu0 0.0
    %2048 = vmatprep.subr.mxu0 0.0
    %2049 = vmatpush1.msra.mxu0 0.0
    %2050 = vmatprep.subr.mxu0 0.0
    %2051 = vmatpush1.msra.mxu0 0.0
    %2052 = vmatprep.subr.mxu0 0.0
    %2053 = vmatpush1.msra.mxu0 0.0
    %2054 = vmatprep.subr.mxu0 0.0
    %2055 = vmatpush1.msra.mxu0 0.0
    %2056 = vmatprep.subr.mxu0 0.0
    %2057 = vmatpush1.msra.mxu0 0.0
    %2058 = vmatprep.subr.mxu0 0.0
    %2059 = vmatpush1.msra.mxu0 0.0
    %2060 = vmatprep.subr.mxu0 0.0
    %2061 = vmatpush1.msra.mxu0 0.0
    %2062 = vmatprep.subr.mxu0 0.0
    %2063 = vmatpush1.msra.mxu0 0.0
    %2064 = vmatprep.subr.mxu0 0.0
    %2065 = vmatpush1.msra.mxu0 0.0
    %2066 = vmatprep.subr.mxu0 0.0
    %2067 = vmatpush1.msra.mxu0 0.0
    %2068 = vmatprep.subr.mxu0 0.0
    %2069 = vmatpush1.msra.mxu0 0.0
    %2070 = vmatprep.subr.mxu0 0.0
    %2071 = vmatpush1.msra.mxu0 0.0
    %2072 = vmatprep.subr.mxu0 0.0
    %2073 = vmatpush1.msra.mxu0 0.0
    %2074 = vmatprep.subr.mxu0 0.0
    %2075 = vmatpush1.msra.mxu0 0.0
    %2076 = vmatprep.subr.mxu0 0.0
    %2077 = vmatpush1.msra.mxu0 0.0
    %2078 = vmatprep.subr.mxu0 0.0
    %2079 = vmatpush1.msra.mxu0 0.0
    %2080 = vmatprep.subr.mxu0 0.0
    %2081 = vmatpush1.msra.mxu0 0.0
    %2082 = vmatprep.subr.mxu0 0.0
    %2083 = vmatpush1.msra.mxu0 0.0
    %2084 = vmatprep.subr.mxu0 0.0
    %2085 = vmatpush1.msra.mxu0 0.0
    %2086 = vmatprep.subr.mxu0 0.0
    %2087 = vmatpush1.msra.mxu0 0.0
    %2088 = vmatprep.subr.mxu0 0.0
    %2089 = vmatpush1.msra.mxu0 0.0
    %2090 = vmatprep.subr.mxu0 0.0
    %2091 = vmatpush1.msra.mxu0 0.0
    %2092 = vmatprep.mubr.f32.mxu0 0.0
    %2093 = vmatmul.mubr.f32.gmra.mrb[0].mxu0 %v2023
    %v2094 = vpop.f32.mrb[0].mxu0
    %v2095 = vadd.f32 0.0, %v2094
    %v2096 = vpop.f32.mrb[0].mxu0
    %2097 = vmatprep.mubr.f32.mxu0 0.0
    %2098 = vmatmul.mubr.f32.gmra.mrb[0].mxu0 %v2026
    %v2099 = vpop.f32.mrb[0].mxu0
    %v2100 = vadd.f32 0.0, %v2099
    %v2101 = vpop.f32.mrb[0].mxu0
    %2102 = vdwg.mxu0
    %v2103 = vadd.f32 %v2014, %v2095
    %v2104 = vadd.f32 %v2019, %v2100
    %v2105 = vadd.f32 %v2103, %v870
    %v2106 = vadd.f32 %v2104, %v870
    %v2107 = vmul.f32 %v2105, 0.5
    %v2108 = vmul.f32 %v2106, 0.5
    %v2109 = vtanh.pop %v2107
    %v2110 = vtanh.pop %v2108
    %v2111 = vadd.f32 %v2109, 1.0
    %v2112 = vadd.f32 %v2110, 1.0
    %v2113 = vmul.f32 %v2111, 0.5
    %v2114 = vmul.f32 %v2112, 0.5
    %2115 = vmatprep.subr.mxu0 0.0
    %2116 = vmatpush1.msra.mxu0 %v580
    %2117 = vmatprep.subr.mxu0 0.0
    %2118 = vmatpush1.msra.mxu0 %v581
    %2119 = vmatprep.subr.mxu0 0.0
    %2120 = vmatpush1.msra.mxu0 0.0
    %2121 = vmatprep.subr.mxu0 0.0
    %2122 = vmatpush1.msra.mxu0 0.0
    %2123 = vmatprep.subr.mxu0 0.0
    %2124 = vmatpush1.msra.mxu0 0.0
    %2125 = vmatprep.subr.mxu0 0.0
    %2126 = vmatpush1.msra.mxu0 0.0
    %2127 = vmatprep.subr.mxu0 0.0
    %2128 = vmatpush1.msra.mxu0 0.0
    %2129 = vmatprep.subr.mxu0 0.0
    %2130 = vmatpush1.msra.mxu0 0.0
    %2131 = vmatprep.subr.mxu0 0.0
    %2132 = vmatpush1.msra.mxu0 0.0
    %2133 = vmatprep.subr.mxu0 0.0
    %2134 = vmatpush1.msra.mxu0 0.0
    %2135 = vmatprep.subr.mxu0 0.0
    %2136 = vmatpush1.msra.mxu0 0.0
    %2137 = vmatprep.subr.mxu0 0.0
    %2138 = vmatpush1.msra.mxu0 0.0
    %2139 = vmatprep.subr.mxu0 0.0
    %2140 = vmatpush1.msra.mxu0 0.0
    %2141 = vmatprep.subr.mxu0 0.0
    %2142 = vmatpush1.msra.mxu0 0.0
    %2143 = vmatprep.subr.mxu0 0.0
    %2144 = vmatpush1.msra.mxu0 0.0
    %2145 = vmatprep.subr.mxu0 0.0
    %2146 = vmatpush1.msra.mxu0 0.0
    %2147 = vmatprep.subr.mxu0 0.0
    %2148 = vmatpush1.msra.mxu0 0.0
    %2149 = vmatprep.subr.mxu0 0.0
    %2150 = vmatpush1.msra.mxu0 0.0
    %2151 = vmatprep.subr.mxu0 0.0
    %2152 = vmatpush1.msra.mxu0 0.0
    %2153 = vmatprep.subr.mxu0 0.0
    %2154 = vmatpush1.msra.mxu0 0.0
    %2155 = vmatprep.subr.mxu0 0.0
    %2156 = vmatpush1.msra.mxu0 0.0
    %2157 = vmatprep.subr.mxu0 0.0
    %2158 = vmatpush1.msra.mxu0 0.0
    %2159 = vmatprep.subr.mxu0 0.0
    %2160 = vmatpush1.msra.mxu0 0.0
    %2161 = vmatprep.subr.mxu0 0.0
    %2162 = vmatpush1.msra.mxu0 0.0
    %2163 = vmatprep.subr.mxu0 0.0
    %2164 = vmatpush1.msra.mxu0 0.0
    %2165 = vmatprep.subr.mxu0 0.0
    %2166 = vmatpush1.msra.mxu0 0.0
    %2167 = vmatprep.subr.mxu0 0.0
    %2168 = vmatpush1.msra.mxu0 0.0
    %2169 = vmatprep.subr.mxu0 0.0
    %2170 = vmatpush1.msra.mxu0 0.0
    %2171 = vmatprep.subr.mxu0 0.0
    %2172 = vmatpush1.msra.mxu0 0.0
    %2173 = vmatprep.subr.mxu0 0.0
    %2174 = vmatpush1.msra.mxu0 0.0
    %2175 = vmatprep.subr.mxu0 0.0
    %2176 = vmatpush1.msra.mxu0 0.0
    %2177 = vmatprep.subr.mxu0 0.0
    %2178 = vmatpush1.msra.mxu0 0.0
    %2179 = vmatprep.mubr.f32.mxu0 0.0
    %2180 = vmatmul.mubr.f32.gmra.mrb[0].mxu0 %v1942
    %v2181 = vpop.f32.mrb[0].mxu0
    %v2182 = vadd.f32 %v886, %v2181
    %v2183 = vpop.f32.mrb[0].mxu0
    %2184 = vmatprep.mubr.f32.mxu0 0.0
    %2185 = vmatmul.mubr.f32.gmra.mrb[0].mxu0 %v1945
    %v2186 = vpop.f32.mrb[0].mxu0
    %v2187 = vadd.f32 %v886, %v2186
    %v2188 = vpop.f32.mrb[0].mxu0
    %2189 = vdwg.mxu0
    %2190 = vmatprep.subr.mxu0 0.0
    %2191 = vmatpush1.msra.mxu0 %v590
    %2192 = vmatprep.subr.mxu0 0.0
    %2193 = vmatpush1.msra.mxu0 %v591
    %2194 = vmatprep.subr.mxu0 0.0
    %2195 = vmatpush1.msra.mxu0 %v592
    %2196 = vmatprep.subr.mxu0 0.0
    %2197 = vmatpush1.msra.mxu0 %v593
    %2198 = vmatprep.subr.mxu0 0.0
    %2199 = vmatpush1.msra.mxu0 0.0
    %2200 = vmatprep.subr.mxu0 0.0
    %2201 = vmatpush1.msra.mxu0 0.0
    %2202 = vmatprep.subr.mxu0 0.0
    %2203 = vmatpush1.msra.mxu0 0.0
    %2204 = vmatprep.subr.mxu0 0.0
    %2205 = vmatpush1.msra.mxu0 0.0
    %2206 = vmatprep.subr.mxu0 0.0
    %2207 = vmatpush1.msra.mxu0 0.0
    %2208 = vmatprep.subr.mxu0 0.0
    %2209 = vmatpush1.msra.mxu0 0.0
    %2210 = vmatprep.subr.mxu0 0.0
    %2211 = vmatpush1.msra.mxu0 0.0
    %2212 = vmatprep.subr.mxu0 0.0
    %2213 = vmatpush1.msra.mxu0 0.0
    %2214 = vmatprep.subr.mxu0 0.0
    %2215 = vmatpush1.msra.mxu0 0.0
    %2216 = vmatprep.subr.mxu0 0.0
    %2217 = vmatpush1.msra.mxu0 0.0
    %2218 = vmatprep.subr.mxu0 0.0
    %2219 = vmatpush1.msra.mxu0 0.0
    %2220 = vmatprep.subr.mxu0 0.0
    %2221 = vmatpush1.msra.mxu0 0.0
    %2222 = vmatprep.subr.mxu0 0.0
    %2223 = vmatpush1.msra.mxu0 0.0
    %2224 = vmatprep.subr.mxu0 0.0
    %2225 = vmatpush1.msra.mxu0 0.0
    %2226 = vmatprep.subr.mxu0 0.0
    %2227 = vmatpush1.msra.mxu0 0.0
    %2228 = vmatprep.subr.mxu0 0.0
    %2229 = vmatpush1.msra.mxu0 0.0
    %2230 = vmatprep.subr.mxu0 0.0
    %2231 = vmatpush1.msra.mxu0 0.0
    %2232 = vmatprep.subr.mxu0 0.0
    %2233 = vmatpush1.msra.mxu0 0.0
    %2234 = vmatprep.subr.mxu0 0.0
    %2235 = vmatpush1.msra.mxu0 0.0
    %2236 = vmatprep.subr.mxu0 0.0
    %2237 = vmatpush1.msra.mxu0 0.0
    %2238 = vmatprep.subr.mxu0 0.0
    %2239 = vmatpush1.msra.mxu0 0.0
    %2240 = vmatprep.subr.mxu0 0.0
    %2241 = vmatpush1.msra.mxu0 0.0
    %2242 = vmatprep.subr.mxu0 0.0
    %2243 = vmatpush1.msra.mxu0 0.0
    %2244 = vmatprep.subr.mxu0 0.0
    %2245 = vmatpush1.msra.mxu0 0.0
    %2246 = vmatprep.subr.mxu0 0.0
    %2247 = vmatpush1.msra.mxu0 0.0
    %2248 = vmatprep.subr.mxu0 0.0
    %2249 = vmatpush1.msra.mxu0 0.0
    %2250 = vmatprep.subr.mxu0 0.0
    %2251 = vmatpush1.msra.mxu0 0.0
    %2252 = vmatprep.subr.mxu0 0.0
    %2253 = vmatpush1.msra.mxu0 0.0
    %2254 = vmatprep.mubr.f32.mxu0 0.0
    %2255 = vmatmul.mubr.f32.gmra.mrb[0].mxu0 %v2023
    %v2256 = vpop.f32.mrb[0].mxu0
    %v2257 = vadd.f32 0.0, %v2256
    %v2258 = vpop.f32.mrb[0].mxu0
    %2259 = vmatprep.mubr.f32.mxu0 0.0
    %2260 = vmatmul.mubr.f32.gmra.mrb[0].mxu0 %v2026
    %v2261 = vpop.f32.mrb[0].mxu0
    %v2262 = vadd.f32 0.0, %v2261
    %v2263 = vpop.f32.mrb[0].mxu0
    %2264 = vdwg.mxu0
    %v2265 = vadd.f32 %v2182, %v2257
    %v2266 = vadd.f32 %v2187, %v2262
    %v2267 = vadd.f32 %v2265, %v1044
    %v2268 = vadd.f32 %v2266, %v1044
    %v2269 = vmul.f32 %v2267, 0.5
    %v2270 = vmul.f32 %v2268, 0.5
    %v2271 = vtanh.pop %v2269
    %v2272 = vtanh.pop %v2270
    %v2273 = vadd.f32 %v2271, 1.0
    %v2274 = vadd.f32 %v2272, 1.0
    %v2275 = vmul.f32 %v2273, 0.5
    %v2276 = vmul.f32 %v2274, 0.5
    %2277 = vmatprep.subr.mxu0 0.0
    %2278 = vmatpush1.msra.mxu0 %v583
    %2279 = vmatprep.subr.mxu0 0.0
    %2280 = vmatpush1.msra.mxu0 %v584
    %2281 = vmatprep.subr.mxu0 0.0
    %2282 = vmatpush1.msra.mxu0 0.0
    %2283 = vmatprep.subr.mxu0 0.0
    %2284 = vmatpush1.msra.mxu0 0.0
    %2285 = vmatprep.subr.mxu0 0.0
    %2286 = vmatpush1.msra.mxu0 0.0
    %2287 = vmatprep.subr.mxu0 0.0
    %2288 = vmatpush1.msra.mxu0 0.0
    %2289 = vmatprep.subr.mxu0 0.0
    %2290 = vmatpush1.msra.mxu0 0.0
    %2291 = vmatprep.subr.mxu0 0.0
    %2292 = vmatpush1.msra.mxu0 0.0
    %2293 = vmatprep.subr.mxu0 0.0
    %2294 = vmatpush1.msra.mxu0 0.0
    %2295 = vmatprep.subr.mxu0 0.0
    %2296 = vmatpush1.msra.mxu0 0.0
    %2297 = vmatprep.subr.mxu0 0.0
    %2298 = vmatpush1.msra.mxu0 0.0
    %2299 = vmatprep.subr.mxu0 0.0
    %2300 = vmatpush1.msra.mxu0 0.0
    %2301 = vmatprep.subr.mxu0 0.0
    %2302 = vmatpush1.msra.mxu0 0.0
    %2303 = vmatprep.subr.mxu0 0.0
    %2304 = vmatpush1.msra.mxu0 0.0
    %2305 = vmatprep.subr.mxu0 0.0
    %2306 = vmatpush1.msra.mxu0 0.0
    %2307 = vmatprep.subr.mxu0 0.0
    %2308 = vmatpush1.msra.mxu0 0.0
    %2309 = vmatprep.subr.mxu0 0.0
    %2310 = vmatpush1.msra.mxu0 0.0
    %2311 = vmatprep.subr.mxu0 0.0
    %2312 = vmatpush1.msra.mxu0 0.0
    %2313 = vmatprep.subr.mxu0 0.0
    %2314 = vmatpush1.msra.mxu0 0.0
    %2315 = vmatprep.subr.mxu0 0.0
    %2316 = vmatpush1.msra.mxu0 0.0
    %2317 = vmatprep.subr.mxu0 0.0
    %2318 = vmatpush1.msra.mxu0 0.0
    %2319 = vmatprep.subr.mxu0 0.0
    %2320 = vmatpush1.msra.mxu0 0.0
    %2321 = vmatprep.subr.mxu0 0.0
    %2322 = vmatpush1.msra.mxu0 0.0
    %2323 = vmatprep.subr.mxu0 0.0
    %2324 = vmatpush1.msra.mxu0 0.0
    %2325 = vmatprep.subr.mxu0 0.0
    %2326 = vmatpush1.msra.mxu0 0.0
    %2327 = vmatprep.subr.mxu0 0.0
    %2328 = vmatpush1.msra.mxu0 0.0
    %2329 = vmatprep.subr.mxu0 0.0
    %2330 = vmatpush1.msra.mxu0 0.0
    %2331 = vmatprep.subr.mxu0 0.0
    %2332 = vmatpush1.msra.mxu0 0.0
    %2333 = vmatprep.subr.mxu0 0.0
    %2334 = vmatpush1.msra.mxu0 0.0
    %2335 = vmatprep.subr.mxu0 0.0
    %2336 = vmatpush1.msra.mxu0 0.0
    %2337 = vmatprep.subr.mxu0 0.0
    %2338 = vmatpush1.msra.mxu0 0.0
    %2339 = vmatprep.subr.mxu0 0.0
    %2340 = vmatpush1.msra.mxu0 0.0
    %2341 = vmatprep.mubr.f32.mxu0 0.0
    %2342 = vmatmul.mubr.f32.gmra.mrb[0].mxu0 %v1942
    %v2343 = vpop.f32.mrb[0].mxu0
    %v2344 = vadd.f32 %v1060, %v2343
    %v2345 = vpop.f32.mrb[0].mxu0
    %2346 = vmatprep.mubr.f32.mxu0 0.0
    %2347 = vmatmul.mubr.f32.gmra.mrb[0].mxu0 %v1945
    %v2348 = vpop.f32.mrb[0].mxu0
    %v2349 = vadd.f32 %v1060, %v2348
    %v2350 = vpop.f32.mrb[0].mxu0
    %2351 = vdwg.mxu0
    %2352 = vmatprep.subr.mxu0 0.0
    %2353 = vmatpush1.msra.mxu0 %v595
    %2354 = vmatprep.subr.mxu0 0.0
    %2355 = vmatpush1.msra.mxu0 %v596
    %2356 = vmatprep.subr.mxu0 0.0
    %2357 = vmatpush1.msra.mxu0 %v597
    %2358 = vmatprep.subr.mxu0 0.0
    %2359 = vmatpush1.msra.mxu0 %v598
    %2360 = vmatprep.subr.mxu0 0.0
    %2361 = vmatpush1.msra.mxu0 0.0
    %2362 = vmatprep.subr.mxu0 0.0
    %2363 = vmatpush1.msra.mxu0 0.0
    %2364 = vmatprep.subr.mxu0 0.0
    %2365 = vmatpush1.msra.mxu0 0.0
    %2366 = vmatprep.subr.mxu0 0.0
    %2367 = vmatpush1.msra.mxu0 0.0
    %2368 = vmatprep.subr.mxu0 0.0
    %2369 = vmatpush1.msra.mxu0 0.0
    %2370 = vmatprep.subr.mxu0 0.0
    %2371 = vmatpush1.msra.mxu0 0.0
    %2372 = vmatprep.subr.mxu0 0.0
    %2373 = vmatpush1.msra.mxu0 0.0
    %2374 = vmatprep.subr.mxu0 0.0
    %2375 = vmatpush1.msra.mxu0 0.0
    %2376 = vmatprep.subr.mxu0 0.0
    %2377 = vmatpush1.msra.mxu0 0.0
    %2378 = vmatprep.subr.mxu0 0.0
    %2379 = vmatpush1.msra.mxu0 0.0
    %2380 = vmatprep.subr.mxu0 0.0
    %2381 = vmatpush1.msra.mxu0 0.0
    %2382 = vmatprep.subr.mxu0 0.0
    %2383 = vmatpush1.msra.mxu0 0.0
    %2384 = vmatprep.subr.mxu0 0.0
    %2385 = vmatpush1.msra.mxu0 0.0
    %2386 = vmatprep.subr.mxu0 0.0
    %2387 = vmatpush1.msra.mxu0 0.0
    %2388 = vmatprep.subr.mxu0 0.0
    %2389 = vmatpush1.msra.mxu0 0.0
    %2390 = vmatprep.subr.mxu0 0.0
    %2391 = vmatpush1.msra.mxu0 0.0
    %2392 = vmatprep.subr.mxu0 0.0
    %2393 = vmatpush1.msra.mxu0 0.0
    %2394 = vmatprep.subr.mxu0 0.0
    %2395 = vmatpush1.msra.mxu0 0.0
    %2396 = vmatprep.subr.mxu0 0.0
    %2397 = vmatpush1.msra.mxu0 0.0
    %2398 = vmatprep.subr.mxu0 0.0
    %2399 = vmatpush1.msra.mxu0 0.0
    %2400 = vmatprep.subr.mxu0 0.0
    %2401 = vmatpush1.msra.mxu0 0.0
    %2402 = vmatprep.subr.mxu0 0.0
    %2403 = vmatpush1.msra.mxu0 0.0
    %2404 = vmatprep.subr.mxu0 0.0
    %2405 = vmatpush1.msra.mxu0 0.0
    %2406 = vmatprep.subr.mxu0 0.0
    %2407 = vmatpush1.msra.mxu0 0.0
    %2408 = vmatprep.subr.mxu0 0.0
    %2409 = vmatpush1.msra.mxu0 0.0
    %2410 = vmatprep.subr.mxu0 0.0
    %2411 = vmatpush1.msra.mxu0 0.0
    %2412 = vmatprep.subr.mxu0 0.0
    %2413 = vmatpush1.msra.mxu0 0.0
    %2414 = vmatprep.subr.mxu0 0.0
    %2415 = vmatpush1.msra.mxu0 0.0
    %2416 = vmatprep.mubr.f32.mxu0 0.0
    %2417 = vmatmul.mubr.f32.gmra.mrb[0].mxu0 %v2023
    %v2418 = vpop.f32.mrb[0].mxu0
    %v2419 = vadd.f32 %v1141, %v2418
    %v2420 = vpop.f32.mrb[0].mxu0
    %2421 = vmatprep.mubr.f32.mxu0 0.0
    %2422 = vmatmul.mubr.f32.gmra.mrb[0].mxu0 %v2026
    %v2423 = vpop.f32.mrb[0].mxu0
    %v2424 = vadd.f32 %v1141, %v2423
    %v2425 = vpop.f32.mrb[0].mxu0
    %2426 = vdwg.mxu0
    %v2427 = vmul.f32 %v2113, %v2419
    %v2428 = vmul.f32 %v2114, %v2424
    %v2429 = vadd.f32 %v2344, %v2427
    %v2430 = vadd.f32 %v2349, %v2428
    %v2431 = vtanh.pop %v2429
    %v2432 = vtanh.pop %v2430
    %v2433 = vsub.f32 1.0, %v2275
    %v2434 = vsub.f32 1.0, %v2276
    %v2435 = vmul.f32 %v2433, %v2431
    %v2436 = vmul.f32 %v2434, %v2432
    %v2437 = vmul.f32 %v2275, %v1842
    %v2438 = vmul.f32 %v2276, %v1843
    %v2439 = vadd.f32 %v2435, %v2437
    %v2440 = vadd.f32 %v2436, %v2438
    %v2441 = vmul.f32 %v2439, %v1236
    %v2442 = vmul.f32 %v2440, %v1236
    %v2443 = vsel %vm785, %v2441, 0.0
    %2444 = vadd.xlane.f32.xlu0 %v2443
    %v2445 = vpop.xlane.xlu0 %2444
    %v2446 = vsel %vm785, %v2442, 0.0
    %2447 = vadd.xlane.f32.xlu0 %v2446
    %v2448 = vpop.xlane.xlu0 %2447
    %v2449 = vadd.f32 %v2445, %v1254
    %v2450 = vadd.f32 %v2448, %v1254
    %v2451 = vlaneseq
    %v2452 = vshrl.u32 %v2451, 7
    %v2453 = vsub.s32 3, %v2452
    %v2454 = vrot.slane %v574, %v2453
    %v2455 = vmul.f32 %v195, %v2454
    %v2456 = vmul.f32 %v196, %v2454
    %v2458 = vsel %vm121, %v2455, 0
    %v2461 = vsel %vm121, %v2456, 0
    %2463 = vmatprep.subr.mxu0 0.0
    %2464 = vmatpush1.msra.mxu0 %v575
    %2465 = vmatprep.subr.mxu0 0.0
    %2466 = vmatpush1.msra.mxu0 %v576
    %2467 = vmatprep.subr.mxu0 0.0
    %2468 = vmatpush1.msra.mxu0 0.0
    %2469 = vmatprep.subr.mxu0 0.0
    %2470 = vmatpush1.msra.mxu0 0.0
    %2471 = vmatprep.subr.mxu0 0.0
    %2472 = vmatpush1.msra.mxu0 0.0
    %2473 = vmatprep.subr.mxu0 0.0
    %2474 = vmatpush1.msra.mxu0 0.0
    %2475 = vmatprep.subr.mxu0 0.0
    %2476 = vmatpush1.msra.mxu0 0.0
    %2477 = vmatprep.subr.mxu0 0.0
    %2478 = vmatpush1.msra.mxu0 0.0
    %2479 = vmatprep.subr.mxu0 0.0
    %2480 = vmatpush1.msra.mxu0 0.0
    %2481 = vmatprep.subr.mxu0 0.0
    %2482 = vmatpush1.msra.mxu0 0.0
    %2483 = vmatprep.subr.mxu0 0.0
    %2484 = vmatpush1.msra.mxu0 0.0
    %2485 = vmatprep.subr.mxu0 0.0
    %2486 = vmatpush1.msra.mxu0 0.0
    %2487 = vmatprep.subr.mxu0 0.0
    %2488 = vmatpush1.msra.mxu0 0.0
    %2489 = vmatprep.subr.mxu0 0.0
    %2490 = vmatpush1.msra.mxu0 0.0
    %2491 = vmatprep.subr.mxu0 0.0
    %2492 = vmatpush1.msra.mxu0 0.0
    %2493 = vmatprep.subr.mxu0 0.0
    %2494 = vmatpush1.msra.mxu0 0.0
    %2495 = vmatprep.subr.mxu0 0.0
    %2496 = vmatpush1.msra.mxu0 0.0
    %2497 = vmatprep.subr.mxu0 0.0
    %2498 = vmatpush1.msra.mxu0 0.0
    %2499 = vmatprep.subr.mxu0 0.0
    %2500 = vmatpush1.msra.mxu0 0.0
    %2501 = vmatprep.subr.mxu0 0.0
    %2502 = vmatpush1.msra.mxu0 0.0
    %2503 = vmatprep.subr.mxu0 0.0
    %2504 = vmatpush1.msra.mxu0 0.0
    %2505 = vmatprep.subr.mxu0 0.0
    %2506 = vmatpush1.msra.mxu0 0.0
    %2507 = vmatprep.subr.mxu0 0.0
    %2508 = vmatpush1.msra.mxu0 0.0
    %2509 = vmatprep.subr.mxu0 0.0
    %2510 = vmatpush1.msra.mxu0 0.0
    %2511 = vmatprep.subr.mxu0 0.0
    %2512 = vmatpush1.msra.mxu0 0.0
    %2513 = vmatprep.subr.mxu0 0.0
    %2514 = vmatpush1.msra.mxu0 0.0
    %2515 = vmatprep.subr.mxu0 0.0
    %2516 = vmatpush1.msra.mxu0 0.0
    %2517 = vmatprep.subr.mxu0 0.0
    %2518 = vmatpush1.msra.mxu0 0.0
    %2519 = vmatprep.subr.mxu0 0.0
    %2520 = vmatpush1.msra.mxu0 0.0
    %2521 = vmatprep.subr.mxu0 0.0
    %2522 = vmatpush1.msra.mxu0 0.0
    %2523 = vmatprep.subr.mxu0 0.0
    %2524 = vmatpush1.msra.mxu0 0.0
    %2525 = vmatprep.subr.mxu0 0.0
    %2526 = vmatpush1.msra.mxu0 0.0
    %2527 = vmatprep.mubr.f32.mxu0 0.0
    %2528 = vmatmul.mubr.f32.gmra.mrb[0].mxu0 %v2458
    %v2529 = vpop.f32.mrb[0].mxu0
    %v2530 = vadd.f32 0.0, %v2529
    %v2531 = vpop.f32.mrb[0].mxu0
    %2532 = vmatprep.mubr.f32.mxu0 0.0
    %2533 = vmatmul.mubr.f32.gmra.mrb[0].mxu0 %v2461
    %v2534 = vpop.f32.mrb[0].mxu0
    %v2535 = vadd.f32 0.0, %v2534
    %v2536 = vpop.f32.mrb[0].mxu0
    %2537 = vdwg.mxu0
    %v2539 = vsel %vm121, %v2530, 0
    %v2542 = vsel %vm121, %v2535, 0
    %2544 = vmatprep.subr.mxu0 0.0
    %2545 = vmatpush1.msra.mxu0 %v577
    %2546 = vmatprep.subr.mxu0 0.0
    %2547 = vmatpush1.msra.mxu0 %v578
    %2548 = vmatprep.subr.mxu0 0.0
    %2549 = vmatpush1.msra.mxu0 0.0
    %2550 = vmatprep.subr.mxu0 0.0
    %2551 = vmatpush1.msra.mxu0 0.0
    %2552 = vmatprep.subr.mxu0 0.0
    %2553 = vmatpush1.msra.mxu0 0.0
    %2554 = vmatprep.subr.mxu0 0.0
    %2555 = vmatpush1.msra.mxu0 0.0
    %2556 = vmatprep.subr.mxu0 0.0
    %2557 = vmatpush1.msra.mxu0 0.0
    %2558 = vmatprep.subr.mxu0 0.0
    %2559 = vmatpush1.msra.mxu0 0.0
    %2560 = vmatprep.subr.mxu0 0.0
    %2561 = vmatpush1.msra.mxu0 0.0
    %2562 = vmatprep.subr.mxu0 0.0
    %2563 = vmatpush1.msra.mxu0 0.0
    %2564 = vmatprep.subr.mxu0 0.0
    %2565 = vmatpush1.msra.mxu0 0.0
    %2566 = vmatprep.subr.mxu0 0.0
    %2567 = vmatpush1.msra.mxu0 0.0
    %2568 = vmatprep.subr.mxu0 0.0
    %2569 = vmatpush1.msra.mxu0 0.0
    %2570 = vmatprep.subr.mxu0 0.0
    %2571 = vmatpush1.msra.mxu0 0.0
    %2572 = vmatprep.subr.mxu0 0.0
    %2573 = vmatpush1.msra.mxu0 0.0
    %2574 = vmatprep.subr.mxu0 0.0
    %2575 = vmatpush1.msra.mxu0 0.0
    %2576 = vmatprep.subr.mxu0 0.0
    %2577 = vmatpush1.msra.mxu0 0.0
    %2578 = vmatprep.subr.mxu0 0.0
    %2579 = vmatpush1.msra.mxu0 0.0
    %2580 = vmatprep.subr.mxu0 0.0
    %2581 = vmatpush1.msra.mxu0 0.0
    %2582 = vmatprep.subr.mxu0 0.0
    %2583 = vmatpush1.msra.mxu0 0.0
    %2584 = vmatprep.subr.mxu0 0.0
    %2585 = vmatpush1.msra.mxu0 0.0
    %2586 = vmatprep.subr.mxu0 0.0
    %2587 = vmatpush1.msra.mxu0 0.0
    %2588 = vmatprep.subr.mxu0 0.0
    %2589 = vmatpush1.msra.mxu0 0.0
    %2590 = vmatprep.subr.mxu0 0.0
    %2591 = vmatpush1.msra.mxu0 0.0
    %2592 = vmatprep.subr.mxu0 0.0
    %2593 = vmatpush1.msra.mxu0 0.0
    %2594 = vmatprep.subr.mxu0 0.0
    %2595 = vmatpush1.msra.mxu0 0.0
    %2596 = vmatprep.subr.mxu0 0.0
    %2597 = vmatpush1.msra.mxu0 0.0
    %2598 = vmatprep.subr.mxu0 0.0
    %2599 = vmatpush1.msra.mxu0 0.0
    %2600 = vmatprep.subr.mxu0 0.0
    %2601 = vmatpush1.msra.mxu0 0.0
    %2602 = vmatprep.subr.mxu0 0.0
    %2603 = vmatpush1.msra.mxu0 0.0
    %2604 = vmatprep.subr.mxu0 0.0
    %2605 = vmatpush1.msra.mxu0 0.0
    %2606 = vmatprep.subr.mxu0 0.0
    %2607 = vmatpush1.msra.mxu0 0.0
    %2608 = vmatprep.mubr.f32.mxu0 0.0
    %2609 = vmatmul.mubr.f32.gmra.mrb[0].mxu0 %v2539
    %v2610 = vpop.f32.mrb[0].mxu0
    %v2611 = vadd.f32 %v702, %v2610
    %v2612 = vpop.f32.mrb[0].mxu0
    %2613 = vmatprep.mubr.f32.mxu0 0.0
    %2614 = vmatmul.mubr.f32.gmra.mrb[0].mxu0 %v2542
    %v2615 = vpop.f32.mrb[0].mxu0
    %v2616 = vadd.f32 %v702, %v2615
    %v2617 = vpop.f32.mrb[0].mxu0
    %2618 = vdwg.mxu0
    %v2620 = vsel %vm785, %v2439, 0
    %v2623 = vsel %vm785, %v2440, 0
    %2625 = vmatprep.subr.mxu0 0.0
    %2626 = vmatpush1.msra.mxu0 %v585
    %2627 = vmatprep.subr.mxu0 0.0
    %2628 = vmatpush1.msra.mxu0 %v586
    %2629 = vmatprep.subr.mxu0 0.0
    %2630 = vmatpush1.msra.mxu0 %v587
    %2631 = vmatprep.subr.mxu0 0.0
    %2632 = vmatpush1.msra.mxu0 %v588
    %2633 = vmatprep.subr.mxu0 0.0
    %2634 = vmatpush1.msra.mxu0 0.0
    %2635 = vmatprep.subr.mxu0 0.0
    %2636 = vmatpush1.msra.mxu0 0.0
    %2637 = vmatprep.subr.mxu0 0.0
    %2638 = vmatpush1.msra.mxu0 0.0
    %2639 = vmatprep.subr.mxu0 0.0
    %2640 = vmatpush1.msra.mxu0 0.0
    %2641 = vmatprep.subr.mxu0 0.0
    %2642 = vmatpush1.msra.mxu0 0.0
    %2643 = vmatprep.subr.mxu0 0.0
    %2644 = vmatpush1.msra.mxu0 0.0
    %2645 = vmatprep.subr.mxu0 0.0
    %2646 = vmatpush1.msra.mxu0 0.0
    %2647 = vmatprep.subr.mxu0 0.0
    %2648 = vmatpush1.msra.mxu0 0.0
    %2649 = vmatprep.subr.mxu0 0.0
    %2650 = vmatpush1.msra.mxu0 0.0
    %2651 = vmatprep.subr.mxu0 0.0
    %2652 = vmatpush1.msra.mxu0 0.0
    %2653 = vmatprep.subr.mxu0 0.0
    %2654 = vmatpush1.msra.mxu0 0.0
    %2655 = vmatprep.subr.mxu0 0.0
    %2656 = vmatpush1.msra.mxu0 0.0
    %2657 = vmatprep.subr.mxu0 0.0
    %2658 = vmatpush1.msra.mxu0 0.0
    %2659 = vmatprep.subr.mxu0 0.0
    %2660 = vmatpush1.msra.mxu0 0.0
    %2661 = vmatprep.subr.mxu0 0.0
    %2662 = vmatpush1.msra.mxu0 0.0
    %2663 = vmatprep.subr.mxu0 0.0
    %2664 = vmatpush1.msra.mxu0 0.0
    %2665 = vmatprep.subr.mxu0 0.0
    %2666 = vmatpush1.msra.mxu0 0.0
    %2667 = vmatprep.subr.mxu0 0.0
    %2668 = vmatpush1.msra.mxu0 0.0
    %2669 = vmatprep.subr.mxu0 0.0
    %2670 = vmatpush1.msra.mxu0 0.0
    %2671 = vmatprep.subr.mxu0 0.0
    %2672 = vmatpush1.msra.mxu0 0.0
    %2673 = vmatprep.subr.mxu0 0.0
    %2674 = vmatpush1.msra.mxu0 0.0
    %2675 = vmatprep.subr.mxu0 0.0
    %2676 = vmatpush1.msra.mxu0 0.0
    %2677 = vmatprep.subr.mxu0 0.0
    %2678 = vmatpush1.msra.mxu0 0.0
    %2679 = vmatprep.subr.mxu0 0.0
    %2680 = vmatpush1.msra.mxu0 0.0
    %2681 = vmatprep.subr.mxu0 0.0
    %2682 = vmatpush1.msra.mxu0 0.0
    %2683 = vmatprep.subr.mxu0 0.0
    %2684 = vmatpush1.msra.mxu0 0.0
    %2685 = vmatprep.subr.mxu0 0.0
    %2686 = vmatpush1.msra.mxu0 0.0
    %2687 = vmatprep.subr.mxu0 0.0
    %2688 = vmatpush1.msra.mxu0 0.0
    %2689 = vmatprep.mubr.f32.mxu0 0.0
    %2690 = vmatmul.mubr.f32.gmra.mrb[0].mxu0 %v2620
    %v2691 = vpop.f32.mrb[0].mxu0
    %v2692 = vadd.f32 0.0, %v2691
    %v2693 = vpop.f32.mrb[0].mxu0
    %2694 = vmatprep.mubr.f32.mxu0 0.0
    %2695 = vmatmul.mubr.f32.gmra.mrb[0].mxu0 %v2623
    %v2696 = vpop.f32.mrb[0].mxu0
    %v2697 = vadd.f32 0.0, %v2696
    %v2698 = vpop.f32.mrb[0].mxu0
    %2699 = vdwg.mxu0
    %v2700 = vadd.f32 %v2611, %v2692
    %v2701 = vadd.f32 %v2616, %v2697
    %v2702 = vadd.f32 %v2700, %v870
    %v2703 = vadd.f32 %v2701, %v870
    %v2704 = vmul.f32 %v2702, 0.5
    %v2705 = vmul.f32 %v2703, 0.5
    %v2706 = vtanh.pop %v2704
    %v2707 = vtanh.pop %v2705
    %v2708 = vadd.f32 %v2706, 1.0
    %v2709 = vadd.f32 %v2707, 1.0
    %v2710 = vmul.f32 %v2708, 0.5
    %v2711 = vmul.f32 %v2709, 0.5
    %2712 = vmatprep.subr.mxu0 0.0
    %2713 = vmatpush1.msra.mxu0 %v580
    %2714 = vmatprep.subr.mxu0 0.0
    %2715 = vmatpush1.msra.mxu0 %v581
    %2716 = vmatprep.subr.mxu0 0.0
    %2717 = vmatpush1.msra.mxu0 0.0
    %2718 = vmatprep.subr.mxu0 0.0
    %2719 = vmatpush1.msra.mxu0 0.0
    %2720 = vmatprep.subr.mxu0 0.0
    %2721 = vmatpush1.msra.mxu0 0.0
    %2722 = vmatprep.subr.mxu0 0.0
    %2723 = vmatpush1.msra.mxu0 0.0
    %2724 = vmatprep.subr.mxu0 0.0
    %2725 = vmatpush1.msra.mxu0 0.0
    %2726 = vmatprep.subr.mxu0 0.0
    %2727 = vmatpush1.msra.mxu0 0.0
    %2728 = vmatprep.subr.mxu0 0.0
    %2729 = vmatpush1.msra.mxu0 0.0
    %2730 = vmatprep.subr.mxu0 0.0
    %2731 = vmatpush1.msra.mxu0 0.0
    %2732 = vmatprep.subr.mxu0 0.0
    %2733 = vmatpush1.msra.mxu0 0.0
    %2734 = vmatprep.subr.mxu0 0.0
    %2735 = vmatpush1.msra.mxu0 0.0
    %2736 = vmatprep.subr.mxu0 0.0
    %2737 = vmatpush1.msra.mxu0 0.0
    %2738 = vmatprep.subr.mxu0 0.0
    %2739 = vmatpush1.msra.mxu0 0.0
    %2740 = vmatprep.subr.mxu0 0.0
    %2741 = vmatpush1.msra.mxu0 0.0
    %2742 = vmatprep.subr.mxu0 0.0
    %2743 = vmatpush1.msra.mxu0 0.0
    %2744 = vmatprep.subr.mxu0 0.0
    %2745 = vmatpush1.msra.mxu0 0.0
    %2746 = vmatprep.subr.mxu0 0.0
    %2747 = vmatpush1.msra.mxu0 0.0
    %2748 = vmatprep.subr.mxu0 0.0
    %2749 = vmatpush1.msra.mxu0 0.0
    %2750 = vmatprep.subr.mxu0 0.0
    %2751 = vmatpush1.msra.mxu0 0.0
    %2752 = vmatprep.subr.mxu0 0.0
    %2753 = vmatpush1.msra.mxu0 0.0
    %2754 = vmatprep.subr.mxu0 0.0
    %2755 = vmatpush1.msra.mxu0 0.0
    %2756 = vmatprep.subr.mxu0 0.0
    %2757 = vmatpush1.msra.mxu0 0.0
    %2758 = vmatprep.subr.mxu0 0.0
    %2759 = vmatpush1.msra.mxu0 0.0
    %2760 = vmatprep.subr.mxu0 0.0
    %2761 = vmatpush1.msra.mxu0 0.0
    %2762 = vmatprep.subr.mxu0 0.0
    %2763 = vmatpush1.msra.mxu0 0.0
    %2764 = vmatprep.subr.mxu0 0.0
    %2765 = vmatpush1.msra.mxu0 0.0
    %2766 = vmatprep.subr.mxu0 0.0
    %2767 = vmatpush1.msra.mxu0 0.0
    %2768 = vmatprep.subr.mxu0 0.0
    %2769 = vmatpush1.msra.mxu0 0.0
    %2770 = vmatprep.subr.mxu0 0.0
    %2771 = vmatpush1.msra.mxu0 0.0
    %2772 = vmatprep.subr.mxu0 0.0
    %2773 = vmatpush1.msra.mxu0 0.0
    %2774 = vmatprep.subr.mxu0 0.0
    %2775 = vmatpush1.msra.mxu0 0.0
    %2776 = vmatprep.mubr.f32.mxu0 0.0
    %2777 = vmatmul.mubr.f32.gmra.mrb[0].mxu0 %v2539
    %v2778 = vpop.f32.mrb[0].mxu0
    %v2779 = vadd.f32 %v886, %v2778
    %v2780 = vpop.f32.mrb[0].mxu0
    %2781 = vmatprep.mubr.f32.mxu0 0.0
    %2782 = vmatmul.mubr.f32.gmra.mrb[0].mxu0 %v2542
    %v2783 = vpop.f32.mrb[0].mxu0
    %v2784 = vadd.f32 %v886, %v2783
    %v2785 = vpop.f32.mrb[0].mxu0
    %2786 = vdwg.mxu0
    %2787 = vmatprep.subr.mxu0 0.0
    %2788 = vmatpush1.msra.mxu0 %v590
    %2789 = vmatprep.subr.mxu0 0.0
    %2790 = vmatpush1.msra.mxu0 %v591
    %2791 = vmatprep.subr.mxu0 0.0
    %2792 = vmatpush1.msra.mxu0 %v592
    %2793 = vmatprep.subr.mxu0 0.0
    %2794 = vmatpush1.msra.mxu0 %v593
    %2795 = vmatprep.subr.mxu0 0.0
    %2796 = vmatpush1.msra.mxu0 0.0
    %2797 = vmatprep.subr.mxu0 0.0
    %2798 = vmatpush1.msra.mxu0 0.0
    %2799 = vmatprep.subr.mxu0 0.0
    %2800 = vmatpush1.msra.mxu0 0.0
    %2801 = vmatprep.subr.mxu0 0.0
    %2802 = vmatpush1.msra.mxu0 0.0
    %2803 = vmatprep.subr.mxu0 0.0
    %2804 = vmatpush1.msra.mxu0 0.0
    %2805 = vmatprep.subr.mxu0 0.0
    %2806 = vmatpush1.msra.mxu0 0.0
    %2807 = vmatprep.subr.mxu0 0.0
    %2808 = vmatpush1.msra.mxu0 0.0
    %2809 = vmatprep.subr.mxu0 0.0
    %2810 = vmatpush1.msra.mxu0 0.0
    %2811 = vmatprep.subr.mxu0 0.0
    %2812 = vmatpush1.msra.mxu0 0.0
    %2813 = vmatprep.subr.mxu0 0.0
    %2814 = vmatpush1.msra.mxu0 0.0
    %2815 = vmatprep.subr.mxu0 0.0
    %2816 = vmatpush1.msra.mxu0 0.0
    %2817 = vmatprep.subr.mxu0 0.0
    %2818 = vmatpush1.msra.mxu0 0.0
    %2819 = vmatprep.subr.mxu0 0.0
    %2820 = vmatpush1.msra.mxu0 0.0
    %2821 = vmatprep.subr.mxu0 0.0
    %2822 = vmatpush1.msra.mxu0 0.0
    %2823 = vmatprep.subr.mxu0 0.0
    %2824 = vmatpush1.msra.mxu0 0.0
    %2825 = vmatprep.subr.mxu0 0.0
    %2826 = vmatpush1.msra.mxu0 0.0
    %2827 = vmatprep.subr.mxu0 0.0
    %2828 = vmatpush1.msra.mxu0 0.0
    %2829 = vmatprep.subr.mxu0 0.0
    %2830 = vmatpush1.msra.mxu0 0.0
    %2831 = vmatprep.subr.mxu0 0.0
    %2832 = vmatpush1.msra.mxu0 0.0
    %2833 = vmatprep.subr.mxu0 0.0
    %2834 = vmatpush1.msra.mxu0 0.0
    %2835 = vmatprep.subr.mxu0 0.0
    %2836 = vmatpush1.msra.mxu0 0.0
    %2837 = vmatprep.subr.mxu0 0.0
    %2838 = vmatpush1.msra.mxu0 0.0
    %2839 = vmatprep.subr.mxu0 0.0
    %2840 = vmatpush1.msra.mxu0 0.0
    %2841 = vmatprep.subr.mxu0 0.0
    %2842 = vmatpush1.msra.mxu0 0.0
    %2843 = vmatprep.subr.mxu0 0.0
    %2844 = vmatpush1.msra.mxu0 0.0
    %2845 = vmatprep.subr.mxu0 0.0
    %2846 = vmatpush1.msra.mxu0 0.0
    %2847 = vmatprep.subr.mxu0 0.0
    %2848 = vmatpush1.msra.mxu0 0.0
    %2849 = vmatprep.subr.mxu0 0.0
    %2850 = vmatpush1.msra.mxu0 0.0
    %2851 = vmatprep.mubr.f32.mxu0 0.0
    %2852 = vmatmul.mubr.f32.gmra.mrb[0].mxu0 %v2620
    %v2853 = vpop.f32.mrb[0].mxu0
    %v2854 = vadd.f32 0.0, %v2853
    %v2855 = vpop.f32.mrb[0].mxu0
    %2856 = vmatprep.mubr.f32.mxu0 0.0
    %2857 = vmatmul.mubr.f32.gmra.mrb[0].mxu0 %v2623
    %v2858 = vpop.f32.mrb[0].mxu0
    %v2859 = vadd.f32 0.0, %v2858
    %v2860 = vpop.f32.mrb[0].mxu0
    %2861 = vdwg.mxu0
    %v2862 = vadd.f32 %v2779, %v2854
    %v2863 = vadd.f32 %v2784, %v2859
    %v2864 = vadd.f32 %v2862, %v1044
    %v2865 = vadd.f32 %v2863, %v1044
    %v2866 = vmul.f32 %v2864, 0.5
    %v2867 = vmul.f32 %v2865, 0.5
    %v2868 = vtanh.pop %v2866
    %v2869 = vtanh.pop %v2867
    %v2870 = vadd.f32 %v2868, 1.0
    %v2871 = vadd.f32 %v2869, 1.0
    %v2872 = vmul.f32 %v2870, 0.5
    %v2873 = vmul.f32 %v2871, 0.5
    %2874 = vmatprep.subr.mxu0 0.0
    %2875 = vmatpush1.msra.mxu0 %v583
    %2876 = vmatprep.subr.mxu0 0.0
    %2877 = vmatpush1.msra.mxu0 %v584
    %2878 = vmatprep.subr.mxu0 0.0
    %2879 = vmatpush1.msra.mxu0 0.0
    %2880 = vmatprep.subr.mxu0 0.0
    %2881 = vmatpush1.msra.mxu0 0.0
    %2882 = vmatprep.subr.mxu0 0.0
    %2883 = vmatpush1.msra.mxu0 0.0
    %2884 = vmatprep.subr.mxu0 0.0
    %2885 = vmatpush1.msra.mxu0 0.0
    %2886 = vmatprep.subr.mxu0 0.0
    %2887 = vmatpush1.msra.mxu0 0.0
    %2888 = vmatprep.subr.mxu0 0.0
    %2889 = vmatpush1.msra.mxu0 0.0
    %2890 = vmatprep.subr.mxu0 0.0
    %2891 = vmatpush1.msra.mxu0 0.0
    %2892 = vmatprep.subr.mxu0 0.0
    %2893 = vmatpush1.msra.mxu0 0.0
    %2894 = vmatprep.subr.mxu0 0.0
    %2895 = vmatpush1.msra.mxu0 0.0
    %2896 = vmatprep.subr.mxu0 0.0
    %2897 = vmatpush1.msra.mxu0 0.0
    %2898 = vmatprep.subr.mxu0 0.0
    %2899 = vmatpush1.msra.mxu0 0.0
    %2900 = vmatprep.subr.mxu0 0.0
    %2901 = vmatpush1.msra.mxu0 0.0
    %2902 = vmatprep.subr.mxu0 0.0
    %2903 = vmatpush1.msra.mxu0 0.0
    %2904 = vmatprep.subr.mxu0 0.0
    %2905 = vmatpush1.msra.mxu0 0.0
    %2906 = vmatprep.subr.mxu0 0.0
    %2907 = vmatpush1.msra.mxu0 0.0
    %2908 = vmatprep.subr.mxu0 0.0
    %2909 = vmatpush1.msra.mxu0 0.0
    %2910 = vmatprep.subr.mxu0 0.0
    %2911 = vmatpush1.msra.mxu0 0.0
    %2912 = vmatprep.subr.mxu0 0.0
    %2913 = vmatpush1.msra.mxu0 0.0
    %2914 = vmatprep.subr.mxu0 0.0
    %2915 = vmatpush1.msra.mxu0 0.0
    %2916 = vmatprep.subr.mxu0 0.0
    %2917 = vmatpush1.msra.mxu0 0.0
    %2918 = vmatprep.subr.mxu0 0.0
    %2919 = vmatpush1.msra.mxu0 0.0
    %2920 = vmatprep.subr.mxu0 0.0
    %2921 = vmatpush1.msra.mxu0 0.0
    %2922 = vmatprep.subr.mxu0 0.0
    %2923 = vmatpush1.msra.mxu0 0.0
    %2924 = vmatprep.subr.mxu0 0.0
    %2925 = vmatpush1.msra.mxu0 0.0
    %2926 = vmatprep.subr.mxu0 0.0
    %2927 = vmatpush1.msra.mxu0 0.0
    %2928 = vmatprep.subr.mxu0 0.0
    %2929 = vmatpush1.msra.mxu0 0.0
    %2930 = vmatprep.subr.mxu0 0.0
    %2931 = vmatpush1.msra.mxu0 0.0
    %2932 = vmatprep.subr.mxu0 0.0
    %2933 = vmatpush1.msra.mxu0 0.0
    %2934 = vmatprep.subr.mxu0 0.0
    %2935 = vmatpush1.msra.mxu0 0.0
    %2936 = vmatprep.subr.mxu0 0.0
    %2937 = vmatpush1.msra.mxu0 0.0
    %2938 = vmatprep.mubr.f32.mxu0 0.0
    %2939 = vmatmul.mubr.f32.gmra.mrb[0].mxu0 %v2539
    %v2940 = vpop.f32.mrb[0].mxu0
    %v2941 = vadd.f32 %v1060, %v2940
    %v2942 = vpop.f32.mrb[0].mxu0
    %2943 = vmatprep.mubr.f32.mxu0 0.0
    %2944 = vmatmul.mubr.f32.gmra.mrb[0].mxu0 %v2542
    %v2945 = vpop.f32.mrb[0].mxu0
    %v2946 = vadd.f32 %v1060, %v2945
    %v2947 = vpop.f32.mrb[0].mxu0
    %2948 = vdwg.mxu0
    %2949 = vmatprep.subr.mxu0 0.0
    %2950 = vmatpush1.msra.mxu0 %v595
    %2951 = vmatprep.subr.mxu0 0.0
    %2952 = vmatpush1.msra.mxu0 %v596
    %2953 = vmatprep.subr.mxu0 0.0
    %2954 = vmatpush1.msra.mxu0 %v597
    %2955 = vmatprep.subr.mxu0 0.0
    %2956 = vmatpush1.msra.mxu0 %v598
    %2957 = vmatprep.subr.mxu0 0.0
    %2958 = vmatpush1.msra.mxu0 0.0
    %2959 = vmatprep.subr.mxu0 0.0
    %2960 = vmatpush1.msra.mxu0 0.0
    %2961 = vmatprep.subr.mxu0 0.0
    %2962 = vmatpush1.msra.mxu0 0.0
    %2963 = vmatprep.subr.mxu0 0.0
    %2964 = vmatpush1.msra.mxu0 0.0
    %2965 = vmatprep.subr.mxu0 0.0
    %2966 = vmatpush1.msra.mxu0 0.0
    %2967 = vmatprep.subr.mxu0 0.0
    %2968 = vmatpush1.msra.mxu0 0.0
    %2969 = vmatprep.subr.mxu0 0.0
    %2970 = vmatpush1.msra.mxu0 0.0
    %2971 = vmatprep.subr.mxu0 0.0
    %2972 = vmatpush1.msra.mxu0 0.0
    %2973 = vmatprep.subr.mxu0 0.0
    %2974 = vmatpush1.msra.mxu0 0.0
    %2975 = vmatprep.subr.mxu0 0.0
    %2976 = vmatpush1.msra.mxu0 0.0
    %2977 = vmatprep.subr.mxu0 0.0
    %2978 = vmatpush1.msra.mxu0 0.0
    %2979 = vmatprep.subr.mxu0 0.0
    %2980 = vmatpush1.msra.mxu0 0.0
    %2981 = vmatprep.subr.mxu0 0.0
    %2982 = vmatpush1.msra.mxu0 0.0
    %2983 = vmatprep.subr.mxu0 0.0
    %2984 = vmatpush1.msra.mxu0 0.0
    %2985 = vmatprep.subr.mxu0 0.0
    %2986 = vmatpush1.msra.mxu0 0.0
    %2987 = vmatprep.subr.mxu0 0.0
    %2988 = vmatpush1.msra.mxu0 0.0
    %2989 = vmatprep.subr.mxu0 0.0
    %2990 = vmatpush1.msra.mxu0 0.0
    %2991 = vmatprep.subr.mxu0 0.0
    %2992 = vmatpush1.msra.mxu0 0.0
    %2993 = vmatprep.subr.mxu0 0.0
    %2994 = vmatpush1.msra.mxu0 0.0
    %2995 = vmatprep.subr.mxu0 0.0
    %2996 = vmatpush1.msra.mxu0 0.0
    %2997 = vmatprep.subr.mxu0 0.0
    %2998 = vmatpush1.msra.mxu0 0.0
    %2999 = vmatprep.subr.mxu0 0.0
    %3000 = vmatpush1.msra.mxu0 0.0
    %3001 = vmatprep.subr.mxu0 0.0
    %3002 = vmatpush1.msra.mxu0 0.0
    %3003 = vmatprep.subr.mxu0 0.0
    %3004 = vmatpush1.msra.mxu0 0.0
    %3005 = vmatprep.subr.mxu0 0.0
    %3006 = vmatpush1.msra.mxu0 0.0
    %3007 = vmatprep.subr.mxu0 0.0
    %3008 = vmatpush1.msra.mxu0 0.0
    %3009 = vmatprep.subr.mxu0 0.0
    %3010 = vmatpush1.msra.mxu0 0.0
    %3011 = vmatprep.subr.mxu0 0.0
    %3012 = vmatpush1.msra.mxu0 0.0
    %3013 = vmatprep.mubr.f32.mxu0 0.0
    %3014 = vmatmul.mubr.f32.gmra.mrb[0].mxu0 %v2620
    %v3015 = vpop.f32.mrb[0].mxu0
    %v3016 = vadd.f32 %v1141, %v3015
    %v3017 = vpop.f32.mrb[0].mxu0
    %3018 = vmatprep.mubr.f32.mxu0 0.0
    %3019 = vmatmul.mubr.f32.gmra.mrb[0].mxu0 %v2623
    %v3020 = vpop.f32.mrb[0].mxu0
    %v3021 = vadd.f32 %v1141, %v3020
    %v3022 = vpop.f32.mrb[0].mxu0
    %3023 = vdwg.mxu0
    %v3024 = vmul.f32 %v2710, %v3016
    %v3025 = vmul.f32 %v2711, %v3021
    %v3026 = vadd.f32 %v2941, %v3024
    %v3027 = vadd.f32 %v2946, %v3025
    %v3028 = vtanh.pop %v3026
    %v3029 = vtanh.pop %v3027
    %v3030 = vsub.f32 1.0, %v2872
    %v3031 = vsub.f32 1.0, %v2873
    %v3032 = vmul.f32 %v3030, %v3028
    %v3033 = vmul.f32 %v3031, %v3029
    %v3034 = vmul.f32 %v2872, %v2439
    %v3035 = vmul.f32 %v2873, %v2440
    %v3036 = vadd.f32 %v3032, %v3034
    %v3037 = vadd.f32 %v3033, %v3035
    %v3038 = vmul.f32 %v3036, %v1236
    %v3039 = vmul.f32 %v3037, %v1236
    %v3040 = vsel %vm785, %v3038, 0.0
    %3041 = vadd.xlane.f32.xlu0 %v3040
    %v3042 = vpop.xlane.xlu0 %3041
    %v3043 = vsel %vm785, %v3039, 0.0
    %3044 = vadd.xlane.f32.xlu0 %v3043
    %v3045 = vpop.xlane.xlu0 %3044
    %v3046 = vadd.f32 %v3042, %v1254
    %v3047 = vadd.f32 %v3045, %v1254
    %v3050 = vlaneseq
    %v3051 = vshrl.u32 %v3050, 7
    %v3052 = vsub.s32 %v298, %v3051
    %v3053 = vrot.slane %v1255, %v3052
    %v3054 = vlaneseq
    %v3055 = vshrl.u32 %v3054, 7
    %v3056 = vsub.s32 %v303, %v3055
    %v3057 = vrot.slane %v1256, %v3056
    %v3058 = vsel %vm308, %v3057, %v3053
    %v3062 = vlaneseq
    %v3063 = vshrl.u32 %v3062, 7
    %v3064 = vsub.s32 %v298, %v3063
    %v3065 = vrot.slane %v1852, %v3064
    %v3066 = vlaneseq
    %v3067 = vshrl.u32 %v3066, 7
    %v3068 = vsub.s32 %v303, %v3067
    %v3069 = vrot.slane %v1853, %v3068
    %v3070 = vsel %vm308, %v3069, %v3065
    %v3074 = vlaneseq
    %v3075 = vshrl.u32 %v3074, 7
    %v3076 = vsub.s32 %v298, %v3075
    %v3077 = vrot.slane %v2449, %v3076
    %v3078 = vlaneseq
    %v3079 = vshrl.u32 %v3078, 7
    %v3080 = vsub.s32 %v303, %v3079
    %v3081 = vrot.slane %v2450, %v3080
    %v3082 = vsel %vm308, %v3081, %v3077
    %v3086 = vlaneseq
    %v3087 = vshrl.u32 %v3086, 7
    %v3088 = vsub.s32 %v298, %v3087
    %v3089 = vrot.slane %v3046, %v3088
    %v3090 = vlaneseq
    %v3091 = vshrl.u32 %v3090, 7
    %v3092 = vsub.s32 %v303, %v3091
    %v3093 = vrot.slane %v3047, %v3092
    %v3094 = vsel %vm308, %v3093, %v3089
    %vm3096 = vcmask 1040384
    %v3097 = vsel %vm3096, %v3058, %v3070
    %vm3098 = vcmask 1041408
    %v3099 = vsel %vm3098, %v3097, %v3082
    %vm3100 = vcmask 1042432
    %v3101 = vsel %vm3100, %v3099, %v3094
    %vm3102 = vcmask 125952
    %3103 = vst.msk [vmem:[#allocation14] sm:$0xf] %vm3102, %v3101
    // Predicated region
    $region66: #{tpu_custom_call.1} parent=1 // pred_check
      _
    $region67: #{tpu_custom_call.1} parent=1 // pred_check_branch
      %3105 = sbr.rel (0) target = $region69
    $region68: #{tpu_custom_call.1} parent=1 // pred_region
      %s3107 = ssub.s32 64, 64
      %3108 = vsyncadd [#allocation5], %s3107
      %s3110 = sshll.u32 [#allocation14], 4
      %s3111 = int_to_ptr.vmem [resolvable:$true] %s3110
      %3113 = dma.vmem_to_hbm [thread:$0]  %s3111, 64, %s10, [#allocation5]
    $region69: #{tpu_custom_call.1} parent=1 // pred_fallthru
      _
    // Predicated region
    $region70: #{tpu_custom_call.1} parent=1 // pred_check
      _
    $region71: #{tpu_custom_call.1} parent=1 // pred_check_branch
      %3115 = sbr.rel (0) target = $region73
    $region72: #{tpu_custom_call.1} parent=1 // pred_region
      %3116 = dma.done [#allocation5], 64
    $region73: #{tpu_custom_call.1} parent=1 // pred_fallthru
      _
    %3117 = vsyncpa [#allocation4], 1
    %3118 = vsyncpa [#allocation7], 1
    %3119 = vsyncpa [#allocation10], 1
    %3120 = vsyncpa [#allocation13], 1
    %3121 = vsyncpa [#allocation5], 1

</llo_original>
